<compile_context>
chip_gen: v7x
topology: tpu7x:2x2x1
jax: 0.10.0
libtpu: 0.0.40
codegen_flags: <defaults>
</compile_context>

<pallas_src>
import functools

import jax
import jax.numpy as jnp
from jax.experimental import pallas as pl
from jax.experimental.pallas import tpu as pltpu

_LANE = 128
_VMEM_LIMIT = 32 * 1024 * 1024  # well above the ~1.5 MiB tile footprint used here


def _pad_to(v: int, m: int) -> int:
    return ((v + m - 1) // m) * m


def _make_mlp_kernel(num_layers: int):
    """x-row tile -> (h0_f32 tile, h0_bf16 tile):  relu(Linear)*(L-1) then final Linear."""

    def kernel(*refs):
        # refs = (x, w_0..w_{L-1}, b_0..b_{L-1}, out_f32, out_bf16)
        x_ref = refs[0]
        w_refs = refs[1:1 + num_layers]
        b_refs = refs[1 + num_layers:1 + 2 * num_layers]
        o32_ref = refs[-2]
        o16_ref = refs[-1]

        h = x_ref[...]
        for i in range(num_layers - 1):
            h = jnp.dot(h, w_refs[i][...],
                        preferred_element_type=jnp.float32) + b_refs[i][...]
            h = jnp.maximum(h, 0.0)
        h0 = jnp.dot(h, w_refs[-1][...],
                     preferred_element_type=jnp.float32) + b_refs[-1][...]
        o32_ref[...] = h0
        o16_ref[...] = h0.astype(jnp.bfloat16)

    return kernel


def _make_prop_kernel(alpha: float):
    """One APPNP step as a tiled matmul:
       out_row_tile = (1-alpha) * sum_j A[i, j] @ h[j] + alpha * h0[i]."""

    def kernel(a_ref, h_ref, h0_ref, o_ref, acc_ref):
        j = pl.program_id(1)

        @pl.when(j == 0)
        def _():
            acc_ref[...] = jnp.zeros_like(acc_ref)

        # bf16 x bf16 on the MXU, f32 accumulation.
        acc_ref[...] += jnp.dot(a_ref[...], h_ref[...],
                                preferred_element_type=jnp.float32)

        @pl.when(j == pl.num_programs(1) - 1)
        def _():
            o_ref[...] = ((1.0 - alpha) * acc_ref[...]
                          + alpha * h0_ref[...]).astype(o_ref.dtype)

    return kernel


def appnp_forward(x, a_norm, weights, biases, *, alpha: float, k: int,
                  tile: int = 256):
    """x: [N, F_in], a_norm: [N, N], weights[i]: [F_i, F_{i+1}], biases[i]: [1, F_{i+1}]."""
    num_layers = len(weights)
    n, f_in = x.shape
    n_classes = weights[-1].shape[1]

    # ---- pad node count to a tile multiple, feature widths to the lane width.
    n_pad = _pad_to(n, tile)
    dims = [f_in] + [w.shape[1] for w in weights]
    dims_pad = [_pad_to(d, _LANE) for d in dims]
    c_pad = dims_pad[-1]

    x_p = jnp.pad(x, ((0, n_pad - n), (0, dims_pad[0] - f_in)))
    w_p = [jnp.pad(w, ((0, dims_pad[i] - dims[i]),
                       (0, dims_pad[i + 1] - dims[i + 1])))
           for i, w in enumerate(weights)]
    b_p = [jnp.pad(b, ((0, 0), (0, dims_pad[i + 1] - dims[i + 1])))
           for i, b in enumerate(biases)]
    a_p = jnp.pad(a_norm, ((0, n_pad - n), (0, n_pad - n))).astype(jnp.bfloat16)

    grid_rows = n_pad // tile

    # ---------------- MLP phase: grid over node-row tiles ----------------
    mlp_kernel = _make_mlp_kernel(num_layers)
    h0_f32, h0_bf16 = pl.pallas_call(
        mlp_kernel,
        out_shape=(
            jax.ShapeDtypeStruct((n_pad, c_pad), jnp.float32),
            jax.ShapeDtypeStruct((n_pad, c_pad), jnp.bfloat16),
        ),
        grid=(grid_rows,),
        in_specs=(
            [pl.BlockSpec((tile, dims_pad[0]), lambda i: (i, 0))]
            + [pl.BlockSpec(w.shape, lambda i: (0, 0)) for w in w_p]
            + [pl.BlockSpec(b.shape, lambda i: (0, 0)) for b in b_p]
        ),
        out_specs=(
            pl.BlockSpec((tile, c_pad), lambda i: (i, 0)),
            pl.BlockSpec((tile, c_pad), lambda i: (i, 0)),
        ),
        compiler_params=pltpu.CompilerParams(
            dimension_semantics=("parallel",),
            vmem_limit_bytes=_VMEM_LIMIT),
    )(x_p, *w_p, *b_p)

    # -------- Propagation phase: k tiled-matmul passes over A_norm --------
    prop_kernel = _make_prop_kernel(alpha)

    def make_prop_call(out_dtype):
        return pl.pallas_call(
            prop_kernel,
            out_shape=jax.ShapeDtypeStruct((n_pad, c_pad), out_dtype),
            grid=(grid_rows, grid_rows),
            in_specs=[
                pl.BlockSpec((tile, tile), lambda i, j: (i, j)),    # A (bf16)
                pl.BlockSpec((tile, c_pad), lambda i, j: (j, 0)),   # h (bf16)
                pl.BlockSpec((tile, c_pad), lambda i, j: (i, 0)),   # h0 (f32)
            ],
            out_specs=pl.BlockSpec((tile, c_pad), lambda i, j: (i, 0)),
            scratch_shapes=[pltpu.VMEM((tile, c_pad), jnp.float32)],
            compiler_params=pltpu.CompilerParams(
                dimension_semantics=("parallel", "arbitrary"),
                vmem_limit_bytes=_VMEM_LIMIT),
        )

    # Intermediate steps produce the bf16 h that the next step consumes
    # (no external cast pass); only the last step materializes f32.
    prop_call_bf16 = make_prop_call(jnp.bfloat16)
    prop_call_f32 = make_prop_call(jnp.float32)

    h = h0_bf16
    for step in range(k):  # k is small & static
        call = prop_call_f32 if step == k - 1 else prop_call_bf16
        h = call(a_p, h, h0_f32)

    if k == 0:
        h = h0_f32

    return h[:n, :n_classes]


def _reference(x, a_norm, weights, biases, *, alpha, k):
    """Pure-JAX reference matching the kernel's bf16 propagation precision."""
    h = x
    for i in range(len(weights) - 1):
        h = jnp.maximum(h @ weights[i] + biases[i], 0.0)
    h0 = h @ weights[-1] + biases[-1]
    a_bf = a_norm.astype(jnp.bfloat16).astype(jnp.float32)
    h = h0
    for _ in range(k):
        h_bf = h.astype(jnp.bfloat16).astype(jnp.float32)
        h = (1.0 - alpha) * (a_bf @ h_bf) + alpha * h0
    return h


if __name__ == "__main__":
    # Small, deterministic problem.
    N = 512           # number of nodes (2x2 propagation grid with 256 tiles)
    IN_FEATS = 32
    HIDDENS = [32]    # one hidden layer -> 2 Linear layers total
    N_CLASSES = 16
    ALPHA = 0.1
    K = 3

    key = jax.random.PRNGKey(0)
    k_x, k_adj, *k_params = jax.random.split(key, 2 + 2 * (len(HIDDENS) + 1))

    # Node features.
    x = jax.random.normal(k_x, (N, IN_FEATS), dtype=jnp.float32)

    # Deterministic random symmetric graph, symmetrically normalized.
    adj_logits = jax.random.uniform(k_adj, (N, N))
    adj = (adj_logits < 0.05).astype(jnp.float32)
    adj = jnp.maximum(adj, adj.T)                       # symmetric
    adj = adj * (1.0 - jnp.eye(N, dtype=jnp.float32))   # no self loops
    deg = jnp.maximum(adj.sum(axis=1), 1.0)
    d_inv_sqrt = 1.0 / jnp.sqrt(deg)
    a_norm = adj * d_inv_sqrt[:, None] * d_inv_sqrt[None, :]

    # Linear parameters, PyTorch-style uniform(-1/sqrt(fan_in), 1/sqrt(fan_in)).
    dims = [IN_FEATS] + HIDDENS + [N_CLASSES]
    weights, biases = [], []
    for i in range(len(dims) - 1):
        fan_in, fan_out = dims[i], dims[i + 1]
        bound = 1.0 / (fan_in ** 0.5)
        w = jax.random.uniform(k_params[2 * i], (fan_in, fan_out),
                               minval=-bound, maxval=bound, dtype=jnp.float32)
        b = jax.random.uniform(k_params[2 * i + 1], (1, fan_out),
                               minval=-bound, maxval=bound, dtype=jnp.float32)
        weights.append(w)
        biases.append(b)

    run = jax.jit(functools.partial(appnp_forward, alpha=ALPHA, k=K))
    out = run(x, a_norm, tuple(weights), tuple(biases))
    out = jax.block_until_ready(out)

    ref = _reference(x, a_norm, weights, biases, alpha=ALPHA, k=K)
    assert out.shape == (N, N_CLASSES)
    assert jnp.allclose(out, ref, atol=1e-2, rtol=1e-2), "mismatch vs reference"

    print("KERNEL_OK")
</pallas_src>

<mosaic_0001>
module attributes {stable_mosaic.version = 11 : i64} {
  func.func @kernel(%arg0: i32, %arg1: memref<256x128xf32, #tpu.memory_space<vmem>>, %arg2: memref<128x128xf32, #tpu.memory_space<vmem>>, %arg3: memref<128x128xf32, #tpu.memory_space<vmem>>, %arg4: memref<1x128xf32, #tpu.memory_space<vmem>>, %arg5: memref<1x128xf32, #tpu.memory_space<vmem>>, %arg6: memref<256x128xf32, #tpu.memory_space<vmem>>, %arg7: memref<256x128xbf16, #tpu.memory_space<vmem>>) attributes {dimension_semantics = [#tpu.dimension_semantics<parallel>], iteration_bounds = array<i64: 2>, scalar_prefetch = 0 : i64, scratch_operands = 0 : i64, tpu.core_type = #tpu.core_type<tc>, window_params = [{transform_indices = @transform_0, window_bounds = array<i64: 256, 128>}, {pipeline_mode = #tpu.pipeline_mode<synchronous>, transform_indices = @transform_1, window_bounds = array<i64: 128, 128>}, {pipeline_mode = #tpu.pipeline_mode<synchronous>, transform_indices = @transform_2, window_bounds = array<i64: 128, 128>}, {pipeline_mode = #tpu.pipeline_mode<synchronous>, transform_indices = @transform_3, window_bounds = array<i64: 1, 128>}, {pipeline_mode = #tpu.pipeline_mode<synchronous>, transform_indices = @transform_4, window_bounds = array<i64: 1, 128>}, {transform_indices = @transform_5, window_bounds = array<i64: 256, 128>}, {transform_indices = @transform_6, window_bounds = array<i64: 256, 128>}]} {
    %c0 = arith.constant 0 : index
    %c0_0 = arith.constant 0 : index
    %0 = vector.load %arg1[%c0, %c0_0] : memref<256x128xf32, #tpu.memory_space<vmem>>, vector<256x128xf32>
    %c0_1 = arith.constant 0 : index
    %c0_2 = arith.constant 0 : index
    %1 = vector.load %arg2[%c0_1, %c0_2] : memref<128x128xf32, #tpu.memory_space<vmem>>, vector<128x128xf32>
    %cst = arith.constant dense<0.000000e+00> : vector<256x128xf32>
    %2 = tpu.matmul %0, %1, %cst {dimension_numbers = #tpu.dot_dimension_numbers<[1], [0], [0], [1], [0, 0, 1, 1], [], []>} : vector<256x128xf32>, vector<128x128xf32>, vector<256x128xf32> -> vector<256x128xf32>
    %c0_3 = arith.constant 0 : index
    %c0_4 = arith.constant 0 : index
    %3 = vector.load %arg4[%c0_3, %c0_4] : memref<1x128xf32, #tpu.memory_space<vmem>>, vector<1x128xf32>
    %4 = vector.broadcast %3 : vector<1x128xf32> to vector<256x128xf32>
    %5 = arith.addf %2, %4 : vector<256x128xf32>
    %cst_5 = arith.constant 0.000000e+00 : f32
    %6 = vector.broadcast %cst_5 : f32 to vector<256x128xf32>
    %7 = arith.maximumf %5, %6 : vector<256x128xf32>
    %c0_6 = arith.constant 0 : index
    %c0_7 = arith.constant 0 : index
    %8 = vector.load %arg3[%c0_6, %c0_7] : memref<128x128xf32, #tpu.memory_space<vmem>>, vector<128x128xf32>
    %cst_8 = arith.constant dense<0.000000e+00> : vector<256x128xf32>
    %9 = tpu.matmul %7, %8, %cst_8 {dimension_numbers = #tpu.dot_dimension_numbers<[1], [0], [0], [1], [0, 0, 1, 1], [], []>} : vector<256x128xf32>, vector<128x128xf32>, vector<256x128xf32> -> vector<256x128xf32>
    %c0_9 = arith.constant 0 : index
    %c0_10 = arith.constant 0 : index
    %10 = vector.load %arg5[%c0_9, %c0_10] : memref<1x128xf32, #tpu.memory_space<vmem>>, vector<1x128xf32>
    %11 = vector.broadcast %10 : vector<1x128xf32> to vector<256x128xf32>
    %12 = arith.addf %9, %11 : vector<256x128xf32>
    %c0_11 = arith.constant 0 : index
    %c0_12 = arith.constant 0 : index
    %13 = vector.load %arg6[%c0_11, %c0_12] : memref<256x128xf32, #tpu.memory_space<vmem>>, vector<256x128xf32>
    tpu.vector_store %arg6[%c0_11, %c0_12], %12 {strides = array<i32>} : memref<256x128xf32, #tpu.memory_space<vmem>>, vector<256x128xf32>,
    %14 = arith.truncf %12 : vector<256x128xf32> to vector<256x128xbf16>
    %c0_13 = arith.constant 0 : index
    %c0_14 = arith.constant 0 : index
    %15 = vector.load %arg7[%c0_13, %c0_14] : memref<256x128xbf16, #tpu.memory_space<vmem>>, vector<256x128xbf16>
    tpu.vector_store %arg7[%c0_13, %c0_14], %14 {strides = array<i32>} : memref<256x128xbf16, #tpu.memory_space<vmem>>, vector<256x128xbf16>,
    return
  }
  func.func @transform_0(%arg0: i32) -> (i32, i32) {
    %c0_i32 = arith.constant 0 : i32
    %c0_i32_0 = arith.constant 0 : i32
    return %arg0, %c0_i32 : i32, i32
  }
  func.func @transform_1(%arg0: i32) -> (i32, i32) {
    %c0_i32 = arith.constant 0 : i32
    %c0_i32_0 = arith.constant 0 : i32
    %c0_i32_1 = arith.constant 0 : i32
    return %c0_i32, %c0_i32_0 : i32, i32
  }
  func.func @transform_2(%arg0: i32) -> (i32, i32) {
    %c0_i32 = arith.constant 0 : i32
    %c0_i32_0 = arith.constant 0 : i32
    %c0_i32_1 = arith.constant 0 : i32
    return %c0_i32, %c0_i32_0 : i32, i32
  }
  func.func @transform_3(%arg0: i32) -> (i32, i32) {
    %c0_i32 = arith.constant 0 : i32
    %c0_i32_0 = arith.constant 0 : i32
    %c0_i32_1 = arith.constant 0 : i32
    return %c0_i32, %c0_i32_0 : i32, i32
  }
  func.func @transform_4(%arg0: i32) -> (i32, i32) {
    %c0_i32 = arith.constant 0 : i32
    %c0_i32_0 = arith.constant 0 : i32
    %c0_i32_1 = arith.constant 0 : i32
    return %c0_i32, %c0_i32_0 : i32, i32
  }
  func.func @transform_5(%arg0: i32) -> (i32, i32) {
    %c0_i32 = arith.constant 0 : i32
    %c0_i32_0 = arith.constant 0 : i32
    return %arg0, %c0_i32 : i32, i32
  }
  func.func @transform_6(%arg0: i32) -> (i32, i32) {
    %c0_i32 = arith.constant 0 : i32
    %c0_i32_0 = arith.constant 0 : i32
    return %arg0, %c0_i32 : i32, i32
  }
}

module attributes {stable_mosaic.version = 11 : i64} {
  func.func @kernel(%arg0: i32, %arg1: i32, %arg2: memref<256x256xbf16, #tpu.memory_space<vmem>>, %arg3: memref<256x128xbf16, #tpu.memory_space<vmem>>, %arg4: memref<256x128xf32, #tpu.memory_space<vmem>>, %arg5: memref<256x128xbf16, #tpu.memory_space<vmem>>, %arg6: memref<256x128xf32, #tpu.memory_space<vmem>>) attributes {dimension_semantics = [#tpu.dimension_semantics<parallel>, #tpu.dimension_semantics<arbitrary>], iteration_bounds = array<i64: 2, 2>, scalar_prefetch = 0 : i64, scratch_operands = 1 : i64, tpu.core_type = #tpu.core_type<tc>, window_params = [{transform_indices = @transform_0, window_bounds = array<i64: 256, 256>}, {transform_indices = @transform_1, window_bounds = array<i64: 256, 128>}, {transform_indices = @transform_2, window_bounds = array<i64: 256, 128>}, {transform_indices = @transform_3, window_bounds = array<i64: 256, 128>}]} {
    %c0_i32 = arith.constant 0 : i32
    %0 = arith.cmpi eq, %arg1, %c0_i32 : i32
    %1 = arith.extui %0 : i1 to i32
    %c0_i32_0 = arith.constant 0 : i32
    %2 = arith.cmpi ne, %1, %c0_i32_0 : i32
    scf.if %2 {
      %cst_9 = arith.constant 0.000000e+00 : f32
      %12 = vector.broadcast %cst_9 : f32 to vector<256x128xf32>
      %c0_10 = arith.constant 0 : index
      %c0_11 = arith.constant 0 : index
      %13 = vector.load %arg6[%c0_10, %c0_11] : memref<256x128xf32, #tpu.memory_space<vmem>>, vector<256x128xf32>
      tpu.vector_store %arg6[%c0_10, %c0_11], %12 {strides = array<i32>} : memref<256x128xf32, #tpu.memory_space<vmem>>, vector<256x128xf32>,
    } else {
    }
    %c0 = arith.constant 0 : index
    %c0_1 = arith.constant 0 : index
    %3 = vector.load %arg6[%c0, %c0_1] : memref<256x128xf32, #tpu.memory_space<vmem>>, vector<256x128xf32>
    %c0_2 = arith.constant 0 : index
    %c0_3 = arith.constant 0 : index
    %4 = vector.load %arg2[%c0_2, %c0_3] : memref<256x256xbf16, #tpu.memory_space<vmem>>, vector<256x256xbf16>
    %c0_4 = arith.constant 0 : index
    %c0_5 = arith.constant 0 : index
    %5 = vector.load %arg3[%c0_4, %c0_5] : memref<256x128xbf16, #tpu.memory_space<vmem>>, vector<256x128xbf16>
    %cst = arith.constant dense<0.000000e+00> : vector<256x128xf32>
    %6 = tpu.matmul %4, %5, %cst {dimension_numbers = #tpu.dot_dimension_numbers<[1], [0], [0], [1], [0, 0, 1, 1], [], []>} : vector<256x256xbf16>, vector<256x128xbf16>, vector<256x128xf32> -> vector<256x128xf32>
    %7 = arith.addf %3, %6 : vector<256x128xf32>
    %c0_6 = arith.constant 0 : index
    %c0_7 = arith.constant 0 : index
    %8 = vector.load %arg6[%c0_6, %c0_7] : memref<256x128xf32, #tpu.memory_space<vmem>>, vector<256x128xf32>
    tpu.vector_store %arg6[%c0_6, %c0_7], %7 {strides = array<i32>} : memref<256x128xf32, #tpu.memory_space<vmem>>, vector<256x128xf32>,
    %c1_i32 = arith.constant 1 : i32
    %9 = arith.cmpi eq, %arg1, %c1_i32 : i32
    %10 = arith.extui %9 : i1 to i32
    %c0_i32_8 = arith.constant 0 : i32
    %11 = arith.cmpi ne, %10, %c0_i32_8 : i32
    scf.if %11 {
      %c0_9 = arith.constant 0 : index
      %c0_10 = arith.constant 0 : index
      %12 = vector.load %arg6[%c0_9, %c0_10] : memref<256x128xf32, #tpu.memory_space<vmem>>, vector<256x128xf32>
      %cst_11 = arith.constant 0.899999976 : f32
      %13 = vector.broadcast %cst_11 : f32 to vector<256x128xf32>
      %14 = arith.mulf %13, %12 : vector<256x128xf32>
      %c0_12 = arith.constant 0 : index
      %c0_13 = arith.constant 0 : index
      %15 = vector.load %arg4[%c0_12, %c0_13] : memref<256x128xf32, #tpu.memory_space<vmem>>, vector<256x128xf32>
      %cst_14 = arith.constant 1.000000e-01 : f32
      %16 = vector.broadcast %cst_14 : f32 to vector<256x128xf32>
      %17 = arith.mulf %16, %15 : vector<256x128xf32>
      %18 = arith.addf %14, %17 : vector<256x128xf32>
      %19 = arith.truncf %18 : vector<256x128xf32> to vector<256x128xbf16>
      %c0_15 = arith.constant 0 : index
      %c0_16 = arith.constant 0 : index
      %20 = vector.load %arg5[%c0_15, %c0_16] : memref<256x128xbf16, #tpu.memory_space<vmem>>, vector<256x128xbf16>
      tpu.vector_store %arg5[%c0_15, %c0_16], %19 {strides = array<i32>} : memref<256x128xbf16, #tpu.memory_space<vmem>>, vector<256x128xbf16>,
    } else {
    }
    return
  }
  func.func @transform_0(%arg0: i32, %arg1: i32) -> (i32, i32) {
    %c0_i32 = arith.constant 0 : i32
    return %arg0, %arg1 : i32, i32
  }
  func.func @transform_1(%arg0: i32, %arg1: i32) -> (i32, i32) {
    %c0_i32 = arith.constant 0 : i32
    %c0_i32_0 = arith.constant 0 : i32
    return %arg1, %c0_i32 : i32, i32
  }
  func.func @transform_2(%arg0: i32, %arg1: i32) -> (i32, i32) {
    %c0_i32 = arith.constant 0 : i32
    %c0_i32_0 = arith.constant 0 : i32
    return %arg0, %c0_i32 : i32, i32
  }
  func.func @transform_3(%arg0: i32, %arg1: i32) -> (i32, i32) {
    %c0_i32 = arith.constant 0 : i32
    %c0_i32_0 = arith.constant 0 : i32
    return %arg0, %c0_i32 : i32, i32
  }
}

module attributes {stable_mosaic.version = 11 : i64} {
  func.func @kernel(%arg0: i32, %arg1: i32, %arg2: memref<256x256xbf16, #tpu.memory_space<vmem>>, %arg3: memref<256x128xbf16, #tpu.memory_space<vmem>>, %arg4: memref<256x128xf32, #tpu.memory_space<vmem>>, %arg5: memref<256x128xf32, #tpu.memory_space<vmem>>, %arg6: memref<256x128xf32, #tpu.memory_space<vmem>>) attributes {dimension_semantics = [#tpu.dimension_semantics<parallel>, #tpu.dimension_semantics<arbitrary>], iteration_bounds = array<i64: 2, 2>, scalar_prefetch = 0 : i64, scratch_operands = 1 : i64, tpu.core_type = #tpu.core_type<tc>, window_params = [{transform_indices = @transform_0, window_bounds = array<i64: 256, 256>}, {transform_indices = @transform_1, window_bounds = array<i64: 256, 128>}, {transform_indices = @transform_2, window_bounds = array<i64: 256, 128>}, {transform_indices = @transform_3, window_bounds = array<i64: 256, 128>}]} {
    %c0_i32 = arith.constant 0 : i32
    %0 = arith.cmpi eq, %arg1, %c0_i32 : i32
    %1 = arith.extui %0 : i1 to i32
    %c0_i32_0 = arith.constant 0 : i32
    %2 = arith.cmpi ne, %1, %c0_i32_0 : i32
    scf.if %2 {
      %cst_9 = arith.constant 0.000000e+00 : f32
      %12 = vector.broadcast %cst_9 : f32 to vector<256x128xf32>
      %c0_10 = arith.constant 0 : index
      %c0_11 = arith.constant 0 : index
      %13 = vector.load %arg6[%c0_10, %c0_11] : memref<256x128xf32, #tpu.memory_space<vmem>>, vector<256x128xf32>
      tpu.vector_store %arg6[%c0_10, %c0_11], %12 {strides = array<i32>} : memref<256x128xf32, #tpu.memory_space<vmem>>, vector<256x128xf32>,
    } else {
    }
    %c0 = arith.constant 0 : index
    %c0_1 = arith.constant 0 : index
    %3 = vector.load %arg6[%c0, %c0_1] : memref<256x128xf32, #tpu.memory_space<vmem>>, vector<256x128xf32>
    %c0_2 = arith.constant 0 : index
    %c0_3 = arith.constant 0 : index
    %4 = vector.load %arg2[%c0_2, %c0_3] : memref<256x256xbf16, #tpu.memory_space<vmem>>, vector<256x256xbf16>
    %c0_4 = arith.constant 0 : index
    %c0_5 = arith.constant 0 : index
    %5 = vector.load %arg3[%c0_4, %c0_5] : memref<256x128xbf16, #tpu.memory_space<vmem>>, vector<256x128xbf16>
    %cst = arith.constant dense<0.000000e+00> : vector<256x128xf32>
    %6 = tpu.matmul %4, %5, %cst {dimension_numbers = #tpu.dot_dimension_numbers<[1], [0], [0], [1], [0, 0, 1, 1], [], []>} : vector<256x256xbf16>, vector<256x128xbf16>, vector<256x128xf32> -> vector<256x128xf32>
    %7 = arith.addf %3, %6 : vector<256x128xf32>
    %c0_6 = arith.constant 0 : index
    %c0_7 = arith.constant 0 : index
    %8 = vector.load %arg6[%c0_6, %c0_7] : memref<256x128xf32, #tpu.memory_space<vmem>>, vector<256x128xf32>
    tpu.vector_store %arg6[%c0_6, %c0_7], %7 {strides = array<i32>} : memref<256x128xf32, #tpu.memory_space<vmem>>, vector<256x128xf32>,
    %c1_i32 = arith.constant 1 : i32
    %9 = arith.cmpi eq, %arg1, %c1_i32 : i32
    %10 = arith.extui %9 : i1 to i32
    %c0_i32_8 = arith.constant 0 : i32
    %11 = arith.cmpi ne, %10, %c0_i32_8 : i32
    scf.if %11 {
      %c0_9 = arith.constant 0 : index
      %c0_10 = arith.constant 0 : index
      %12 = vector.load %arg6[%c0_9, %c0_10] : memref<256x128xf32, #tpu.memory_space<vmem>>, vector<256x128xf32>
      %cst_11 = arith.constant 0.899999976 : f32
      %13 = vector.broadcast %cst_11 : f32 to vector<256x128xf32>
      %14 = arith.mulf %13, %12 : vector<256x128xf32>
      %c0_12 = arith.constant 0 : index
      %c0_13 = arith.constant 0 : index
      %15 = vector.load %arg4[%c0_12, %c0_13] : memref<256x128xf32, #tpu.memory_space<vmem>>, vector<256x128xf32>
      %cst_14 = arith.constant 1.000000e-01 : f32
      %16 = vector.broadcast %cst_14 : f32 to vector<256x128xf32>
      %17 = arith.mulf %16, %15 : vector<256x128xf32>
      %18 = arith.addf %14, %17 : vector<256x128xf32>
      %c0_15 = arith.constant 0 : index
      %c0_16 = arith.constant 0 : index
      %19 = vector.load %arg5[%c0_15, %c0_16] : memref<256x128xf32, #tpu.memory_space<vmem>>, vector<256x128xf32>
      tpu.vector_store %arg5[%c0_15, %c0_16], %18 {strides = array<i32>} : memref<256x128xf32, #tpu.memory_space<vmem>>, vector<256x128xf32>,
    } else {
    }
    return
  }
  func.func @transform_0(%arg0: i32, %arg1: i32) -> (i32, i32) {
    %c0_i32 = arith.constant 0 : i32
    return %arg0, %arg1 : i32, i32
  }
  func.func @transform_1(%arg0: i32, %arg1: i32) -> (i32, i32) {
    %c0_i32 = arith.constant 0 : i32
    %c0_i32_0 = arith.constant 0 : i32
    return %arg1, %c0_i32 : i32, i32
  }
  func.func @transform_2(%arg0: i32, %arg1: i32) -> (i32, i32) {
    %c0_i32 = arith.constant 0 : i32
    %c0_i32_0 = arith.constant 0 : i32
    return %arg0, %c0_i32 : i32, i32
  }
  func.func @transform_3(%arg0: i32, %arg1: i32) -> (i32, i32) {
    %c0_i32 = arith.constant 0 : i32
    %c0_i32_0 = arith.constant 0 : i32
    return %arg0, %c0_i32 : i32, i32
  }
}

</mosaic_0001>

<llo_original>
// kernel: appnp_forward.5
$region0: #{appnp_forward.5}
  #allocation0 [shape = 'u32[]', space=smem, size = 0x4, offset = 0x4, fixed_abs, tag = 'smem constant byte address 0x4 - core index']
  #allocation1 [shape = 'u32[144,128]{1,0:T(1,128)}', space=vmem, size = 0x12000, scoped, tag = 'internal scratch']
  #allocation2 [shape = 'f32[256,128]{1,0:T(8,128)}', space=vmem, size = 0x20000, scoped, tag = 'scratch operand']
  %s0 = inlined_call_operand.vmem [shape: bf16[512,512], index: 0, kind: input, shape index: {}]
  %s1 = inlined_call_operand.vmem [shape: bf16[512,128], index: 1, kind: input, shape index: {}]
  %s2 = inlined_call_operand.vmem [shape: f32[512,128], index: 2, kind: input, shape index: {}]
  %s3 = inlined_call_operand.vmem [shape: bf16[512,128], index: 3, kind: output, shape index: {}]
  %s4 = sld [smem:[#allocation0]]
  $region91: #{appnp_forward.5} parent=0
    _
  %s6 = ssub.s32 1, %s4
  %s7 = scalar_select 0, %s6, %s4
  $region1: #{appnp_forward.5} parent=0
    #allocation3 [shape = 'u8[262144]{0}', space=vmem, size = 0x40000, scoped, tag = 'input window, operand 0']
    loop: start=0, step=1, limit=6
    $region2: #{appnp_forward.5} parent=1 // loop_pre_header
      _
    $region3: #{appnp_forward.5} parent=1 // loop_header
      %s9 = sphi 0, %s13
      %p10 = scmp.ge.s32.totalorder %s9, 6
      %s16 = sphi 0, %s28
      %s17 = sphi 0, %s24
      %s18 = sphi 0, %s16
      %s19 = sphi 0, %s17
      %s20 = sphi 0, %s18
      %s21 = sphi 0, %s19
      %s33 = sphi 0, %s35
      %s36 = sphi 0, %s33
      %s37 = sphi 0, %s36
      %s53 = sphi 0, %s37
      %s59 = sphi 0, %s61
      %s62 = sphi 0, %s59
      %s63 = sphi 0, %s62
      %s79 = sphi 0, %s63
      %s85 = sphi 0, %s87
      %s88 = sphi 0, %s85
      %s89 = sphi 0, %s88
      %s105 = sphi 0, %s89
      %s111 = sphi 0, %s113
      %s114 = sphi 0, %s111
      %s115 = sphi 0, %s114
      %s131 = sphi 0, %s115
    $region4: #{appnp_forward.5} parent=1 // loop_header_branch
      %12 = sbr.rel (%p10) target = $region8
    $region5: #{appnp_forward.5} parent=1 // loop_body
      %s14 = ssub.s32 %s9, 1
      %s15 = ssub.s32 %s9, 2
      %s22 = sadd.s32 1, %s17
      %p23 = scmp.ge.s32.totalorder %s22, 2
      %s24 = scalar_select %p23, 0, %s22
      %s25 = sadd.s32 1, %s16
      %s26 = scalar_select %p23, %s25, %s16
      %p27 = scmp.ge.s32.totalorder %s26, 2
      %s28 = scalar_select %p27, 0, %s26
      %s29 = ssub.s32 %s16, %s28
      %s30 = ssub.s32 %s17, %s24
      %s31 = sor.u32 %s29, %s30
      %p32 = scmp.eq.s32.totalorder %s31, 0
      %s34 = sadd.s32 %s33, 1
      %s35 = scalar_select %p32, %s33, %s34
      %p38 = pneg %p32
      %p39 = scmp.eq.s32.totalorder %s9, 3
      %p40 = por %p38, %p39
      %p41 = scmp.ne.s32.totalorder %s33, %s36
      %p42 = scmp.eq.s32.totalorder %s9, 0
      %p43 = por %p41, %p42
      %p44 = scmp.ne.s32.totalorder %s33, %s36
      %p45 = scmp.eq.s32.totalorder %s14, 3
      %p46 = por %p44, %p45
      %p47 = scmp.ne.s32.totalorder %s36, %s37
      %p48 = scmp.eq.s32.totalorder %s14, 0
      %p49 = por %p47, %p48
      %p50 = scmp.ne.s32.totalorder %s36, %s37
      %p51 = scmp.eq.s32.totalorder %s15, 3
      %p52 = por %p50, %p51
      %p54 = scmp.ne.s32.totalorder %s37, %s53
      %p55 = scmp.eq.s32.totalorder %s15, 0
      %p56 = por %p54, %p55
      %s57 = ssub.s32 %s17, %s24
      %p58 = scmp.eq.s32.totalorder %s57, 0
      %s60 = sadd.s32 %s59, 1
      %s61 = scalar_select %p58, %s59, %s60
      %p64 = pneg %p58
      %p65 = scmp.eq.s32.totalorder %s9, 3
      %p66 = por %p64, %p65
      %p67 = scmp.ne.s32.totalorder %s59, %s62
      %p68 = scmp.eq.s32.totalorder %s9, 0
      %p69 = por %p67, %p68
      %p70 = scmp.ne.s32.totalorder %s59, %s62
      %p71 = scmp.eq.s32.totalorder %s14, 3
      %p72 = por %p70, %p71
      %p73 = scmp.ne.s32.totalorder %s62, %s63
      %p74 = scmp.eq.s32.totalorder %s14, 0
      %p75 = por %p73, %p74
      %p76 = scmp.ne.s32.totalorder %s62, %s63
      %p77 = scmp.eq.s32.totalorder %s15, 3
      %p78 = por %p76, %p77
      %p80 = scmp.ne.s32.totalorder %s63, %s79
      %p81 = scmp.eq.s32.totalorder %s15, 0
      %p82 = por %p80, %p81
      %s83 = ssub.s32 %s16, %s28
      %p84 = scmp.eq.s32.totalorder %s83, 0
      %s86 = sadd.s32 %s85, 1
      %s87 = scalar_select %p84, %s85, %s86
      %p90 = pneg %p84
      %p91 = scmp.eq.s32.totalorder %s9, 3
      %p92 = por %p90, %p91
      %p93 = scmp.ne.s32.totalorder %s85, %s88
      %p94 = scmp.eq.s32.totalorder %s9, 0
      %p95 = por %p93, %p94
      %p96 = scmp.ne.s32.totalorder %s85, %s88
      %p97 = scmp.eq.s32.totalorder %s14, 3
      %p98 = por %p96, %p97
      %p99 = scmp.ne.s32.totalorder %s88, %s89
      %p100 = scmp.eq.s32.totalorder %s14, 0
      %p101 = por %p99, %p100
      %p102 = scmp.ne.s32.totalorder %s88, %s89
      %p103 = scmp.eq.s32.totalorder %s15, 3
      %p104 = por %p102, %p103
      %p106 = scmp.ne.s32.totalorder %s89, %s105
      %p107 = scmp.eq.s32.totalorder %s15, 0
      %p108 = por %p106, %p107
      %s109 = ssub.s32 %s16, %s28
      %p110 = scmp.eq.s32.totalorder %s109, 0
      %s112 = sadd.s32 %s111, 1
      %s113 = scalar_select %p110, %s111, %s112
      %p116 = pneg %p110
      %p117 = scmp.eq.s32.totalorder %s9, 3
      %p118 = por %p116, %p117
      %p119 = scmp.ne.s32.totalorder %s111, %s114
      %p120 = scmp.eq.s32.totalorder %s9, 0
      %p121 = por %p119, %p120
      %p122 = scmp.ne.s32.totalorder %s111, %s114
      %p123 = scmp.eq.s32.totalorder %s14, 3
      %p124 = por %p122, %p123
      %p125 = scmp.ne.s32.totalorder %s114, %s115
      %p126 = scmp.eq.s32.totalorder %s14, 0
      %p127 = por %p125, %p126
      %p128 = scmp.ne.s32.totalorder %s114, %s115
      %p129 = scmp.eq.s32.totalorder %s15, 3
      %p130 = por %p128, %p129
      %p132 = scmp.ne.s32.totalorder %s115, %s131
      %p133 = scmp.eq.s32.totalorder %s15, 0
      %p134 = por %p132, %p133
      %p135 = scmp.le.s32.totalorder 1, %s9
      %p136 = scmp.lt.s32.totalorder %s9, 5
      %p137 = pnand %p135, %p136
      %p138 = pneg %p137
      // Predicated region
      $region9: #{appnp_forward.5} parent=5 // pred_check
        _
      $region10: #{appnp_forward.5} parent=5 // pred_check_branch
        %140 = sbr.rel (%p137) target = $region12
      $region11: #{appnp_forward.5} parent=5 // pred_region
        %s141 = ssub.s32 %s9, 1
      $region12: #{appnp_forward.5} parent=5 // pred_fallthru
        _
      %p142 = scmp.lt.s32.totalorder %s9, 4
      // Predicated region
      $region13: #{appnp_forward.5} parent=5 // pred_check
        %p143 = pneg %p142
      $region14: #{appnp_forward.5} parent=5 // pred_check_branch
        %145 = sbr.rel (%p143) target = $region16
      $region15: #{appnp_forward.5} parent=5 // pred_region
        // Predicated region
        $region17: #{appnp_forward.5} parent=15 // pred_check
          %p146 = pneg %p43
        $region18: #{appnp_forward.5} parent=15 // pred_check_branch
          %148 = sbr.rel (%p146) target = $region20
        $region19: #{appnp_forward.5} parent=15 // pred_region
          %s149 = sand.u32 %s33, 1
          %s150 = sand.u32 %s33, 1
          %s151 = smul.addr %s150, 256
          %s152 = scalar_lea.vmem [#allocation3], %s151
          %s153 = smul.u32 32, %s16
          %s154 = smul.u32 2, %s17
          %s155 = smul.addr %s153, 4
          %s156 = sadd.s32 %s154, %s155
          %s157 = smul.addr %s156, 4
          %s158 = scalar_lea.vmem %s0, %s157
          // Predicated region
          $region21: #{appnp_forward.5} parent=19 // pred_check
            _
          $region22: #{appnp_forward.5} parent=19 // pred_check_branch
            %160 = sbr.rel (0) target = $region24
          $region23: #{appnp_forward.5} parent=19 // pred_region
            // Predicated region
            $region25: #{appnp_forward.5} parent=23 // pred_check
              _
            $region26: #{appnp_forward.5} parent=23 // pred_check_branch
              %162 = sbr.rel (0) target = $region28
            $region27: #{appnp_forward.5} parent=23 // pred_region
              // Predicated region
              $region40: #{appnp_forward.5} parent=27 // pred_check
                _
              $region41: #{appnp_forward.5} parent=27 // pred_check_branch
                %239 = sbr.rel (0) target = $region43
              $region42: #{appnp_forward.5} parent=27 // pred_region
                loop: start=0, step=1, limit=1
                $region44: #{appnp_forward.5} parent=42 // loop_pre_header
                  _
                $region45: #{appnp_forward.5} parent=42 // loop_header
                  %s241 = sphi 0, %s245
                  %p242 = scmp.ge.s32.totalorder %s241, 1
                  %s246 = sphi %s158, %s158
                  %s247 = sphi %s152, %s152
                $region46: #{appnp_forward.5} parent=42 // loop_header_branch
                  %244 = sbr.rel (%p242) target = $region50
                $region47: #{appnp_forward.5} parent=42 // loop_body
                  %v248 = vld [vmem:[%s246] sm:$0xff]
                  %249 = vst [vmem:[%s247] sm:$0xff] %v248
                  %v250 = vld [vmem:[%s246 + $0x10] sm:$0xff]
                  %251 = vst [vmem:[%s247 + $0x8] sm:$0xff] %v250
                  %v252 = vld [vmem:[%s246 + $0x20] sm:$0xff]
                  %253 = vst [vmem:[%s247 + $0x10] sm:$0xff] %v252
                  %v254 = vld [vmem:[%s246 + $0x30] sm:$0xff]
                  %255 = vst [vmem:[%s247 + $0x18] sm:$0xff] %v254
                  %v256 = vld [vmem:[%s246 + $0x40] sm:$0xff]
                  %257 = vst [vmem:[%s247 + $0x20] sm:$0xff] %v256
                  %v258 = vld [vmem:[%s246 + $0x50] sm:$0xff]
                  %259 = vst [vmem:[%s247 + $0x28] sm:$0xff] %v258
                  %v260 = vld [vmem:[%s246 + $0x60] sm:$0xff]
                  %261 = vst [vmem:[%s247 + $0x30] sm:$0xff] %v260
                  %v262 = vld [vmem:[%s246 + $0x70] sm:$0xff]
                  %263 = vst [vmem:[%s247 + $0x38] sm:$0xff] %v262
                  %v264 = vld [vmem:[%s246 + $0x80] sm:$0xff]
                  %265 = vst [vmem:[%s247 + $0x40] sm:$0xff] %v264
                  %v266 = vld [vmem:[%s246 + $0x90] sm:$0xff]
                  %267 = vst [vmem:[%s247 + $0x48] sm:$0xff] %v266
                  %v268 = vld [vmem:[%s246 + $0xa0] sm:$0xff]
                  %269 = vst [vmem:[%s247 + $0x50] sm:$0xff] %v268
                  %v270 = vld [vmem:[%s246 + $0xb0] sm:$0xff]
                  %271 = vst [vmem:[%s247 + $0x58] sm:$0xff] %v270
                  %v272 = vld [vmem:[%s246 + $0xc0] sm:$0xff]
                  %273 = vst [vmem:[%s247 + $0x60] sm:$0xff] %v272
                  %v274 = vld [vmem:[%s246 + $0xd0] sm:$0xff]
                  %275 = vst [vmem:[%s247 + $0x68] sm:$0xff] %v274
                  %v276 = vld [vmem:[%s246 + $0xe0] sm:$0xff]
                  %277 = vst [vmem:[%s247 + $0x70] sm:$0xff] %v276
                  %v278 = vld [vmem:[%s246 + $0xf0] sm:$0xff]
                  %279 = vst [vmem:[%s247 + $0x78] sm:$0xff] %v278
                  %v280 = vld [vmem:[%s246 + $0x100] sm:$0xff]
                  %281 = vst [vmem:[%s247 + $0x80] sm:$0xff] %v280
                  %v282 = vld [vmem:[%s246 + $0x110] sm:$0xff]
                  %283 = vst [vmem:[%s247 + $0x88] sm:$0xff] %v282
                  %v284 = vld [vmem:[%s246 + $0x120] sm:$0xff]
                  %285 = vst [vmem:[%s247 + $0x90] sm:$0xff] %v284
                  %v286 = vld [vmem:[%s246 + $0x130] sm:$0xff]
                  %287 = vst [vmem:[%s247 + $0x98] sm:$0xff] %v286
                  %v288 = vld [vmem:[%s246 + $0x140] sm:$0xff]
                  %289 = vst [vmem:[%s247 + $0xa0] sm:$0xff] %v288
                  %v290 = vld [vmem:[%s246 + $0x150] sm:$0xff]
                  %291 = vst [vmem:[%s247 + $0xa8] sm:$0xff] %v290
                  %v292 = vld [vmem:[%s246 + $0x160] sm:$0xff]
                  %293 = vst [vmem:[%s247 + $0xb0] sm:$0xff] %v292
                  %v294 = vld [vmem:[%s246 + $0x170] sm:$0xff]
                  %295 = vst [vmem:[%s247 + $0xb8] sm:$0xff] %v294
                  %v296 = vld [vmem:[%s246 + $0x180] sm:$0xff]
                  %297 = vst [vmem:[%s247 + $0xc0] sm:$0xff] %v296
                  %v298 = vld [vmem:[%s246 + $0x190] sm:$0xff]
                  %299 = vst [vmem:[%s247 + $0xc8] sm:$0xff] %v298
                  %v300 = vld [vmem:[%s246 + $0x1a0] sm:$0xff]
                  %301 = vst [vmem:[%s247 + $0xd0] sm:$0xff] %v300
                  %v302 = vld [vmem:[%s246 + $0x1b0] sm:$0xff]
                  %303 = vst [vmem:[%s247 + $0xd8] sm:$0xff] %v302
                  %v304 = vld [vmem:[%s246 + $0x1c0] sm:$0xff]
                  %305 = vst [vmem:[%s247 + $0xe0] sm:$0xff] %v304
                  %v306 = vld [vmem:[%s246 + $0x1d0] sm:$0xff]
                  %307 = vst [vmem:[%s247 + $0xe8] sm:$0xff] %v306
                  %v308 = vld [vmem:[%s246 + $0x1e0] sm:$0xff]
                  %309 = vst [vmem:[%s247 + $0xf0] sm:$0xff] %v308
                  %v310 = vld [vmem:[%s246 + $0x1f0] sm:$0xff]
                  %311 = vst [vmem:[%s247 + $0xf8] sm:$0xff] %v310
                $region48: #{appnp_forward.5} parent=42 // loop_footer
                  %s245 = sadd.s32 1, %s241
                $region49: #{appnp_forward.5} parent=42 // loop_footer_branch
                  %240 = sbr.rel target = $region45
                $region50: #{appnp_forward.5} parent=42 // loop_exit
                  _
              $region43: #{appnp_forward.5} parent=27 // pred_fallthru
                _
              // Predicated region
              $region51: #{appnp_forward.5} parent=27 // pred_check
                _
              $region52: #{appnp_forward.5} parent=27 // pred_check_branch
                %313 = sbr.rel target = $region54
              $region53: #{appnp_forward.5} parent=27 // pred_region
                _
              $region54: #{appnp_forward.5} parent=27 // pred_fallthru
                _
            $region28: #{appnp_forward.5} parent=23 // pred_fallthru
              _
            // Predicated region
            $region29: #{appnp_forward.5} parent=23 // pred_check
              _
            $region30: #{appnp_forward.5} parent=23 // pred_check_branch
              %164 = sbr.rel target = $region32
            $region31: #{appnp_forward.5} parent=23 // pred_region
              loop: start=0, step=1, limit=1
              $region33: #{appnp_forward.5} parent=31 // loop_pre_header
                _
              $region34: #{appnp_forward.5} parent=31 // loop_header
                %s167 = sphi 0, %s171
                %p168 = scmp.ge.s32.totalorder %s167, 1
                %s172 = sphi %s158, %s158
                %s173 = sphi %s152, %s152
              $region35: #{appnp_forward.5} parent=31 // loop_header_branch
                %170 = sbr.rel (%p168) target = $region39
              $region36: #{appnp_forward.5} parent=31 // loop_body
                %v174 = vld [vmem:[%s172] sm:$0xff]
                %175 = vst [vmem:[%s173] sm:$0xff] %v174
                %v176 = vld [vmem:[%s172 + $0x10] sm:$0xff]
                %177 = vst [vmem:[%s173 + $0x8] sm:$0xff] %v176
                %v178 = vld [vmem:[%s172 + $0x20] sm:$0xff]
                %179 = vst [vmem:[%s173 + $0x10] sm:$0xff] %v178
                %v180 = vld [vmem:[%s172 + $0x30] sm:$0xff]
                %181 = vst [vmem:[%s173 + $0x18] sm:$0xff] %v180
                %v182 = vld [vmem:[%s172 + $0x40] sm:$0xff]
                %183 = vst [vmem:[%s173 + $0x20] sm:$0xff] %v182
                %v184 = vld [vmem:[%s172 + $0x50] sm:$0xff]
                %185 = vst [vmem:[%s173 + $0x28] sm:$0xff] %v184
                %v186 = vld [vmem:[%s172 + $0x60] sm:$0xff]
                %187 = vst [vmem:[%s173 + $0x30] sm:$0xff] %v186
                %v188 = vld [vmem:[%s172 + $0x70] sm:$0xff]
                %189 = vst [vmem:[%s173 + $0x38] sm:$0xff] %v188
                %v190 = vld [vmem:[%s172 + $0x80] sm:$0xff]
                %191 = vst [vmem:[%s173 + $0x40] sm:$0xff] %v190
                %v192 = vld [vmem:[%s172 + $0x90] sm:$0xff]
                %193 = vst [vmem:[%s173 + $0x48] sm:$0xff] %v192
                %v194 = vld [vmem:[%s172 + $0xa0] sm:$0xff]
                %195 = vst [vmem:[%s173 + $0x50] sm:$0xff] %v194
                %v196 = vld [vmem:[%s172 + $0xb0] sm:$0xff]
                %197 = vst [vmem:[%s173 + $0x58] sm:$0xff] %v196
                %v198 = vld [vmem:[%s172 + $0xc0] sm:$0xff]
                %199 = vst [vmem:[%s173 + $0x60] sm:$0xff] %v198
                %v200 = vld [vmem:[%s172 + $0xd0] sm:$0xff]
                %201 = vst [vmem:[%s173 + $0x68] sm:$0xff] %v200
                %v202 = vld [vmem:[%s172 + $0xe0] sm:$0xff]
                %203 = vst [vmem:[%s173 + $0x70] sm:$0xff] %v202
                %v204 = vld [vmem:[%s172 + $0xf0] sm:$0xff]
                %205 = vst [vmem:[%s173 + $0x78] sm:$0xff] %v204
                %v206 = vld [vmem:[%s172 + $0x100] sm:$0xff]
                %207 = vst [vmem:[%s173 + $0x80] sm:$0xff] %v206
                %v208 = vld [vmem:[%s172 + $0x110] sm:$0xff]
                %209 = vst [vmem:[%s173 + $0x88] sm:$0xff] %v208
                %v210 = vld [vmem:[%s172 + $0x120] sm:$0xff]
                %211 = vst [vmem:[%s173 + $0x90] sm:$0xff] %v210
                %v212 = vld [vmem:[%s172 + $0x130] sm:$0xff]
                %213 = vst [vmem:[%s173 + $0x98] sm:$0xff] %v212
                %v214 = vld [vmem:[%s172 + $0x140] sm:$0xff]
                %215 = vst [vmem:[%s173 + $0xa0] sm:$0xff] %v214
                %v216 = vld [vmem:[%s172 + $0x150] sm:$0xff]
                %217 = vst [vmem:[%s173 + $0xa8] sm:$0xff] %v216
                %v218 = vld [vmem:[%s172 + $0x160] sm:$0xff]
                %219 = vst [vmem:[%s173 + $0xb0] sm:$0xff] %v218
                %v220 = vld [vmem:[%s172 + $0x170] sm:$0xff]
                %221 = vst [vmem:[%s173 + $0xb8] sm:$0xff] %v220
                %v222 = vld [vmem:[%s172 + $0x180] sm:$0xff]
                %223 = vst [vmem:[%s173 + $0xc0] sm:$0xff] %v222
                %v224 = vld [vmem:[%s172 + $0x190] sm:$0xff]
                %225 = vst [vmem:[%s173 + $0xc8] sm:$0xff] %v224
                %v226 = vld [vmem:[%s172 + $0x1a0] sm:$0xff]
                %227 = vst [vmem:[%s173 + $0xd0] sm:$0xff] %v226
                %v228 = vld [vmem:[%s172 + $0x1b0] sm:$0xff]
                %229 = vst [vmem:[%s173 + $0xd8] sm:$0xff] %v228
                %v230 = vld [vmem:[%s172 + $0x1c0] sm:$0xff]
                %231 = vst [vmem:[%s173 + $0xe0] sm:$0xff] %v230
                %v232 = vld [vmem:[%s172 + $0x1d0] sm:$0xff]
                %233 = vst [vmem:[%s173 + $0xe8] sm:$0xff] %v232
                %v234 = vld [vmem:[%s172 + $0x1e0] sm:$0xff]
                %235 = vst [vmem:[%s173 + $0xf0] sm:$0xff] %v234
                %v236 = vld [vmem:[%s172 + $0x1f0] sm:$0xff]
                %237 = vst [vmem:[%s173 + $0xf8] sm:$0xff] %v236
              $region37: #{appnp_forward.5} parent=31 // loop_footer
                %s171 = sadd.s32 1, %s167
              $region38: #{appnp_forward.5} parent=31 // loop_footer_branch
                %166 = sbr.rel target = $region34
              $region39: #{appnp_forward.5} parent=31 // loop_exit
                _
            $region32: #{appnp_forward.5} parent=23 // pred_fallthru
              _
          $region24: #{appnp_forward.5} parent=19 // pred_fallthru
            _
          %314 = vnop
        $region20: #{appnp_forward.5} parent=15 // pred_fallthru
          _
        // Predicated region
        $region55: #{appnp_forward.5} parent=15 // pred_check
          %p315 = pneg %p69
        $region56: #{appnp_forward.5} parent=15 // pred_check_branch
          %317 = sbr.rel (%p315) target = $region58
        $region57: #{appnp_forward.5} parent=15 // pred_region
          %s318 = smul.u32 32, %s17
          %p319 = scmp.lt.s32.totalorder %s318, 63
          %s320 = scalar_select %p319, %s318, 63
          %s321 = smul.addr %s320, 4
          %s322 = scalar_lea.vmem %s1, %s321
          %s323 = smul.u32 32, %s17
        $region58: #{appnp_forward.5} parent=15 // pred_fallthru
          _
        // Predicated region
        $region59: #{appnp_forward.5} parent=15 // pred_check
          %p324 = pneg %p95
        $region60: #{appnp_forward.5} parent=15 // pred_check_branch
          %326 = sbr.rel (%p324) target = $region62
        $region61: #{appnp_forward.5} parent=15 // pred_region
          %s327 = smul.u32 32, %s16
          %p328 = scmp.lt.s32.totalorder %s327, 63
          %s329 = scalar_select %p328, %s327, 63
          %s330 = smul.addr %s329, 8
          %s331 = scalar_lea.vmem %s2, %s330
          %s332 = smul.u32 32, %s16
        $region62: #{appnp_forward.5} parent=15 // pred_fallthru
          _
      $region16: #{appnp_forward.5} parent=5 // pred_fallthru
        _
      %p333 = scmp.le.s32.totalorder 1, %s9
      %p334 = scmp.lt.s32.totalorder %s9, 5
      %p335 = pnand %p333, %p334
      %p336 = pneg %p335
      // Predicated region
      $region63: #{appnp_forward.5} parent=5 // pred_check
        _
      $region64: #{appnp_forward.5} parent=5 // pred_check_branch
        %338 = sbr.rel (%p335) target = $region66
      $region65: #{appnp_forward.5} parent=5 // pred_region
        %s339 = ssub.s32 %s9, 1
        %s340 = sand.u32 %s36, 1
        %s341 = sand.u32 %s36, 1
        %s342 = smul.addr %s341, 256
        %s343 = scalar_lea.vmem [#allocation3], %s342
        // Predicated region
        $region67: #{appnp_forward.5} parent=65 // pred_check
          %p344 = pneg %p49
        $region68: #{appnp_forward.5} parent=65 // pred_check_branch
          %346 = sbr.rel (%p344) target = $region70
        $region69: #{appnp_forward.5} parent=65 // pred_region
          _
        $region70: #{appnp_forward.5} parent=65 // pred_fallthru
          _
        %s347 = sand.u32 %s36, 1
        %s348 = sand.u32 %s36, 1
        %s349 = smul.addr %s348, 256
        %s350 = scalar_lea.vmem [#allocation3], %s349
        %p351 = pneg %p49
        %p352 = pneg %p46
        %s353 = smul.u32 32, %s19
        %p354 = scmp.lt.s32.totalorder %s353, 63
        %s355 = scalar_select %p354, %s353, 63
        %s356 = smul.addr %s355, 4
        %s357 = scalar_lea.vmem %s1, %s356
        %p358 = pneg %p75
        %p359 = pneg %p72
        %s360 = smul.u32 32, %s18
        %p361 = scmp.lt.s32.totalorder %s360, 63
        %s362 = scalar_select %p361, %s360, 63
        %s363 = smul.addr %s362, 8
        %s364 = scalar_lea.vmem %s2, %s363
        %p365 = pneg %p101
        %p366 = pneg %p98
        %p367 = pneg %p127
        %p368 = pneg %p124
        %s369 = smul.u32 32, %s18
        %p370 = scmp.lt.s32.totalorder %s369, 63
        %s371 = scalar_select %p370, %s369, 63
        %s372 = smul.addr %s371, 4
        %s373 = scalar_lea.vmem %s3, %s372
        %s374 = smul.u32 32, %s18
        %s375 = smul.u32 2, %s19
        %s376 = smul.u32 32, %s19
        %p377 = scmp.lt.s32.totalorder %s376, 63
        %s378 = scalar_select %p377, %s376, 63
        %s379 = smul.addr %s378, 4
        %s380 = scalar_lea.vmem %s1, %s379
        %s381 = smul.u32 32, %s19
        %s382 = smul.u32 32, %s18
        %p383 = scmp.lt.s32.totalorder %s382, 63
        %s384 = scalar_select %p383, %s382, 63
        %s385 = smul.addr %s384, 8
        %s386 = scalar_lea.vmem %s2, %s385
        %s387 = smul.u32 32, %s18
        %s388 = smul.u32 32, %s18
        %p389 = scmp.lt.s32.totalorder %s388, 63
        %s390 = scalar_select %p389, %s388, 63
        %s391 = smul.addr %s390, 4
        %s392 = scalar_lea.vmem %s3, %s391
        %s393 = smul.u32 32, %s18
        %p395 = scmp.eq.s32.totalorder %s19, 0
        // Predicated region
        $region71: #{appnp_forward.5} parent=65 // pred_check
          %p396 = pneg %p395
        $region72: #{appnp_forward.5} parent=65 // pred_check_branch
          %398 = sbr.rel (%p396) target = $region74
        $region73: #{appnp_forward.5} parent=65 // pred_region
          %399 = vst [vmem:[#allocation2] sm:$0xff] 0.0
          %400 = vst [vmem:[#allocation2 + $0x8] sm:$0xff] 0.0
          %401 = vst [vmem:[#allocation2 + $0x10] sm:$0xff] 0.0
          %402 = vst [vmem:[#allocation2 + $0x18] sm:$0xff] 0.0
          %403 = vst [vmem:[#allocation2 + $0x20] sm:$0xff] 0.0
          %404 = vst [vmem:[#allocation2 + $0x28] sm:$0xff] 0.0
          %405 = vst [vmem:[#allocation2 + $0x30] sm:$0xff] 0.0
          %406 = vst [vmem:[#allocation2 + $0x38] sm:$0xff] 0.0
          %407 = vst [vmem:[#allocation2 + $0x40] sm:$0xff] 0.0
          %408 = vst [vmem:[#allocation2 + $0x48] sm:$0xff] 0.0
          %409 = vst [vmem:[#allocation2 + $0x50] sm:$0xff] 0.0
          %410 = vst [vmem:[#allocation2 + $0x58] sm:$0xff] 0.0
          %411 = vst [vmem:[#allocation2 + $0x60] sm:$0xff] 0.0
          %412 = vst [vmem:[#allocation2 + $0x68] sm:$0xff] 0.0
          %413 = vst [vmem:[#allocation2 + $0x70] sm:$0xff] 0.0
          %414 = vst [vmem:[#allocation2 + $0x78] sm:$0xff] 0.0
          %415 = vst [vmem:[#allocation2 + $0x80] sm:$0xff] 0.0
          %416 = vst [vmem:[#allocation2 + $0x88] sm:$0xff] 0.0
          %417 = vst [vmem:[#allocation2 + $0x90] sm:$0xff] 0.0
          %418 = vst [vmem:[#allocation2 + $0x98] sm:$0xff] 0.0
          %419 = vst [vmem:[#allocation2 + $0xa0] sm:$0xff] 0.0
          %420 = vst [vmem:[#allocation2 + $0xa8] sm:$0xff] 0.0
          %421 = vst [vmem:[#allocation2 + $0xb0] sm:$0xff] 0.0
          %422 = vst [vmem:[#allocation2 + $0xb8] sm:$0xff] 0.0
          %423 = vst [vmem:[#allocation2 + $0xc0] sm:$0xff] 0.0
          %424 = vst [vmem:[#allocation2 + $0xc8] sm:$0xff] 0.0
          %425 = vst [vmem:[#allocation2 + $0xd0] sm:$0xff] 0.0
          %426 = vst [vmem:[#allocation2 + $0xd8] sm:$0xff] 0.0
          %427 = vst [vmem:[#allocation2 + $0xe0] sm:$0xff] 0.0
          %428 = vst [vmem:[#allocation2 + $0xe8] sm:$0xff] 0.0
          %429 = vst [vmem:[#allocation2 + $0xf0] sm:$0xff] 0.0
          %430 = vst [vmem:[#allocation2 + $0xf8] sm:$0xff] 0.0
        $region74: #{appnp_forward.5} parent=65 // pred_fallthru
          _
        %v431 = vld [vmem:[#allocation2] sm:$0xff]
        %v432 = vld [vmem:[#allocation2 + $0x8] sm:$0xff]
        %v433 = vld [vmem:[#allocation2 + $0x10] sm:$0xff]
        %v434 = vld [vmem:[#allocation2 + $0x18] sm:$0xff]
        %v435 = vld [vmem:[#allocation2 + $0x20] sm:$0xff]
        %v436 = vld [vmem:[#allocation2 + $0x28] sm:$0xff]
        %v437 = vld [vmem:[#allocation2 + $0x30] sm:$0xff]
        %v438 = vld [vmem:[#allocation2 + $0x38] sm:$0xff]
        %v439 = vld [vmem:[#allocation2 + $0x40] sm:$0xff]
        %v440 = vld [vmem:[#allocation2 + $0x48] sm:$0xff]
        %v441 = vld [vmem:[#allocation2 + $0x50] sm:$0xff]
        %v442 = vld [vmem:[#allocation2 + $0x58] sm:$0xff]
        %v443 = vld [vmem:[#allocation2 + $0x60] sm:$0xff]
        %v444 = vld [vmem:[#allocation2 + $0x68] sm:$0xff]
        %v445 = vld [vmem:[#allocation2 + $0x70] sm:$0xff]
        %v446 = vld [vmem:[#allocation2 + $0x78] sm:$0xff]
        %v447 = vld [vmem:[#allocation2 + $0x80] sm:$0xff]
        %v448 = vld [vmem:[#allocation2 + $0x88] sm:$0xff]
        %v449 = vld [vmem:[#allocation2 + $0x90] sm:$0xff]
        %v450 = vld [vmem:[#allocation2 + $0x98] sm:$0xff]
        %v451 = vld [vmem:[#allocation2 + $0xa0] sm:$0xff]
        %v452 = vld [vmem:[#allocation2 + $0xa8] sm:$0xff]
        %v453 = vld [vmem:[#allocation2 + $0xb0] sm:$0xff]
        %v454 = vld [vmem:[#allocation2 + $0xb8] sm:$0xff]
        %v455 = vld [vmem:[#allocation2 + $0xc0] sm:$0xff]
        %v456 = vld [vmem:[#allocation2 + $0xc8] sm:$0xff]
        %v457 = vld [vmem:[#allocation2 + $0xd0] sm:$0xff]
        %v458 = vld [vmem:[#allocation2 + $0xd8] sm:$0xff]
        %v459 = vld [vmem:[#allocation2 + $0xe0] sm:$0xff]
        %v460 = vld [vmem:[#allocation2 + $0xe8] sm:$0xff]
        %v461 = vld [vmem:[#allocation2 + $0xf0] sm:$0xff]
        %v462 = vld [vmem:[#allocation2 + $0xf8] sm:$0xff]
        %v463 = vld [vmem:[%s343] sm:$0xff]
        %v464 = vld [vmem:[%s343 + $0x8] sm:$0xff]
        %v465 = vld [vmem:[%s343 + $0x10] sm:$0xff]
        %v466 = vld [vmem:[%s343 + $0x18] sm:$0xff]
        %v467 = vld [vmem:[%s343 + $0x20] sm:$0xff]
        %v468 = vld [vmem:[%s343 + $0x28] sm:$0xff]
        %v469 = vld [vmem:[%s343 + $0x30] sm:$0xff]
        %v470 = vld [vmem:[%s343 + $0x38] sm:$0xff]
        %v471 = vld [vmem:[%s343 + $0x40] sm:$0xff]
        %v472 = vld [vmem:[%s343 + $0x48] sm:$0xff]
        %v473 = vld [vmem:[%s343 + $0x50] sm:$0xff]
        %v474 = vld [vmem:[%s343 + $0x58] sm:$0xff]
        %v475 = vld [vmem:[%s343 + $0x60] sm:$0xff]
        %v476 = vld [vmem:[%s343 + $0x68] sm:$0xff]
        %v477 = vld [vmem:[%s343 + $0x70] sm:$0xff]
        %v478 = vld [vmem:[%s343 + $0x78] sm:$0xff]
        %v479 = vld [vmem:[%s343 + $0x80] sm:$0xff]
        %v480 = vld [vmem:[%s343 + $0x88] sm:$0xff]
        %v481 = vld [vmem:[%s343 + $0x90] sm:$0xff]
        %v482 = vld [vmem:[%s343 + $0x98] sm:$0xff]
        %v483 = vld [vmem:[%s343 + $0xa0] sm:$0xff]
        %v484 = vld [vmem:[%s343 + $0xa8] sm:$0xff]
        %v485 = vld [vmem:[%s343 + $0xb0] sm:$0xff]
        %v486 = vld [vmem:[%s343 + $0xb8] sm:$0xff]
        %v487 = vld [vmem:[%s343 + $0xc0] sm:$0xff]
        %v488 = vld [vmem:[%s343 + $0xc8] sm:$0xff]
        %v489 = vld [vmem:[%s343 + $0xd0] sm:$0xff]
        %v490 = vld [vmem:[%s343 + $0xd8] sm:$0xff]
        %v491 = vld [vmem:[%s343 + $0xe0] sm:$0xff]
        %v492 = vld [vmem:[%s343 + $0xe8] sm:$0xff]
        %v493 = vld [vmem:[%s343 + $0xf0] sm:$0xff]
        %v494 = vld [vmem:[%s343 + $0xf8] sm:$0xff]
        %v495 = vld [vmem:[%s380] sm:$0xf]
        %v496 = vld [vmem:[%s380 + $0x4] sm:$0xf]
        %v497 = vld [vmem:[%s380 + $0x8] sm:$0xf]
        %v498 = vld [vmem:[%s380 + $0xc] sm:$0xf]
        %v499 = vld [vmem:[%s380 + $0x10] sm:$0xf]
        %v500 = vld [vmem:[%s380 + $0x14] sm:$0xf]
        %v501 = vld [vmem:[%s380 + $0x18] sm:$0xf]
        %v502 = vld [vmem:[%s380 + $0x1c] sm:$0xf]
        %v503 = vld [vmem:[%s380 + $0x20] sm:$0xf]
        %v504 = vld [vmem:[%s380 + $0x24] sm:$0xf]
        %v505 = vld [vmem:[%s380 + $0x28] sm:$0xf]
        %v506 = vld [vmem:[%s380 + $0x2c] sm:$0xf]
        %v507 = vld [vmem:[%s380 + $0x30] sm:$0xf]
        %v508 = vld [vmem:[%s380 + $0x34] sm:$0xf]
        %v509 = vld [vmem:[%s380 + $0x38] sm:$0xf]
        %v510 = vld [vmem:[%s380 + $0x3c] sm:$0xf]
        %v511 = vld [vmem:[%s380 + $0x40] sm:$0xf]
        %v512 = vld [vmem:[%s380 + $0x44] sm:$0xf]
        %v513 = vld [vmem:[%s380 + $0x48] sm:$0xf]
        %v514 = vld [vmem:[%s380 + $0x4c] sm:$0xf]
        %v515 = vld [vmem:[%s380 + $0x50] sm:$0xf]
        %v516 = vld [vmem:[%s380 + $0x54] sm:$0xf]
        %v517 = vld [vmem:[%s380 + $0x58] sm:$0xf]
        %v518 = vld [vmem:[%s380 + $0x5c] sm:$0xf]
        %v519 = vld [vmem:[%s380 + $0x60] sm:$0xf]
        %v520 = vld [vmem:[%s380 + $0x64] sm:$0xf]
        %v521 = vld [vmem:[%s380 + $0x68] sm:$0xf]
        %v522 = vld [vmem:[%s380 + $0x6c] sm:$0xf]
        %v523 = vld [vmem:[%s380 + $0x70] sm:$0xf]
        %v524 = vld [vmem:[%s380 + $0x74] sm:$0xf]
        %v525 = vld [vmem:[%s380 + $0x78] sm:$0xf]
        %v526 = vld [vmem:[%s380 + $0x7c] sm:$0xf]
        %v559 = vunpack.c.l.b16 %v463
        %v560 = vunpack.c.h.b16 %v463
        %v561 = vunpack.c.l.b16 %v464
        %v562 = vunpack.c.h.b16 %v464
        %v563 = vunpack.c.l.b16 %v465
        %v564 = vunpack.c.h.b16 %v465
        %v565 = vunpack.c.l.b16 %v466
        %v566 = vunpack.c.h.b16 %v466
        %v567 = vunpack.c.l.b16 %v467
        %v568 = vunpack.c.h.b16 %v467
        %v569 = vunpack.c.l.b16 %v468
        %v570 = vunpack.c.h.b16 %v468
        %v571 = vunpack.c.l.b16 %v469
        %v572 = vunpack.c.h.b16 %v469
        %v573 = vunpack.c.l.b16 %v470
        %v574 = vunpack.c.h.b16 %v470
        %v575 = vunpack.c.l.b16 %v471
        %v576 = vunpack.c.h.b16 %v471
        %v577 = vunpack.c.l.b16 %v472
        %v578 = vunpack.c.h.b16 %v472
        %v579 = vunpack.c.l.b16 %v473
        %v580 = vunpack.c.h.b16 %v473
        %v581 = vunpack.c.l.b16 %v474
        %v582 = vunpack.c.h.b16 %v474
        %v583 = vunpack.c.l.b16 %v475
        %v584 = vunpack.c.h.b16 %v475
        %v585 = vunpack.c.l.b16 %v476
        %v586 = vunpack.c.h.b16 %v476
        %v587 = vunpack.c.l.b16 %v477
        %v588 = vunpack.c.h.b16 %v477
        %v589 = vunpack.c.l.b16 %v478
        %v590 = vunpack.c.h.b16 %v478
        %v591 = vunpack.c.l.b16 %v479
        %v592 = vunpack.c.h.b16 %v479
        %v593 = vunpack.c.l.b16 %v480
        %v594 = vunpack.c.h.b16 %v480
        %v595 = vunpack.c.l.b16 %v481
        %v596 = vunpack.c.h.b16 %v481
        %v597 = vunpack.c.l.b16 %v482
        %v598 = vunpack.c.h.b16 %v482
        %v599 = vunpack.c.l.b16 %v483
        %v600 = vunpack.c.h.b16 %v483
        %v601 = vunpack.c.l.b16 %v484
        %v602 = vunpack.c.h.b16 %v484
        %v603 = vunpack.c.l.b16 %v485
        %v604 = vunpack.c.h.b16 %v485
        %v605 = vunpack.c.l.b16 %v486
        %v606 = vunpack.c.h.b16 %v486
        %v607 = vunpack.c.l.b16 %v487
        %v608 = vunpack.c.h.b16 %v487
        %v609 = vunpack.c.l.b16 %v488
        %v610 = vunpack.c.h.b16 %v488
        %v611 = vunpack.c.l.b16 %v489
        %v612 = vunpack.c.h.b16 %v489
        %v613 = vunpack.c.l.b16 %v490
        %v614 = vunpack.c.h.b16 %v490
        %v615 = vunpack.c.l.b16 %v491
        %v616 = vunpack.c.h.b16 %v491
        %v617 = vunpack.c.l.b16 %v492
        %v618 = vunpack.c.h.b16 %v492
        %v619 = vunpack.c.l.b16 %v493
        %v620 = vunpack.c.h.b16 %v493
        %v621 = vunpack.c.l.b16 %v494
        %v622 = vunpack.c.h.b16 %v494
        %v623 = vpack.c.b16 %v561, %v559
        %v624 = vpack.c.b16 %v562, %v560
        %v625 = vpack.c.b16 %v565, %v563
        %v626 = vpack.c.b16 %v566, %v564
        %v627 = vpack.c.b16 %v569, %v567
        %v628 = vpack.c.b16 %v570, %v568
        %v629 = vpack.c.b16 %v573, %v571
        %v630 = vpack.c.b16 %v574, %v572
        %v631 = vpack.c.b16 %v577, %v575
        %v632 = vpack.c.b16 %v578, %v576
        %v633 = vpack.c.b16 %v581, %v579
        %v634 = vpack.c.b16 %v582, %v580
        %v635 = vpack.c.b16 %v585, %v583
        %v636 = vpack.c.b16 %v586, %v584
        %v637 = vpack.c.b16 %v589, %v587
        %v638 = vpack.c.b16 %v590, %v588
        %v639 = vpack.c.b16 %v593, %v591
        %v640 = vpack.c.b16 %v594, %v592
        %v641 = vpack.c.b16 %v597, %v595
        %v642 = vpack.c.b16 %v598, %v596
        %v643 = vpack.c.b16 %v601, %v599
        %v644 = vpack.c.b16 %v602, %v600
        %v645 = vpack.c.b16 %v605, %v603
        %v646 = vpack.c.b16 %v606, %v604
        %v647 = vpack.c.b16 %v609, %v607
        %v648 = vpack.c.b16 %v610, %v608
        %v649 = vpack.c.b16 %v613, %v611
        %v650 = vpack.c.b16 %v614, %v612
        %v651 = vpack.c.b16 %v617, %v615
        %v652 = vpack.c.b16 %v618, %v616
        %v653 = vpack.c.b16 %v621, %v619
        %v654 = vpack.c.b16 %v622, %v620
        %v719 = vunpack.c.l.b16 %v495
        %v720 = vunpack.c.l.b16 %v496
        %v721 = vunpack.c.l.b16 %v497
        %v722 = vunpack.c.l.b16 %v498
        %v723 = vunpack.c.l.b16 %v499
        %v724 = vunpack.c.l.b16 %v500
        %v725 = vunpack.c.l.b16 %v501
        %v726 = vunpack.c.l.b16 %v502
        %v727 = vunpack.c.l.b16 %v503
        %v728 = vunpack.c.l.b16 %v504
        %v729 = vunpack.c.l.b16 %v505
        %v730 = vunpack.c.l.b16 %v506
        %v731 = vunpack.c.l.b16 %v507
        %v732 = vunpack.c.l.b16 %v508
        %v733 = vunpack.c.l.b16 %v509
        %v734 = vunpack.c.l.b16 %v510
        %v735 = vunpack.c.l.b16 %v511
        %v736 = vunpack.c.l.b16 %v512
        %v737 = vunpack.c.l.b16 %v513
        %v738 = vunpack.c.l.b16 %v514
        %v739 = vunpack.c.l.b16 %v515
        %v740 = vunpack.c.l.b16 %v516
        %v741 = vunpack.c.l.b16 %v517
        %v742 = vunpack.c.l.b16 %v518
        %v743 = vunpack.c.l.b16 %v519
        %v744 = vunpack.c.l.b16 %v520
        %v745 = vunpack.c.l.b16 %v521
        %v746 = vunpack.c.l.b16 %v522
        %v747 = vunpack.c.l.b16 %v523
        %v748 = vunpack.c.l.b16 %v524
        %v749 = vunpack.c.l.b16 %v525
        %v750 = vunpack.c.l.b16 %v526
        %v751 = vpack.c.b16 %v720, %v719
        %v752 = vpack.c.b16 %v722, %v721
        %v753 = vpack.c.b16 %v724, %v723
        %v754 = vpack.c.b16 %v726, %v725
        %v755 = vpack.c.b16 %v728, %v727
        %v756 = vpack.c.b16 %v730, %v729
        %v757 = vpack.c.b16 %v732, %v731
        %v758 = vpack.c.b16 %v734, %v733
        %v759 = vpack.c.b16 %v736, %v735
        %v760 = vpack.c.b16 %v738, %v737
        %v761 = vpack.c.b16 %v740, %v739
        %v762 = vpack.c.b16 %v742, %v741
        %v763 = vpack.c.b16 %v744, %v743
        %v764 = vpack.c.b16 %v746, %v745
        %v765 = vpack.c.b16 %v748, %v747
        %v766 = vpack.c.b16 %v750, %v749
        %783 = vmatprep.subr.bf16.mxu0 0
        %784 = vmatpush1.bf16.msra.mxu0 %v751
        %785 = vmatprep.subr.bf16.mxu0 0
        %786 = vmatpush1.bf16.msra.mxu0 %v752
        %787 = vmatprep.subr.bf16.mxu0 0
        %788 = vmatpush1.bf16.msra.mxu0 %v753
        %789 = vmatprep.subr.bf16.mxu0 0
        %790 = vmatpush1.bf16.msra.mxu0 %v754
        %791 = vmatprep.subr.bf16.mxu0 0
        %792 = vmatpush1.bf16.msra.mxu0 %v755
        %793 = vmatprep.subr.bf16.mxu0 0
        %794 = vmatpush1.bf16.msra.mxu0 %v756
        %795 = vmatprep.subr.bf16.mxu0 0
        %796 = vmatpush1.bf16.msra.mxu0 %v757
        %797 = vmatprep.subr.bf16.mxu0 0
        %798 = vmatpush1.bf16.msra.mxu0 %v758
        %799 = vmatprep.subr.bf16.mxu0 0
        %800 = vmatpush1.bf16.msra.mxu0 %v759
        %801 = vmatprep.subr.bf16.mxu0 0
        %802 = vmatpush1.bf16.msra.mxu0 %v760
        %803 = vmatprep.subr.bf16.mxu0 0
        %804 = vmatpush1.bf16.msra.mxu0 %v761
        %805 = vmatprep.subr.bf16.mxu0 0
        %806 = vmatpush1.bf16.msra.mxu0 %v762
        %807 = vmatprep.subr.bf16.mxu0 0
        %808 = vmatpush1.bf16.msra.mxu0 %v763
        %809 = vmatprep.subr.bf16.mxu0 0
        %810 = vmatpush1.bf16.msra.mxu0 %v764
        %811 = vmatprep.subr.bf16.mxu0 0
        %812 = vmatpush1.bf16.msra.mxu0 %v765
        %813 = vmatprep.subr.bf16.mxu0 0
        %814 = vmatpush1.bf16.msra.mxu0 %v766
        %815 = vmatprep.mubr.bf16.mxu0 %v624
        %816 = vmatmul.mubr.bf16.gmra.mrb[0].mxu0 %v623
        %v817 = vpop.f32.mrb[0].mxu0
        %v818 = vadd.f32 0.0, %v817
        %v819 = vpop.f32.mrb[0].mxu0
        %v820 = vpop.f32.mrb[0].mxu0
        %v821 = vadd.f32 0.0, %v820
        %v822 = vpop.f32.mrb[0].mxu0
        %823 = vmatprep.mubr.bf16.mxu0 %v626
        %824 = vmatmul.mubr.bf16.gmra.mrb[0].mxu0 %v625
        %v825 = vpop.f32.mrb[0].mxu0
        %v826 = vadd.f32 0.0, %v825
        %v827 = vpop.f32.mrb[0].mxu0
        %v828 = vpop.f32.mrb[0].mxu0
        %v829 = vadd.f32 0.0, %v828
        %v830 = vpop.f32.mrb[0].mxu0
        %831 = vmatprep.mubr.bf16.mxu0 %v628
        %832 = vmatmul.mubr.bf16.gmra.mrb[0].mxu0 %v627
        %v833 = vpop.f32.mrb[0].mxu0
        %v834 = vadd.f32 0.0, %v833
        %v835 = vpop.f32.mrb[0].mxu0
        %v836 = vpop.f32.mrb[0].mxu0
        %v837 = vadd.f32 0.0, %v836
        %v838 = vpop.f32.mrb[0].mxu0
        %839 = vmatprep.mubr.bf16.mxu0 %v630
        %840 = vmatmul.mubr.bf16.gmra.mrb[0].mxu0 %v629
        %v841 = vpop.f32.mrb[0].mxu0
        %v842 = vadd.f32 0.0, %v841
        %v843 = vpop.f32.mrb[0].mxu0
        %v844 = vpop.f32.mrb[0].mxu0
        %v845 = vadd.f32 0.0, %v844
        %v846 = vpop.f32.mrb[0].mxu0
        %847 = vmatprep.mubr.bf16.mxu0 %v632
        %848 = vmatmul.mubr.bf16.gmra.mrb[0].mxu0 %v631
        %v849 = vpop.f32.mrb[0].mxu0
        %v850 = vadd.f32 0.0, %v849
        %v851 = vpop.f32.mrb[0].mxu0
        %v852 = vpop.f32.mrb[0].mxu0
        %v853 = vadd.f32 0.0, %v852
        %v854 = vpop.f32.mrb[0].mxu0
        %855 = vmatprep.mubr.bf16.mxu0 %v634
        %856 = vmatmul.mubr.bf16.gmra.mrb[0].mxu0 %v633
        %v857 = vpop.f32.mrb[0].mxu0
        %v858 = vadd.f32 0.0, %v857
        %v859 = vpop.f32.mrb[0].mxu0
        %v860 = vpop.f32.mrb[0].mxu0
        %v861 = vadd.f32 0.0, %v860
        %v862 = vpop.f32.mrb[0].mxu0
        %863 = vmatprep.mubr.bf16.mxu0 %v636
        %864 = vmatmul.mubr.bf16.gmra.mrb[0].mxu0 %v635
        %v865 = vpop.f32.mrb[0].mxu0
        %v866 = vadd.f32 0.0, %v865
        %v867 = vpop.f32.mrb[0].mxu0
        %v868 = vpop.f32.mrb[0].mxu0
        %v869 = vadd.f32 0.0, %v868
        %v870 = vpop.f32.mrb[0].mxu0
        %871 = vmatprep.mubr.bf16.mxu0 %v638
        %872 = vmatmul.mubr.bf16.gmra.mrb[0].mxu0 %v637
        %v873 = vpop.f32.mrb[0].mxu0
        %v874 = vadd.f32 0.0, %v873
        %v875 = vpop.f32.mrb[0].mxu0
        %v876 = vpop.f32.mrb[0].mxu0
        %v877 = vadd.f32 0.0, %v876
        %v878 = vpop.f32.mrb[0].mxu0
        %879 = vmatprep.mubr.bf16.mxu0 %v640
        %880 = vmatmul.mubr.bf16.gmra.mrb[0].mxu0 %v639
        %v881 = vpop.f32.mrb[0].mxu0
        %v882 = vadd.f32 0.0, %v881
        %v883 = vpop.f32.mrb[0].mxu0
        %v884 = vpop.f32.mrb[0].mxu0
        %v885 = vadd.f32 0.0, %v884
        %v886 = vpop.f32.mrb[0].mxu0
        %887 = vmatprep.mubr.bf16.mxu0 %v642
        %888 = vmatmul.mubr.bf16.gmra.mrb[0].mxu0 %v641
        %v889 = vpop.f32.mrb[0].mxu0
        %v890 = vadd.f32 0.0, %v889
        %v891 = vpop.f32.mrb[0].mxu0
        %v892 = vpop.f32.mrb[0].mxu0
        %v893 = vadd.f32 0.0, %v892
        %v894 = vpop.f32.mrb[0].mxu0
        %895 = vmatprep.mubr.bf16.mxu0 %v644
        %896 = vmatmul.mubr.bf16.gmra.mrb[0].mxu0 %v643
        %v897 = vpop.f32.mrb[0].mxu0
        %v898 = vadd.f32 0.0, %v897
        %v899 = vpop.f32.mrb[0].mxu0
        %v900 = vpop.f32.mrb[0].mxu0
        %v901 = vadd.f32 0.0, %v900
        %v902 = vpop.f32.mrb[0].mxu0
        %903 = vmatprep.mubr.bf16.mxu0 %v646
        %904 = vmatmul.mubr.bf16.gmra.mrb[0].mxu0 %v645
        %v905 = vpop.f32.mrb[0].mxu0
        %v906 = vadd.f32 0.0, %v905
        %v907 = vpop.f32.mrb[0].mxu0
        %v908 = vpop.f32.mrb[0].mxu0
        %v909 = vadd.f32 0.0, %v908
        %v910 = vpop.f32.mrb[0].mxu0
        %911 = vmatprep.mubr.bf16.mxu0 %v648
        %912 = vmatmul.mubr.bf16.gmra.mrb[0].mxu0 %v647
        %v913 = vpop.f32.mrb[0].mxu0
        %v914 = vadd.f32 0.0, %v913
        %v915 = vpop.f32.mrb[0].mxu0
        %v916 = vpop.f32.mrb[0].mxu0
        %v917 = vadd.f32 0.0, %v916
        %v918 = vpop.f32.mrb[0].mxu0
        %919 = vmatprep.mubr.bf16.mxu0 %v650
        %920 = vmatmul.mubr.bf16.gmra.mrb[0].mxu0 %v649
        %v921 = vpop.f32.mrb[0].mxu0
        %v922 = vadd.f32 0.0, %v921
        %v923 = vpop.f32.mrb[0].mxu0
        %v924 = vpop.f32.mrb[0].mxu0
        %v925 = vadd.f32 0.0, %v924
        %v926 = vpop.f32.mrb[0].mxu0
        %927 = vmatprep.mubr.bf16.mxu0 %v652
        %928 = vmatmul.mubr.bf16.gmra.mrb[0].mxu0 %v651
        %v929 = vpop.f32.mrb[0].mxu0
        %v930 = vadd.f32 0.0, %v929
        %v931 = vpop.f32.mrb[0].mxu0
        %v932 = vpop.f32.mrb[0].mxu0
        %v933 = vadd.f32 0.0, %v932
        %v934 = vpop.f32.mrb[0].mxu0
        %935 = vmatprep.mubr.bf16.mxu0 %v654
        %936 = vmatmul.mubr.bf16.gmra.mrb[0].mxu0 %v653
        %v937 = vpop.f32.mrb[0].mxu0
        %v938 = vadd.f32 0.0, %v937
        %v939 = vpop.f32.mrb[0].mxu0
        %v940 = vpop.f32.mrb[0].mxu0
        %v941 = vadd.f32 0.0, %v940
        %v942 = vpop.f32.mrb[0].mxu0
        %943 = vdwg.mxu0
        %v944 = vadd.f32 %v431, %v818
        %v945 = vadd.f32 %v432, %v821
        %v946 = vadd.f32 %v433, %v826
        %v947 = vadd.f32 %v434, %v829
        %v948 = vadd.f32 %v435, %v834
        %v949 = vadd.f32 %v436, %v837
        %v950 = vadd.f32 %v437, %v842
        %v951 = vadd.f32 %v438, %v845
        %v952 = vadd.f32 %v439, %v850
        %v953 = vadd.f32 %v440, %v853
        %v954 = vadd.f32 %v441, %v858
        %v955 = vadd.f32 %v442, %v861
        %v956 = vadd.f32 %v443, %v866
        %v957 = vadd.f32 %v444, %v869
        %v958 = vadd.f32 %v445, %v874
        %v959 = vadd.f32 %v446, %v877
        %v960 = vadd.f32 %v447, %v882
        %v961 = vadd.f32 %v448, %v885
        %v962 = vadd.f32 %v449, %v890
        %v963 = vadd.f32 %v450, %v893
        %v964 = vadd.f32 %v451, %v898
        %v965 = vadd.f32 %v452, %v901
        %v966 = vadd.f32 %v453, %v906
        %v967 = vadd.f32 %v454, %v909
        %v968 = vadd.f32 %v455, %v914
        %v969 = vadd.f32 %v456, %v917
        %v970 = vadd.f32 %v457, %v922
        %v971 = vadd.f32 %v458, %v925
        %v972 = vadd.f32 %v459, %v930
        %v973 = vadd.f32 %v460, %v933
        %v974 = vadd.f32 %v461, %v938
        %v975 = vadd.f32 %v462, %v941
        %976 = vst [vmem:[#allocation2] sm:$0xff] %v944
        %977 = vst [vmem:[#allocation2 + $0x8] sm:$0xff] %v945
        %978 = vst [vmem:[#allocation2 + $0x10] sm:$0xff] %v946
        %979 = vst [vmem:[#allocation2 + $0x18] sm:$0xff] %v947
        %980 = vst [vmem:[#allocation2 + $0x20] sm:$0xff] %v948
        %981 = vst [vmem:[#allocation2 + $0x28] sm:$0xff] %v949
        %982 = vst [vmem:[#allocation2 + $0x30] sm:$0xff] %v950
        %983 = vst [vmem:[#allocation2 + $0x38] sm:$0xff] %v951
        %984 = vst [vmem:[#allocation2 + $0x40] sm:$0xff] %v952
        %985 = vst [vmem:[#allocation2 + $0x48] sm:$0xff] %v953
        %986 = vst [vmem:[#allocation2 + $0x50] sm:$0xff] %v954
        %987 = vst [vmem:[#allocation2 + $0x58] sm:$0xff] %v955
        %988 = vst [vmem:[#allocation2 + $0x60] sm:$0xff] %v956
        %989 = vst [vmem:[#allocation2 + $0x68] sm:$0xff] %v957
        %990 = vst [vmem:[#allocation2 + $0x70] sm:$0xff] %v958
        %991 = vst [vmem:[#allocation2 + $0x78] sm:$0xff] %v959
        %992 = vst [vmem:[#allocation2 + $0x80] sm:$0xff] %v960
        %993 = vst [vmem:[#allocation2 + $0x88] sm:$0xff] %v961
        %994 = vst [vmem:[#allocation2 + $0x90] sm:$0xff] %v962
        %995 = vst [vmem:[#allocation2 + $0x98] sm:$0xff] %v963
        %996 = vst [vmem:[#allocation2 + $0xa0] sm:$0xff] %v964
        %997 = vst [vmem:[#allocation2 + $0xa8] sm:$0xff] %v965
        %998 = vst [vmem:[#allocation2 + $0xb0] sm:$0xff] %v966
        %999 = vst [vmem:[#allocation2 + $0xb8] sm:$0xff] %v967
        %1000 = vst [vmem:[#allocation2 + $0xc0] sm:$0xff] %v968
        %1001 = vst [vmem:[#allocation2 + $0xc8] sm:$0xff] %v969
        %1002 = vst [vmem:[#allocation2 + $0xd0] sm:$0xff] %v970
        %1003 = vst [vmem:[#allocation2 + $0xd8] sm:$0xff] %v971
        %1004 = vst [vmem:[#allocation2 + $0xe0] sm:$0xff] %v972
        %1005 = vst [vmem:[#allocation2 + $0xe8] sm:$0xff] %v973
        %1006 = vst [vmem:[#allocation2 + $0xf0] sm:$0xff] %v974
        %1007 = vst [vmem:[#allocation2 + $0xf8] sm:$0xff] %v975
        %p1008 = scmp.eq.s32.totalorder %s19, 1
        // Predicated region
        $region75: #{appnp_forward.5} parent=65 // pred_check
          %p1009 = pneg %p1008
        $region76: #{appnp_forward.5} parent=65 // pred_check_branch
          %1011 = sbr.rel (%p1009) target = $region78
        $region77: #{appnp_forward.5} parent=65 // pred_region
          %v1012 = vld [vmem:[#allocation2] sm:$0xff]
          %v1013 = vld [vmem:[#allocation2 + $0x8] sm:$0xff]
          %v1014 = vld [vmem:[#allocation2 + $0x10] sm:$0xff]
          %v1015 = vld [vmem:[#allocation2 + $0x18] sm:$0xff]
          %v1016 = vld [vmem:[#allocation2 + $0x20] sm:$0xff]
          %v1017 = vld [vmem:[#allocation2 + $0x28] sm:$0xff]
          %v1018 = vld [vmem:[#allocation2 + $0x30] sm:$0xff]
          %v1019 = vld [vmem:[#allocation2 + $0x38] sm:$0xff]
          %v1020 = vld [vmem:[#allocation2 + $0x40] sm:$0xff]
          %v1021 = vld [vmem:[#allocation2 + $0x48] sm:$0xff]
          %v1022 = vld [vmem:[#allocation2 + $0x50] sm:$0xff]
          %v1023 = vld [vmem:[#allocation2 + $0x58] sm:$0xff]
          %v1024 = vld [vmem:[#allocation2 + $0x60] sm:$0xff]
          %v1025 = vld [vmem:[#allocation2 + $0x68] sm:$0xff]
          %v1026 = vld [vmem:[#allocation2 + $0x70] sm:$0xff]
          %v1027 = vld [vmem:[#allocation2 + $0x78] sm:$0xff]
          %v1028 = vld [vmem:[#allocation2 + $0x80] sm:$0xff]
          %v1029 = vld [vmem:[#allocation2 + $0x88] sm:$0xff]
          %v1030 = vld [vmem:[#allocation2 + $0x90] sm:$0xff]
          %v1031 = vld [vmem:[#allocation2 + $0x98] sm:$0xff]
          %v1032 = vld [vmem:[#allocation2 + $0xa0] sm:$0xff]
          %v1033 = vld [vmem:[#allocation2 + $0xa8] sm:$0xff]
          %v1034 = vld [vmem:[#allocation2 + $0xb0] sm:$0xff]
          %v1035 = vld [vmem:[#allocation2 + $0xb8] sm:$0xff]
          %v1036 = vld [vmem:[#allocation2 + $0xc0] sm:$0xff]
          %v1037 = vld [vmem:[#allocation2 + $0xc8] sm:$0xff]
          %v1038 = vld [vmem:[#allocation2 + $0xd0] sm:$0xff]
          %v1039 = vld [vmem:[#allocation2 + $0xd8] sm:$0xff]
          %v1040 = vld [vmem:[#allocation2 + $0xe0] sm:$0xff]
          %v1041 = vld [vmem:[#allocation2 + $0xe8] sm:$0xff]
          %v1042 = vld [vmem:[#allocation2 + $0xf0] sm:$0xff]
          %v1043 = vld [vmem:[#allocation2 + $0xf8] sm:$0xff]
          %v1044 = vmul.f32 %v1012, 0.9
          %v1045 = vmul.f32 %v1013, 0.9
          %v1046 = vmul.f32 %v1014, 0.9
          %v1047 = vmul.f32 %v1015, 0.9
          %v1048 = vmul.f32 %v1016, 0.9
          %v1049 = vmul.f32 %v1017, 0.9
          %v1050 = vmul.f32 %v1018, 0.9
          %v1051 = vmul.f32 %v1019, 0.9
          %v1052 = vmul.f32 %v1020, 0.9
          %v1053 = vmul.f32 %v1021, 0.9
          %v1054 = vmul.f32 %v1022, 0.9
          %v1055 = vmul.f32 %v1023, 0.9
          %v1056 = vmul.f32 %v1024, 0.9
          %v1057 = vmul.f32 %v1025, 0.9
          %v1058 = vmul.f32 %v1026, 0.9
          %v1059 = vmul.f32 %v1027, 0.9
          %v1060 = vmul.f32 %v1028, 0.9
          %v1061 = vmul.f32 %v1029, 0.9
          %v1062 = vmul.f32 %v1030, 0.9
          %v1063 = vmul.f32 %v1031, 0.9
          %v1064 = vmul.f32 %v1032, 0.9
          %v1065 = vmul.f32 %v1033, 0.9
          %v1066 = vmul.f32 %v1034, 0.9
          %v1067 = vmul.f32 %v1035, 0.9
          %v1068 = vmul.f32 %v1036, 0.9
          %v1069 = vmul.f32 %v1037, 0.9
          %v1070 = vmul.f32 %v1038, 0.9
          %v1071 = vmul.f32 %v1039, 0.9
          %v1072 = vmul.f32 %v1040, 0.9
          %v1073 = vmul.f32 %v1041, 0.9
          %v1074 = vmul.f32 %v1042, 0.9
          %v1075 = vmul.f32 %v1043, 0.9
          %v1076 = vld [vmem:[%s386] sm:$0xff]
          %v1077 = vld [vmem:[%s386 + $0x8] sm:$0xff]
          %v1078 = vld [vmem:[%s386 + $0x10] sm:$0xff]
          %v1079 = vld [vmem:[%s386 + $0x18] sm:$0xff]
          %v1080 = vld [vmem:[%s386 + $0x20] sm:$0xff]
          %v1081 = vld [vmem:[%s386 + $0x28] sm:$0xff]
          %v1082 = vld [vmem:[%s386 + $0x30] sm:$0xff]
          %v1083 = vld [vmem:[%s386 + $0x38] sm:$0xff]
          %v1084 = vld [vmem:[%s386 + $0x40] sm:$0xff]
          %v1085 = vld [vmem:[%s386 + $0x48] sm:$0xff]
          %v1086 = vld [vmem:[%s386 + $0x50] sm:$0xff]
          %v1087 = vld [vmem:[%s386 + $0x58] sm:$0xff]
          %v1088 = vld [vmem:[%s386 + $0x60] sm:$0xff]
          %v1089 = vld [vmem:[%s386 + $0x68] sm:$0xff]
          %v1090 = vld [vmem:[%s386 + $0x70] sm:$0xff]
          %v1091 = vld [vmem:[%s386 + $0x78] sm:$0xff]
          %v1092 = vld [vmem:[%s386 + $0x80] sm:$0xff]
          %v1093 = vld [vmem:[%s386 + $0x88] sm:$0xff]
          %v1094 = vld [vmem:[%s386 + $0x90] sm:$0xff]
          %v1095 = vld [vmem:[%s386 + $0x98] sm:$0xff]
          %v1096 = vld [vmem:[%s386 + $0xa0] sm:$0xff]
          %v1097 = vld [vmem:[%s386 + $0xa8] sm:$0xff]
          %v1098 = vld [vmem:[%s386 + $0xb0] sm:$0xff]
          %v1099 = vld [vmem:[%s386 + $0xb8] sm:$0xff]
          %v1100 = vld [vmem:[%s386 + $0xc0] sm:$0xff]
          %v1101 = vld [vmem:[%s386 + $0xc8] sm:$0xff]
          %v1102 = vld [vmem:[%s386 + $0xd0] sm:$0xff]
          %v1103 = vld [vmem:[%s386 + $0xd8] sm:$0xff]
          %v1104 = vld [vmem:[%s386 + $0xe0] sm:$0xff]
          %v1105 = vld [vmem:[%s386 + $0xe8] sm:$0xff]
          %v1106 = vld [vmem:[%s386 + $0xf0] sm:$0xff]
          %v1107 = vld [vmem:[%s386 + $0xf8] sm:$0xff]
          %v1108 = vmul.f32 %v1076, 0.1
          %v1109 = vmul.f32 %v1077, 0.1
          %v1110 = vmul.f32 %v1078, 0.1
          %v1111 = vmul.f32 %v1079, 0.1
          %v1112 = vmul.f32 %v1080, 0.1
          %v1113 = vmul.f32 %v1081, 0.1
          %v1114 = vmul.f32 %v1082, 0.1
          %v1115 = vmul.f32 %v1083, 0.1
          %v1116 = vmul.f32 %v1084, 0.1
          %v1117 = vmul.f32 %v1085, 0.1
          %v1118 = vmul.f32 %v1086, 0.1
          %v1119 = vmul.f32 %v1087, 0.1
          %v1120 = vmul.f32 %v1088, 0.1
          %v1121 = vmul.f32 %v1089, 0.1
          %v1122 = vmul.f32 %v1090, 0.1
          %v1123 = vmul.f32 %v1091, 0.1
          %v1124 = vmul.f32 %v1092, 0.1
          %v1125 = vmul.f32 %v1093, 0.1
          %v1126 = vmul.f32 %v1094, 0.1
          %v1127 = vmul.f32 %v1095, 0.1
          %v1128 = vmul.f32 %v1096, 0.1
          %v1129 = vmul.f32 %v1097, 0.1
          %v1130 = vmul.f32 %v1098, 0.1
          %v1131 = vmul.f32 %v1099, 0.1
          %v1132 = vmul.f32 %v1100, 0.1
          %v1133 = vmul.f32 %v1101, 0.1
          %v1134 = vmul.f32 %v1102, 0.1
          %v1135 = vmul.f32 %v1103, 0.1
          %v1136 = vmul.f32 %v1104, 0.1
          %v1137 = vmul.f32 %v1105, 0.1
          %v1138 = vmul.f32 %v1106, 0.1
          %v1139 = vmul.f32 %v1107, 0.1
          %v1140 = vadd.f32 %v1044, %v1108
          %v1141 = vadd.f32 %v1045, %v1109
          %v1142 = vadd.f32 %v1046, %v1110
          %v1143 = vadd.f32 %v1047, %v1111
          %v1144 = vadd.f32 %v1048, %v1112
          %v1145 = vadd.f32 %v1049, %v1113
          %v1146 = vadd.f32 %v1050, %v1114
          %v1147 = vadd.f32 %v1051, %v1115
          %v1148 = vadd.f32 %v1052, %v1116
          %v1149 = vadd.f32 %v1053, %v1117
          %v1150 = vadd.f32 %v1054, %v1118
          %v1151 = vadd.f32 %v1055, %v1119
          %v1152 = vadd.f32 %v1056, %v1120
          %v1153 = vadd.f32 %v1057, %v1121
          %v1154 = vadd.f32 %v1058, %v1122
          %v1155 = vadd.f32 %v1059, %v1123
          %v1156 = vadd.f32 %v1060, %v1124
          %v1157 = vadd.f32 %v1061, %v1125
          %v1158 = vadd.f32 %v1062, %v1126
          %v1159 = vadd.f32 %v1063, %v1127
          %v1160 = vadd.f32 %v1064, %v1128
          %v1161 = vadd.f32 %v1065, %v1129
          %v1162 = vadd.f32 %v1066, %v1130
          %v1163 = vadd.f32 %v1067, %v1131
          %v1164 = vadd.f32 %v1068, %v1132
          %v1165 = vadd.f32 %v1069, %v1133
          %v1166 = vadd.f32 %v1070, %v1134
          %v1167 = vadd.f32 %v1071, %v1135
          %v1168 = vadd.f32 %v1072, %v1136
          %v1169 = vadd.f32 %v1073, %v1137
          %v1170 = vadd.f32 %v1074, %v1138
          %v1171 = vadd.f32 %v1075, %v1139
          %v1172 = vpack.c.bf16 %v1141, %v1140
          %v1173 = vpack.c.bf16 %v1143, %v1142
          %v1174 = vpack.c.bf16 %v1145, %v1144
          %v1175 = vpack.c.bf16 %v1147, %v1146
          %v1176 = vpack.c.bf16 %v1149, %v1148
          %v1177 = vpack.c.bf16 %v1151, %v1150
          %v1178 = vpack.c.bf16 %v1153, %v1152
          %v1179 = vpack.c.bf16 %v1155, %v1154
          %v1180 = vpack.c.bf16 %v1157, %v1156
          %v1181 = vpack.c.bf16 %v1159, %v1158
          %v1182 = vpack.c.bf16 %v1161, %v1160
          %v1183 = vpack.c.bf16 %v1163, %v1162
          %v1184 = vpack.c.bf16 %v1165, %v1164
          %v1185 = vpack.c.bf16 %v1167, %v1166
          %v1186 = vpack.c.bf16 %v1169, %v1168
          %v1187 = vpack.c.bf16 %v1171, %v1170
          %v1204 = vunpack.c.l.b16 %v1172
          %v1205 = vunpack.c.h.b16 %v1172
          %v1206 = vunpack.c.l.b16 %v1173
          %v1207 = vunpack.c.h.b16 %v1173
          %v1208 = vunpack.c.l.b16 %v1174
          %v1209 = vunpack.c.h.b16 %v1174
          %v1210 = vunpack.c.l.b16 %v1175
          %v1211 = vunpack.c.h.b16 %v1175
          %v1212 = vunpack.c.l.b16 %v1176
          %v1213 = vunpack.c.h.b16 %v1176
          %v1214 = vunpack.c.l.b16 %v1177
          %v1215 = vunpack.c.h.b16 %v1177
          %v1216 = vunpack.c.l.b16 %v1178
          %v1217 = vunpack.c.h.b16 %v1178
          %v1218 = vunpack.c.l.b16 %v1179
          %v1219 = vunpack.c.h.b16 %v1179
          %v1220 = vunpack.c.l.b16 %v1180
          %v1221 = vunpack.c.h.b16 %v1180
          %v1222 = vunpack.c.l.b16 %v1181
          %v1223 = vunpack.c.h.b16 %v1181
          %v1224 = vunpack.c.l.b16 %v1182
          %v1225 = vunpack.c.h.b16 %v1182
          %v1226 = vunpack.c.l.b16 %v1183
          %v1227 = vunpack.c.h.b16 %v1183
          %v1228 = vunpack.c.l.b16 %v1184
          %v1229 = vunpack.c.h.b16 %v1184
          %v1230 = vunpack.c.l.b16 %v1185
          %v1231 = vunpack.c.h.b16 %v1185
          %v1232 = vunpack.c.l.b16 %v1186
          %v1233 = vunpack.c.h.b16 %v1186
          %v1234 = vunpack.c.l.b16 %v1187
          %v1235 = vunpack.c.h.b16 %v1187
          %v1236 = vpack.c.b16 %v1204, %v1204
          %v1237 = vpack.c.b16 %v1205, %v1205
          %v1238 = vpack.c.b16 %v1206, %v1206
          %v1239 = vpack.c.b16 %v1207, %v1207
          %v1240 = vpack.c.b16 %v1208, %v1208
          %v1241 = vpack.c.b16 %v1209, %v1209
          %v1242 = vpack.c.b16 %v1210, %v1210
          %v1243 = vpack.c.b16 %v1211, %v1211
          %v1244 = vpack.c.b16 %v1212, %v1212
          %v1245 = vpack.c.b16 %v1213, %v1213
          %v1246 = vpack.c.b16 %v1214, %v1214
          %v1247 = vpack.c.b16 %v1215, %v1215
          %v1248 = vpack.c.b16 %v1216, %v1216
          %v1249 = vpack.c.b16 %v1217, %v1217
          %v1250 = vpack.c.b16 %v1218, %v1218
          %v1251 = vpack.c.b16 %v1219, %v1219
          %v1252 = vpack.c.b16 %v1220, %v1220
          %v1253 = vpack.c.b16 %v1221, %v1221
          %v1254 = vpack.c.b16 %v1222, %v1222
          %v1255 = vpack.c.b16 %v1223, %v1223
          %v1256 = vpack.c.b16 %v1224, %v1224
          %v1257 = vpack.c.b16 %v1225, %v1225
          %v1258 = vpack.c.b16 %v1226, %v1226
          %v1259 = vpack.c.b16 %v1227, %v1227
          %v1260 = vpack.c.b16 %v1228, %v1228
          %v1261 = vpack.c.b16 %v1229, %v1229
          %v1262 = vpack.c.b16 %v1230, %v1230
          %v1263 = vpack.c.b16 %v1231, %v1231
          %v1264 = vpack.c.b16 %v1232, %v1232
          %v1265 = vpack.c.b16 %v1233, %v1233
          %v1266 = vpack.c.b16 %v1234, %v1234
          %v1267 = vpack.c.b16 %v1235, %v1235
          %1300 = vst [vmem:[%s392] sm:$0xf] %v1236
          %1301 = vst [vmem:[%s392 + $0x4] sm:$0xf] %v1237
          %1302 = vst [vmem:[%s392 + $0x8] sm:$0xf] %v1238
          %1303 = vst [vmem:[%s392 + $0xc] sm:$0xf] %v1239
          %1304 = vst [vmem:[%s392 + $0x10] sm:$0xf] %v1240
          %1305 = vst [vmem:[%s392 + $0x14] sm:$0xf] %v1241
          %1306 = vst [vmem:[%s392 + $0x18] sm:$0xf] %v1242
          %1307 = vst [vmem:[%s392 + $0x1c] sm:$0xf] %v1243
          %1308 = vst [vmem:[%s392 + $0x20] sm:$0xf] %v1244
          %1309 = vst [vmem:[%s392 + $0x24] sm:$0xf] %v1245
          %1310 = vst [vmem:[%s392 + $0x28] sm:$0xf] %v1246
          %1311 = vst [vmem:[%s392 + $0x2c] sm:$0xf] %v1247
          %1312 = vst [vmem:[%s392 + $0x30] sm:$0xf] %v1248
          %1313 = vst [vmem:[%s392 + $0x34] sm:$0xf] %v1249
          %1314 = vst [vmem:[%s392 + $0x38] sm:$0xf] %v1250
          %1315 = vst [vmem:[%s392 + $0x3c] sm:$0xf] %v1251
          %1316 = vst [vmem:[%s392 + $0x40] sm:$0xf] %v1252
          %1317 = vst [vmem:[%s392 + $0x44] sm:$0xf] %v1253
          %1318 = vst [vmem:[%s392 + $0x48] sm:$0xf] %v1254
          %1319 = vst [vmem:[%s392 + $0x4c] sm:$0xf] %v1255
          %1320 = vst [vmem:[%s392 + $0x50] sm:$0xf] %v1256
          %1321 = vst [vmem:[%s392 + $0x54] sm:$0xf] %v1257
          %1322 = vst [vmem:[%s392 + $0x58] sm:$0xf] %v1258
          %1323 = vst [vmem:[%s392 + $0x5c] sm:$0xf] %v1259
          %1324 = vst [vmem:[%s392 + $0x60] sm:$0xf] %v1260
          %1325 = vst [vmem:[%s392 + $0x64] sm:$0xf] %v1261
          %1326 = vst [vmem:[%s392 + $0x68] sm:$0xf] %v1262
          %1327 = vst [vmem:[%s392 + $0x6c] sm:$0xf] %v1263
          %1328 = vst [vmem:[%s392 + $0x70] sm:$0xf] %v1264
          %1329 = vst [vmem:[%s392 + $0x74] sm:$0xf] %v1265
          %1330 = vst [vmem:[%s392 + $0x78] sm:$0xf] %v1266
          %1331 = vst [vmem:[%s392 + $0x7c] sm:$0xf] %v1267
        $region78: #{appnp_forward.5} parent=65 // pred_fallthru
          _
        %s1332 = smul.u32 32, %s18
        %p1333 = scmp.lt.s32.totalorder %s1332, 63
        %s1334 = scalar_select %p1333, %s1332, 63
        %s1335 = smul.addr %s1334, 4
        %s1336 = scalar_lea.vmem %s3, %s1335
        // Predicated region
        $region79: #{appnp_forward.5} parent=65 // pred_check
          %p1337 = pneg %p124
        $region80: #{appnp_forward.5} parent=65 // pred_check_branch
          %1339 = sbr.rel (%p1337) target = $region82
        $region81: #{appnp_forward.5} parent=65 // pred_region
          %s1340 = smul.u32 32, %s18
        $region82: #{appnp_forward.5} parent=65 // pred_fallthru
          _
      $region66: #{appnp_forward.5} parent=5 // pred_fallthru
        _
      %p1341 = scmp.le.s32.totalorder 2, %s9
      // Predicated region
      $region83: #{appnp_forward.5} parent=5 // pred_check
        %p1342 = pneg %p1341
      $region84: #{appnp_forward.5} parent=5 // pred_check_branch
        %1344 = sbr.rel (%p1342) target = $region86
      $region85: #{appnp_forward.5} parent=5 // pred_region
        %s1345 = ssub.s32 %s9, 2
        // Predicated region
        $region87: #{appnp_forward.5} parent=85 // pred_check
          %p1346 = pneg %p130
        $region88: #{appnp_forward.5} parent=85 // pred_check_branch
          %1348 = sbr.rel (%p1346) target = $region90
        $region89: #{appnp_forward.5} parent=85 // pred_region
          %s1349 = smul.u32 32, %s20
          %p1350 = scmp.lt.s32.totalorder %s1349, 63
          %s1351 = scalar_select %p1350, %s1349, 63
          %s1352 = smul.addr %s1351, 4
          %s1353 = scalar_lea.vmem %s3, %s1352
        $region90: #{appnp_forward.5} parent=85 // pred_fallthru
          _
      $region86: #{appnp_forward.5} parent=5 // pred_fallthru
        _
    $region6: #{appnp_forward.5} parent=1 // loop_footer
      %s13 = sadd.s32 1, %s9
    $region7: #{appnp_forward.5} parent=1 // loop_footer_branch
      %8 = sbr.rel target = $region3
    $region8: #{appnp_forward.5} parent=1 // loop_exit
      _

// kernel: appnp_forward.7
$region0: #{appnp_forward.7}
  #allocation0 [shape = 'u32[]', space=smem, size = 0x4, offset = 0x4, fixed_abs, tag = 'smem constant byte address 0x4 - core index']
  #allocation1 [shape = 'u32[144,128]{1,0:T(1,128)}', space=vmem, size = 0x12000, scoped, tag = 'internal scratch']
  #allocation2 [shape = 'f32[256,128]{1,0:T(8,128)}', space=vmem, size = 0x20000, scoped, tag = 'scratch operand']
  %s0 = inlined_call_operand.vmem [shape: bf16[512,512], index: 0, kind: input, shape index: {}]
  %s1 = inlined_call_operand.vmem [shape: bf16[512,128], index: 1, kind: input, shape index: {}]
  %s2 = inlined_call_operand.vmem [shape: f32[512,128], index: 2, kind: input, shape index: {}]
  %s3 = inlined_call_operand.vmem [shape: f32[512,128], index: 3, kind: output, shape index: {}]
  %s4 = sld [smem:[#allocation0]]
  $region91: #{appnp_forward.7} parent=0
    _
  %s6 = ssub.s32 1, %s4
  %s7 = scalar_select 0, %s6, %s4
  $region1: #{appnp_forward.7} parent=0
    #allocation3 [shape = 'u8[262144]{0}', space=vmem, size = 0x40000, scoped, tag = 'input window, operand 0']
    loop: start=0, step=1, limit=6
    $region2: #{appnp_forward.7} parent=1 // loop_pre_header
      _
    $region3: #{appnp_forward.7} parent=1 // loop_header
      %s9 = sphi 0, %s13
      %p10 = scmp.ge.s32.totalorder %s9, 6
      %s16 = sphi 0, %s28
      %s17 = sphi 0, %s24
      %s18 = sphi 0, %s16
      %s19 = sphi 0, %s17
      %s20 = sphi 0, %s18
      %s21 = sphi 0, %s19
      %s33 = sphi 0, %s35
      %s36 = sphi 0, %s33
      %s37 = sphi 0, %s36
      %s53 = sphi 0, %s37
      %s59 = sphi 0, %s61
      %s62 = sphi 0, %s59
      %s63 = sphi 0, %s62
      %s79 = sphi 0, %s63
      %s85 = sphi 0, %s87
      %s88 = sphi 0, %s85
      %s89 = sphi 0, %s88
      %s105 = sphi 0, %s89
      %s111 = sphi 0, %s113
      %s114 = sphi 0, %s111
      %s115 = sphi 0, %s114
      %s131 = sphi 0, %s115
    $region4: #{appnp_forward.7} parent=1 // loop_header_branch
      %12 = sbr.rel (%p10) target = $region8
    $region5: #{appnp_forward.7} parent=1 // loop_body
      %s14 = ssub.s32 %s9, 1
      %s15 = ssub.s32 %s9, 2
      %s22 = sadd.s32 1, %s17
      %p23 = scmp.ge.s32.totalorder %s22, 2
      %s24 = scalar_select %p23, 0, %s22
      %s25 = sadd.s32 1, %s16
      %s26 = scalar_select %p23, %s25, %s16
      %p27 = scmp.ge.s32.totalorder %s26, 2
      %s28 = scalar_select %p27, 0, %s26
      %s29 = ssub.s32 %s16, %s28
      %s30 = ssub.s32 %s17, %s24
      %s31 = sor.u32 %s29, %s30
      %p32 = scmp.eq.s32.totalorder %s31, 0
      %s34 = sadd.s32 %s33, 1
      %s35 = scalar_select %p32, %s33, %s34
      %p38 = pneg %p32
      %p39 = scmp.eq.s32.totalorder %s9, 3
      %p40 = por %p38, %p39
      %p41 = scmp.ne.s32.totalorder %s33, %s36
      %p42 = scmp.eq.s32.totalorder %s9, 0
      %p43 = por %p41, %p42
      %p44 = scmp.ne.s32.totalorder %s33, %s36
      %p45 = scmp.eq.s32.totalorder %s14, 3
      %p46 = por %p44, %p45
      %p47 = scmp.ne.s32.totalorder %s36, %s37
      %p48 = scmp.eq.s32.totalorder %s14, 0
      %p49 = por %p47, %p48
      %p50 = scmp.ne.s32.totalorder %s36, %s37
      %p51 = scmp.eq.s32.totalorder %s15, 3
      %p52 = por %p50, %p51
      %p54 = scmp.ne.s32.totalorder %s37, %s53
      %p55 = scmp.eq.s32.totalorder %s15, 0
      %p56 = por %p54, %p55
      %s57 = ssub.s32 %s17, %s24
      %p58 = scmp.eq.s32.totalorder %s57, 0
      %s60 = sadd.s32 %s59, 1
      %s61 = scalar_select %p58, %s59, %s60
      %p64 = pneg %p58
      %p65 = scmp.eq.s32.totalorder %s9, 3
      %p66 = por %p64, %p65
      %p67 = scmp.ne.s32.totalorder %s59, %s62
      %p68 = scmp.eq.s32.totalorder %s9, 0
      %p69 = por %p67, %p68
      %p70 = scmp.ne.s32.totalorder %s59, %s62
      %p71 = scmp.eq.s32.totalorder %s14, 3
      %p72 = por %p70, %p71
      %p73 = scmp.ne.s32.totalorder %s62, %s63
      %p74 = scmp.eq.s32.totalorder %s14, 0
      %p75 = por %p73, %p74
      %p76 = scmp.ne.s32.totalorder %s62, %s63
      %p77 = scmp.eq.s32.totalorder %s15, 3
      %p78 = por %p76, %p77
      %p80 = scmp.ne.s32.totalorder %s63, %s79
      %p81 = scmp.eq.s32.totalorder %s15, 0
      %p82 = por %p80, %p81
      %s83 = ssub.s32 %s16, %s28
      %p84 = scmp.eq.s32.totalorder %s83, 0
      %s86 = sadd.s32 %s85, 1
      %s87 = scalar_select %p84, %s85, %s86
      %p90 = pneg %p84
      %p91 = scmp.eq.s32.totalorder %s9, 3
      %p92 = por %p90, %p91
      %p93 = scmp.ne.s32.totalorder %s85, %s88
      %p94 = scmp.eq.s32.totalorder %s9, 0
      %p95 = por %p93, %p94
      %p96 = scmp.ne.s32.totalorder %s85, %s88
      %p97 = scmp.eq.s32.totalorder %s14, 3
      %p98 = por %p96, %p97
      %p99 = scmp.ne.s32.totalorder %s88, %s89
      %p100 = scmp.eq.s32.totalorder %s14, 0
      %p101 = por %p99, %p100
      %p102 = scmp.ne.s32.totalorder %s88, %s89
      %p103 = scmp.eq.s32.totalorder %s15, 3
      %p104 = por %p102, %p103
      %p106 = scmp.ne.s32.totalorder %s89, %s105
      %p107 = scmp.eq.s32.totalorder %s15, 0
      %p108 = por %p106, %p107
      %s109 = ssub.s32 %s16, %s28
      %p110 = scmp.eq.s32.totalorder %s109, 0
      %s112 = sadd.s32 %s111, 1
      %s113 = scalar_select %p110, %s111, %s112
      %p116 = pneg %p110
      %p117 = scmp.eq.s32.totalorder %s9, 3
      %p118 = por %p116, %p117
      %p119 = scmp.ne.s32.totalorder %s111, %s114
      %p120 = scmp.eq.s32.totalorder %s9, 0
      %p121 = por %p119, %p120
      %p122 = scmp.ne.s32.totalorder %s111, %s114
      %p123 = scmp.eq.s32.totalorder %s14, 3
      %p124 = por %p122, %p123
      %p125 = scmp.ne.s32.totalorder %s114, %s115
      %p126 = scmp.eq.s32.totalorder %s14, 0
      %p127 = por %p125, %p126
      %p128 = scmp.ne.s32.totalorder %s114, %s115
      %p129 = scmp.eq.s32.totalorder %s15, 3
      %p130 = por %p128, %p129
      %p132 = scmp.ne.s32.totalorder %s115, %s131
      %p133 = scmp.eq.s32.totalorder %s15, 0
      %p134 = por %p132, %p133
      %p135 = scmp.le.s32.totalorder 1, %s9
      %p136 = scmp.lt.s32.totalorder %s9, 5
      %p137 = pnand %p135, %p136
      %p138 = pneg %p137
      // Predicated region
      $region9: #{appnp_forward.7} parent=5 // pred_check
        _
      $region10: #{appnp_forward.7} parent=5 // pred_check_branch
        %140 = sbr.rel (%p137) target = $region12
      $region11: #{appnp_forward.7} parent=5 // pred_region
        %s141 = ssub.s32 %s9, 1
      $region12: #{appnp_forward.7} parent=5 // pred_fallthru
        _
      %p142 = scmp.lt.s32.totalorder %s9, 4
      // Predicated region
      $region13: #{appnp_forward.7} parent=5 // pred_check
        %p143 = pneg %p142
      $region14: #{appnp_forward.7} parent=5 // pred_check_branch
        %145 = sbr.rel (%p143) target = $region16
      $region15: #{appnp_forward.7} parent=5 // pred_region
        // Predicated region
        $region17: #{appnp_forward.7} parent=15 // pred_check
          %p146 = pneg %p43
        $region18: #{appnp_forward.7} parent=15 // pred_check_branch
          %148 = sbr.rel (%p146) target = $region20
        $region19: #{appnp_forward.7} parent=15 // pred_region
          %s149 = sand.u32 %s33, 1
          %s150 = sand.u32 %s33, 1
          %s151 = smul.addr %s150, 256
          %s152 = scalar_lea.vmem [#allocation3], %s151
          %s153 = smul.u32 32, %s16
          %s154 = smul.u32 2, %s17
          %s155 = smul.addr %s153, 4
          %s156 = sadd.s32 %s154, %s155
          %s157 = smul.addr %s156, 4
          %s158 = scalar_lea.vmem %s0, %s157
          // Predicated region
          $region21: #{appnp_forward.7} parent=19 // pred_check
            _
          $region22: #{appnp_forward.7} parent=19 // pred_check_branch
            %160 = sbr.rel (0) target = $region24
          $region23: #{appnp_forward.7} parent=19 // pred_region
            // Predicated region
            $region25: #{appnp_forward.7} parent=23 // pred_check
              _
            $region26: #{appnp_forward.7} parent=23 // pred_check_branch
              %162 = sbr.rel (0) target = $region28
            $region27: #{appnp_forward.7} parent=23 // pred_region
              // Predicated region
              $region40: #{appnp_forward.7} parent=27 // pred_check
                _
              $region41: #{appnp_forward.7} parent=27 // pred_check_branch
                %239 = sbr.rel (0) target = $region43
              $region42: #{appnp_forward.7} parent=27 // pred_region
                loop: start=0, step=1, limit=1
                $region44: #{appnp_forward.7} parent=42 // loop_pre_header
                  _
                $region45: #{appnp_forward.7} parent=42 // loop_header
                  %s241 = sphi 0, %s245
                  %p242 = scmp.ge.s32.totalorder %s241, 1
                  %s246 = sphi %s158, %s158
                  %s247 = sphi %s152, %s152
                $region46: #{appnp_forward.7} parent=42 // loop_header_branch
                  %244 = sbr.rel (%p242) target = $region50
                $region47: #{appnp_forward.7} parent=42 // loop_body
                  %v248 = vld [vmem:[%s246] sm:$0xff]
                  %249 = vst [vmem:[%s247] sm:$0xff] %v248
                  %v250 = vld [vmem:[%s246 + $0x10] sm:$0xff]
                  %251 = vst [vmem:[%s247 + $0x8] sm:$0xff] %v250
                  %v252 = vld [vmem:[%s246 + $0x20] sm:$0xff]
                  %253 = vst [vmem:[%s247 + $0x10] sm:$0xff] %v252
                  %v254 = vld [vmem:[%s246 + $0x30] sm:$0xff]
                  %255 = vst [vmem:[%s247 + $0x18] sm:$0xff] %v254
                  %v256 = vld [vmem:[%s246 + $0x40] sm:$0xff]
                  %257 = vst [vmem:[%s247 + $0x20] sm:$0xff] %v256
                  %v258 = vld [vmem:[%s246 + $0x50] sm:$0xff]
                  %259 = vst [vmem:[%s247 + $0x28] sm:$0xff] %v258
                  %v260 = vld [vmem:[%s246 + $0x60] sm:$0xff]
                  %261 = vst [vmem:[%s247 + $0x30] sm:$0xff] %v260
                  %v262 = vld [vmem:[%s246 + $0x70] sm:$0xff]
                  %263 = vst [vmem:[%s247 + $0x38] sm:$0xff] %v262
                  %v264 = vld [vmem:[%s246 + $0x80] sm:$0xff]
                  %265 = vst [vmem:[%s247 + $0x40] sm:$0xff] %v264
                  %v266 = vld [vmem:[%s246 + $0x90] sm:$0xff]
                  %267 = vst [vmem:[%s247 + $0x48] sm:$0xff] %v266
                  %v268 = vld [vmem:[%s246 + $0xa0] sm:$0xff]
                  %269 = vst [vmem:[%s247 + $0x50] sm:$0xff] %v268
                  %v270 = vld [vmem:[%s246 + $0xb0] sm:$0xff]
                  %271 = vst [vmem:[%s247 + $0x58] sm:$0xff] %v270
                  %v272 = vld [vmem:[%s246 + $0xc0] sm:$0xff]
                  %273 = vst [vmem:[%s247 + $0x60] sm:$0xff] %v272
                  %v274 = vld [vmem:[%s246 + $0xd0] sm:$0xff]
                  %275 = vst [vmem:[%s247 + $0x68] sm:$0xff] %v274
                  %v276 = vld [vmem:[%s246 + $0xe0] sm:$0xff]
                  %277 = vst [vmem:[%s247 + $0x70] sm:$0xff] %v276
                  %v278 = vld [vmem:[%s246 + $0xf0] sm:$0xff]
                  %279 = vst [vmem:[%s247 + $0x78] sm:$0xff] %v278
                  %v280 = vld [vmem:[%s246 + $0x100] sm:$0xff]
                  %281 = vst [vmem:[%s247 + $0x80] sm:$0xff] %v280
                  %v282 = vld [vmem:[%s246 + $0x110] sm:$0xff]
                  %283 = vst [vmem:[%s247 + $0x88] sm:$0xff] %v282
                  %v284 = vld [vmem:[%s246 + $0x120] sm:$0xff]
                  %285 = vst [vmem:[%s247 + $0x90] sm:$0xff] %v284
                  %v286 = vld [vmem:[%s246 + $0x130] sm:$0xff]
                  %287 = vst [vmem:[%s247 + $0x98] sm:$0xff] %v286
                  %v288 = vld [vmem:[%s246 + $0x140] sm:$0xff]
                  %289 = vst [vmem:[%s247 + $0xa0] sm:$0xff] %v288
                  %v290 = vld [vmem:[%s246 + $0x150] sm:$0xff]
                  %291 = vst [vmem:[%s247 + $0xa8] sm:$0xff] %v290
                  %v292 = vld [vmem:[%s246 + $0x160] sm:$0xff]
                  %293 = vst [vmem:[%s247 + $0xb0] sm:$0xff] %v292
                  %v294 = vld [vmem:[%s246 + $0x170] sm:$0xff]
                  %295 = vst [vmem:[%s247 + $0xb8] sm:$0xff] %v294
                  %v296 = vld [vmem:[%s246 + $0x180] sm:$0xff]
                  %297 = vst [vmem:[%s247 + $0xc0] sm:$0xff] %v296
                  %v298 = vld [vmem:[%s246 + $0x190] sm:$0xff]
                  %299 = vst [vmem:[%s247 + $0xc8] sm:$0xff] %v298
                  %v300 = vld [vmem:[%s246 + $0x1a0] sm:$0xff]
                  %301 = vst [vmem:[%s247 + $0xd0] sm:$0xff] %v300
                  %v302 = vld [vmem:[%s246 + $0x1b0] sm:$0xff]
                  %303 = vst [vmem:[%s247 + $0xd8] sm:$0xff] %v302
                  %v304 = vld [vmem:[%s246 + $0x1c0] sm:$0xff]
                  %305 = vst [vmem:[%s247 + $0xe0] sm:$0xff] %v304
                  %v306 = vld [vmem:[%s246 + $0x1d0] sm:$0xff]
                  %307 = vst [vmem:[%s247 + $0xe8] sm:$0xff] %v306
                  %v308 = vld [vmem:[%s246 + $0x1e0] sm:$0xff]
                  %309 = vst [vmem:[%s247 + $0xf0] sm:$0xff] %v308
                  %v310 = vld [vmem:[%s246 + $0x1f0] sm:$0xff]
                  %311 = vst [vmem:[%s247 + $0xf8] sm:$0xff] %v310
                $region48: #{appnp_forward.7} parent=42 // loop_footer
                  %s245 = sadd.s32 1, %s241
                $region49: #{appnp_forward.7} parent=42 // loop_footer_branch
                  %240 = sbr.rel target = $region45
                $region50: #{appnp_forward.7} parent=42 // loop_exit
                  _
              $region43: #{appnp_forward.7} parent=27 // pred_fallthru
                _
              // Predicated region
              $region51: #{appnp_forward.7} parent=27 // pred_check
                _
              $region52: #{appnp_forward.7} parent=27 // pred_check_branch
                %313 = sbr.rel target = $region54
              $region53: #{appnp_forward.7} parent=27 // pred_region
                _
              $region54: #{appnp_forward.7} parent=27 // pred_fallthru
                _
            $region28: #{appnp_forward.7} parent=23 // pred_fallthru
              _
            // Predicated region
            $region29: #{appnp_forward.7} parent=23 // pred_check
              _
            $region30: #{appnp_forward.7} parent=23 // pred_check_branch
              %164 = sbr.rel target = $region32
            $region31: #{appnp_forward.7} parent=23 // pred_region
              loop: start=0, step=1, limit=1
              $region33: #{appnp_forward.7} parent=31 // loop_pre_header
                _
              $region34: #{appnp_forward.7} parent=31 // loop_header
                %s167 = sphi 0, %s171
                %p168 = scmp.ge.s32.totalorder %s167, 1
                %s172 = sphi %s158, %s158
                %s173 = sphi %s152, %s152
              $region35: #{appnp_forward.7} parent=31 // loop_header_branch
                %170 = sbr.rel (%p168) target = $region39
              $region36: #{appnp_forward.7} parent=31 // loop_body
                %v174 = vld [vmem:[%s172] sm:$0xff]
                %175 = vst [vmem:[%s173] sm:$0xff] %v174
                %v176 = vld [vmem:[%s172 + $0x10] sm:$0xff]
                %177 = vst [vmem:[%s173 + $0x8] sm:$0xff] %v176
                %v178 = vld [vmem:[%s172 + $0x20] sm:$0xff]
                %179 = vst [vmem:[%s173 + $0x10] sm:$0xff] %v178
                %v180 = vld [vmem:[%s172 + $0x30] sm:$0xff]
                %181 = vst [vmem:[%s173 + $0x18] sm:$0xff] %v180
                %v182 = vld [vmem:[%s172 + $0x40] sm:$0xff]
                %183 = vst [vmem:[%s173 + $0x20] sm:$0xff] %v182
                %v184 = vld [vmem:[%s172 + $0x50] sm:$0xff]
                %185 = vst [vmem:[%s173 + $0x28] sm:$0xff] %v184
                %v186 = vld [vmem:[%s172 + $0x60] sm:$0xff]
                %187 = vst [vmem:[%s173 + $0x30] sm:$0xff] %v186
                %v188 = vld [vmem:[%s172 + $0x70] sm:$0xff]
                %189 = vst [vmem:[%s173 + $0x38] sm:$0xff] %v188
                %v190 = vld [vmem:[%s172 + $0x80] sm:$0xff]
                %191 = vst [vmem:[%s173 + $0x40] sm:$0xff] %v190
                %v192 = vld [vmem:[%s172 + $0x90] sm:$0xff]
                %193 = vst [vmem:[%s173 + $0x48] sm:$0xff] %v192
                %v194 = vld [vmem:[%s172 + $0xa0] sm:$0xff]
                %195 = vst [vmem:[%s173 + $0x50] sm:$0xff] %v194
                %v196 = vld [vmem:[%s172 + $0xb0] sm:$0xff]
                %197 = vst [vmem:[%s173 + $0x58] sm:$0xff] %v196
                %v198 = vld [vmem:[%s172 + $0xc0] sm:$0xff]
                %199 = vst [vmem:[%s173 + $0x60] sm:$0xff] %v198
                %v200 = vld [vmem:[%s172 + $0xd0] sm:$0xff]
                %201 = vst [vmem:[%s173 + $0x68] sm:$0xff] %v200
                %v202 = vld [vmem:[%s172 + $0xe0] sm:$0xff]
                %203 = vst [vmem:[%s173 + $0x70] sm:$0xff] %v202
                %v204 = vld [vmem:[%s172 + $0xf0] sm:$0xff]
                %205 = vst [vmem:[%s173 + $0x78] sm:$0xff] %v204
                %v206 = vld [vmem:[%s172 + $0x100] sm:$0xff]
                %207 = vst [vmem:[%s173 + $0x80] sm:$0xff] %v206
                %v208 = vld [vmem:[%s172 + $0x110] sm:$0xff]
                %209 = vst [vmem:[%s173 + $0x88] sm:$0xff] %v208
                %v210 = vld [vmem:[%s172 + $0x120] sm:$0xff]
                %211 = vst [vmem:[%s173 + $0x90] sm:$0xff] %v210
                %v212 = vld [vmem:[%s172 + $0x130] sm:$0xff]
                %213 = vst [vmem:[%s173 + $0x98] sm:$0xff] %v212
                %v214 = vld [vmem:[%s172 + $0x140] sm:$0xff]
                %215 = vst [vmem:[%s173 + $0xa0] sm:$0xff] %v214
                %v216 = vld [vmem:[%s172 + $0x150] sm:$0xff]
                %217 = vst [vmem:[%s173 + $0xa8] sm:$0xff] %v216
                %v218 = vld [vmem:[%s172 + $0x160] sm:$0xff]
                %219 = vst [vmem:[%s173 + $0xb0] sm:$0xff] %v218
                %v220 = vld [vmem:[%s172 + $0x170] sm:$0xff]
                %221 = vst [vmem:[%s173 + $0xb8] sm:$0xff] %v220
                %v222 = vld [vmem:[%s172 + $0x180] sm:$0xff]
                %223 = vst [vmem:[%s173 + $0xc0] sm:$0xff] %v222
                %v224 = vld [vmem:[%s172 + $0x190] sm:$0xff]
                %225 = vst [vmem:[%s173 + $0xc8] sm:$0xff] %v224
                %v226 = vld [vmem:[%s172 + $0x1a0] sm:$0xff]
                %227 = vst [vmem:[%s173 + $0xd0] sm:$0xff] %v226
                %v228 = vld [vmem:[%s172 + $0x1b0] sm:$0xff]
                %229 = vst [vmem:[%s173 + $0xd8] sm:$0xff] %v228
                %v230 = vld [vmem:[%s172 + $0x1c0] sm:$0xff]
                %231 = vst [vmem:[%s173 + $0xe0] sm:$0xff] %v230
                %v232 = vld [vmem:[%s172 + $0x1d0] sm:$0xff]
                %233 = vst [vmem:[%s173 + $0xe8] sm:$0xff] %v232
                %v234 = vld [vmem:[%s172 + $0x1e0] sm:$0xff]
                %235 = vst [vmem:[%s173 + $0xf0] sm:$0xff] %v234
                %v236 = vld [vmem:[%s172 + $0x1f0] sm:$0xff]
                %237 = vst [vmem:[%s173 + $0xf8] sm:$0xff] %v236
              $region37: #{appnp_forward.7} parent=31 // loop_footer
                %s171 = sadd.s32 1, %s167
              $region38: #{appnp_forward.7} parent=31 // loop_footer_branch
                %166 = sbr.rel target = $region34
              $region39: #{appnp_forward.7} parent=31 // loop_exit
                _
            $region32: #{appnp_forward.7} parent=23 // pred_fallthru
              _
          $region24: #{appnp_forward.7} parent=19 // pred_fallthru
            _
          %314 = vnop
        $region20: #{appnp_forward.7} parent=15 // pred_fallthru
          _
        // Predicated region
        $region55: #{appnp_forward.7} parent=15 // pred_check
          %p315 = pneg %p69
        $region56: #{appnp_forward.7} parent=15 // pred_check_branch
          %317 = sbr.rel (%p315) target = $region58
        $region57: #{appnp_forward.7} parent=15 // pred_region
          %s318 = smul.u32 32, %s17
          %p319 = scmp.lt.s32.totalorder %s318, 63
          %s320 = scalar_select %p319, %s318, 63
          %s321 = smul.addr %s320, 4
          %s322 = scalar_lea.vmem %s1, %s321
          %s323 = smul.u32 32, %s17
        $region58: #{appnp_forward.7} parent=15 // pred_fallthru
          _
        // Predicated region
        $region59: #{appnp_forward.7} parent=15 // pred_check
          %p324 = pneg %p95
        $region60: #{appnp_forward.7} parent=15 // pred_check_branch
          %326 = sbr.rel (%p324) target = $region62
        $region61: #{appnp_forward.7} parent=15 // pred_region
          %s327 = smul.u32 32, %s16
          %p328 = scmp.lt.s32.totalorder %s327, 63
          %s329 = scalar_select %p328, %s327, 63
          %s330 = smul.addr %s329, 8
          %s331 = scalar_lea.vmem %s2, %s330
          %s332 = smul.u32 32, %s16
        $region62: #{appnp_forward.7} parent=15 // pred_fallthru
          _
      $region16: #{appnp_forward.7} parent=5 // pred_fallthru
        _
      %p333 = scmp.le.s32.totalorder 1, %s9
      %p334 = scmp.lt.s32.totalorder %s9, 5
      %p335 = pnand %p333, %p334
      %p336 = pneg %p335
      // Predicated region
      $region63: #{appnp_forward.7} parent=5 // pred_check
        _
      $region64: #{appnp_forward.7} parent=5 // pred_check_branch
        %338 = sbr.rel (%p335) target = $region66
      $region65: #{appnp_forward.7} parent=5 // pred_region
        %s339 = ssub.s32 %s9, 1
        %s340 = sand.u32 %s36, 1
        %s341 = sand.u32 %s36, 1
        %s342 = smul.addr %s341, 256
        %s343 = scalar_lea.vmem [#allocation3], %s342
        // Predicated region
        $region67: #{appnp_forward.7} parent=65 // pred_check
          %p344 = pneg %p49
        $region68: #{appnp_forward.7} parent=65 // pred_check_branch
          %346 = sbr.rel (%p344) target = $region70
        $region69: #{appnp_forward.7} parent=65 // pred_region
          _
        $region70: #{appnp_forward.7} parent=65 // pred_fallthru
          _
        %s347 = sand.u32 %s36, 1
        %s348 = sand.u32 %s36, 1
        %s349 = smul.addr %s348, 256
        %s350 = scalar_lea.vmem [#allocation3], %s349
        %p351 = pneg %p49
        %p352 = pneg %p46
        %s353 = smul.u32 32, %s19
        %p354 = scmp.lt.s32.totalorder %s353, 63
        %s355 = scalar_select %p354, %s353, 63
        %s356 = smul.addr %s355, 4
        %s357 = scalar_lea.vmem %s1, %s356
        %p358 = pneg %p75
        %p359 = pneg %p72
        %s360 = smul.u32 32, %s18
        %p361 = scmp.lt.s32.totalorder %s360, 63
        %s362 = scalar_select %p361, %s360, 63
        %s363 = smul.addr %s362, 8
        %s364 = scalar_lea.vmem %s2, %s363
        %p365 = pneg %p101
        %p366 = pneg %p98
        %p367 = pneg %p127
        %p368 = pneg %p124
        %s369 = smul.u32 32, %s18
        %p370 = scmp.lt.s32.totalorder %s369, 63
        %s371 = scalar_select %p370, %s369, 63
        %s372 = smul.addr %s371, 8
        %s373 = scalar_lea.vmem %s3, %s372
        %s374 = smul.u32 32, %s18
        %s375 = smul.u32 2, %s19
        %s376 = smul.u32 32, %s19
        %p377 = scmp.lt.s32.totalorder %s376, 63
        %s378 = scalar_select %p377, %s376, 63
        %s379 = smul.addr %s378, 4
        %s380 = scalar_lea.vmem %s1, %s379
        %s381 = smul.u32 32, %s19
        %s382 = smul.u32 32, %s18
        %p383 = scmp.lt.s32.totalorder %s382, 63
        %s384 = scalar_select %p383, %s382, 63
        %s385 = smul.addr %s384, 8
        %s386 = scalar_lea.vmem %s2, %s385
        %s387 = smul.u32 32, %s18
        %s388 = smul.u32 32, %s18
        %p389 = scmp.lt.s32.totalorder %s388, 63
        %s390 = scalar_select %p389, %s388, 63
        %s391 = smul.addr %s390, 8
        %s392 = scalar_lea.vmem %s3, %s391
        %s393 = smul.u32 32, %s18
        %p395 = scmp.eq.s32.totalorder %s19, 0
        // Predicated region
        $region71: #{appnp_forward.7} parent=65 // pred_check
          %p396 = pneg %p395
        $region72: #{appnp_forward.7} parent=65 // pred_check_branch
          %398 = sbr.rel (%p396) target = $region74
        $region73: #{appnp_forward.7} parent=65 // pred_region
          %399 = vst [vmem:[#allocation2] sm:$0xff] 0.0
          %400 = vst [vmem:[#allocation2 + $0x8] sm:$0xff] 0.0
          %401 = vst [vmem:[#allocation2 + $0x10] sm:$0xff] 0.0
          %402 = vst [vmem:[#allocation2 + $0x18] sm:$0xff] 0.0
          %403 = vst [vmem:[#allocation2 + $0x20] sm:$0xff] 0.0
          %404 = vst [vmem:[#allocation2 + $0x28] sm:$0xff] 0.0
          %405 = vst [vmem:[#allocation2 + $0x30] sm:$0xff] 0.0
          %406 = vst [vmem:[#allocation2 + $0x38] sm:$0xff] 0.0
          %407 = vst [vmem:[#allocation2 + $0x40] sm:$0xff] 0.0
          %408 = vst [vmem:[#allocation2 + $0x48] sm:$0xff] 0.0
          %409 = vst [vmem:[#allocation2 + $0x50] sm:$0xff] 0.0
          %410 = vst [vmem:[#allocation2 + $0x58] sm:$0xff] 0.0
          %411 = vst [vmem:[#allocation2 + $0x60] sm:$0xff] 0.0
          %412 = vst [vmem:[#allocation2 + $0x68] sm:$0xff] 0.0
          %413 = vst [vmem:[#allocation2 + $0x70] sm:$0xff] 0.0
          %414 = vst [vmem:[#allocation2 + $0x78] sm:$0xff] 0.0
          %415 = vst [vmem:[#allocation2 + $0x80] sm:$0xff] 0.0
          %416 = vst [vmem:[#allocation2 + $0x88] sm:$0xff] 0.0
          %417 = vst [vmem:[#allocation2 + $0x90] sm:$0xff] 0.0
          %418 = vst [vmem:[#allocation2 + $0x98] sm:$0xff] 0.0
          %419 = vst [vmem:[#allocation2 + $0xa0] sm:$0xff] 0.0
          %420 = vst [vmem:[#allocation2 + $0xa8] sm:$0xff] 0.0
          %421 = vst [vmem:[#allocation2 + $0xb0] sm:$0xff] 0.0
          %422 = vst [vmem:[#allocation2 + $0xb8] sm:$0xff] 0.0
          %423 = vst [vmem:[#allocation2 + $0xc0] sm:$0xff] 0.0
          %424 = vst [vmem:[#allocation2 + $0xc8] sm:$0xff] 0.0
          %425 = vst [vmem:[#allocation2 + $0xd0] sm:$0xff] 0.0
          %426 = vst [vmem:[#allocation2 + $0xd8] sm:$0xff] 0.0
          %427 = vst [vmem:[#allocation2 + $0xe0] sm:$0xff] 0.0
          %428 = vst [vmem:[#allocation2 + $0xe8] sm:$0xff] 0.0
          %429 = vst [vmem:[#allocation2 + $0xf0] sm:$0xff] 0.0
          %430 = vst [vmem:[#allocation2 + $0xf8] sm:$0xff] 0.0
        $region74: #{appnp_forward.7} parent=65 // pred_fallthru
          _
        %v431 = vld [vmem:[#allocation2] sm:$0xff]
        %v432 = vld [vmem:[#allocation2 + $0x8] sm:$0xff]
        %v433 = vld [vmem:[#allocation2 + $0x10] sm:$0xff]
        %v434 = vld [vmem:[#allocation2 + $0x18] sm:$0xff]
        %v435 = vld [vmem:[#allocation2 + $0x20] sm:$0xff]
        %v436 = vld [vmem:[#allocation2 + $0x28] sm:$0xff]
        %v437 = vld [vmem:[#allocation2 + $0x30] sm:$0xff]
        %v438 = vld [vmem:[#allocation2 + $0x38] sm:$0xff]
        %v439 = vld [vmem:[#allocation2 + $0x40] sm:$0xff]
        %v440 = vld [vmem:[#allocation2 + $0x48] sm:$0xff]
        %v441 = vld [vmem:[#allocation2 + $0x50] sm:$0xff]
        %v442 = vld [vmem:[#allocation2 + $0x58] sm:$0xff]
        %v443 = vld [vmem:[#allocation2 + $0x60] sm:$0xff]
        %v444 = vld [vmem:[#allocation2 + $0x68] sm:$0xff]
        %v445 = vld [vmem:[#allocation2 + $0x70] sm:$0xff]
        %v446 = vld [vmem:[#allocation2 + $0x78] sm:$0xff]
        %v447 = vld [vmem:[#allocation2 + $0x80] sm:$0xff]
        %v448 = vld [vmem:[#allocation2 + $0x88] sm:$0xff]
        %v449 = vld [vmem:[#allocation2 + $0x90] sm:$0xff]
        %v450 = vld [vmem:[#allocation2 + $0x98] sm:$0xff]
        %v451 = vld [vmem:[#allocation2 + $0xa0] sm:$0xff]
        %v452 = vld [vmem:[#allocation2 + $0xa8] sm:$0xff]
        %v453 = vld [vmem:[#allocation2 + $0xb0] sm:$0xff]
        %v454 = vld [vmem:[#allocation2 + $0xb8] sm:$0xff]
        %v455 = vld [vmem:[#allocation2 + $0xc0] sm:$0xff]
        %v456 = vld [vmem:[#allocation2 + $0xc8] sm:$0xff]
        %v457 = vld [vmem:[#allocation2 + $0xd0] sm:$0xff]
        %v458 = vld [vmem:[#allocation2 + $0xd8] sm:$0xff]
        %v459 = vld [vmem:[#allocation2 + $0xe0] sm:$0xff]
        %v460 = vld [vmem:[#allocation2 + $0xe8] sm:$0xff]
        %v461 = vld [vmem:[#allocation2 + $0xf0] sm:$0xff]
        %v462 = vld [vmem:[#allocation2 + $0xf8] sm:$0xff]
        %v463 = vld [vmem:[%s343] sm:$0xff]
        %v464 = vld [vmem:[%s343 + $0x8] sm:$0xff]
        %v465 = vld [vmem:[%s343 + $0x10] sm:$0xff]
        %v466 = vld [vmem:[%s343 + $0x18] sm:$0xff]
        %v467 = vld [vmem:[%s343 + $0x20] sm:$0xff]
        %v468 = vld [vmem:[%s343 + $0x28] sm:$0xff]
        %v469 = vld [vmem:[%s343 + $0x30] sm:$0xff]
        %v470 = vld [vmem:[%s343 + $0x38] sm:$0xff]
        %v471 = vld [vmem:[%s343 + $0x40] sm:$0xff]
        %v472 = vld [vmem:[%s343 + $0x48] sm:$0xff]
        %v473 = vld [vmem:[%s343 + $0x50] sm:$0xff]
        %v474 = vld [vmem:[%s343 + $0x58] sm:$0xff]
        %v475 = vld [vmem:[%s343 + $0x60] sm:$0xff]
        %v476 = vld [vmem:[%s343 + $0x68] sm:$0xff]
        %v477 = vld [vmem:[%s343 + $0x70] sm:$0xff]
        %v478 = vld [vmem:[%s343 + $0x78] sm:$0xff]
        %v479 = vld [vmem:[%s343 + $0x80] sm:$0xff]
        %v480 = vld [vmem:[%s343 + $0x88] sm:$0xff]
        %v481 = vld [vmem:[%s343 + $0x90] sm:$0xff]
        %v482 = vld [vmem:[%s343 + $0x98] sm:$0xff]
        %v483 = vld [vmem:[%s343 + $0xa0] sm:$0xff]
        %v484 = vld [vmem:[%s343 + $0xa8] sm:$0xff]
        %v485 = vld [vmem:[%s343 + $0xb0] sm:$0xff]
        %v486 = vld [vmem:[%s343 + $0xb8] sm:$0xff]
        %v487 = vld [vmem:[%s343 + $0xc0] sm:$0xff]
        %v488 = vld [vmem:[%s343 + $0xc8] sm:$0xff]
        %v489 = vld [vmem:[%s343 + $0xd0] sm:$0xff]
        %v490 = vld [vmem:[%s343 + $0xd8] sm:$0xff]
        %v491 = vld [vmem:[%s343 + $0xe0] sm:$0xff]
        %v492 = vld [vmem:[%s343 + $0xe8] sm:$0xff]
        %v493 = vld [vmem:[%s343 + $0xf0] sm:$0xff]
        %v494 = vld [vmem:[%s343 + $0xf8] sm:$0xff]
        %v495 = vld [vmem:[%s380] sm:$0xf]
        %v496 = vld [vmem:[%s380 + $0x4] sm:$0xf]
        %v497 = vld [vmem:[%s380 + $0x8] sm:$0xf]
        %v498 = vld [vmem:[%s380 + $0xc] sm:$0xf]
        %v499 = vld [vmem:[%s380 + $0x10] sm:$0xf]
        %v500 = vld [vmem:[%s380 + $0x14] sm:$0xf]
        %v501 = vld [vmem:[%s380 + $0x18] sm:$0xf]
        %v502 = vld [vmem:[%s380 + $0x1c] sm:$0xf]
        %v503 = vld [vmem:[%s380 + $0x20] sm:$0xf]
        %v504 = vld [vmem:[%s380 + $0x24] sm:$0xf]
        %v505 = vld [vmem:[%s380 + $0x28] sm:$0xf]
        %v506 = vld [vmem:[%s380 + $0x2c] sm:$0xf]
        %v507 = vld [vmem:[%s380 + $0x30] sm:$0xf]
        %v508 = vld [vmem:[%s380 + $0x34] sm:$0xf]
        %v509 = vld [vmem:[%s380 + $0x38] sm:$0xf]
        %v510 = vld [vmem:[%s380 + $0x3c] sm:$0xf]
        %v511 = vld [vmem:[%s380 + $0x40] sm:$0xf]
        %v512 = vld [vmem:[%s380 + $0x44] sm:$0xf]
        %v513 = vld [vmem:[%s380 + $0x48] sm:$0xf]
        %v514 = vld [vmem:[%s380 + $0x4c] sm:$0xf]
        %v515 = vld [vmem:[%s380 + $0x50] sm:$0xf]
        %v516 = vld [vmem:[%s380 + $0x54] sm:$0xf]
        %v517 = vld [vmem:[%s380 + $0x58] sm:$0xf]
        %v518 = vld [vmem:[%s380 + $0x5c] sm:$0xf]
        %v519 = vld [vmem:[%s380 + $0x60] sm:$0xf]
        %v520 = vld [vmem:[%s380 + $0x64] sm:$0xf]
        %v521 = vld [vmem:[%s380 + $0x68] sm:$0xf]
        %v522 = vld [vmem:[%s380 + $0x6c] sm:$0xf]
        %v523 = vld [vmem:[%s380 + $0x70] sm:$0xf]
        %v524 = vld [vmem:[%s380 + $0x74] sm:$0xf]
        %v525 = vld [vmem:[%s380 + $0x78] sm:$0xf]
        %v526 = vld [vmem:[%s380 + $0x7c] sm:$0xf]
        %v559 = vunpack.c.l.b16 %v463
        %v560 = vunpack.c.h.b16 %v463
        %v561 = vunpack.c.l.b16 %v464
        %v562 = vunpack.c.h.b16 %v464
        %v563 = vunpack.c.l.b16 %v465
        %v564 = vunpack.c.h.b16 %v465
        %v565 = vunpack.c.l.b16 %v466
        %v566 = vunpack.c.h.b16 %v466
        %v567 = vunpack.c.l.b16 %v467
        %v568 = vunpack.c.h.b16 %v467
        %v569 = vunpack.c.l.b16 %v468
        %v570 = vunpack.c.h.b16 %v468
        %v571 = vunpack.c.l.b16 %v469
        %v572 = vunpack.c.h.b16 %v469
        %v573 = vunpack.c.l.b16 %v470
        %v574 = vunpack.c.h.b16 %v470
        %v575 = vunpack.c.l.b16 %v471
        %v576 = vunpack.c.h.b16 %v471
        %v577 = vunpack.c.l.b16 %v472
        %v578 = vunpack.c.h.b16 %v472
        %v579 = vunpack.c.l.b16 %v473
        %v580 = vunpack.c.h.b16 %v473
        %v581 = vunpack.c.l.b16 %v474
        %v582 = vunpack.c.h.b16 %v474
        %v583 = vunpack.c.l.b16 %v475
        %v584 = vunpack.c.h.b16 %v475
        %v585 = vunpack.c.l.b16 %v476
        %v586 = vunpack.c.h.b16 %v476
        %v587 = vunpack.c.l.b16 %v477
        %v588 = vunpack.c.h.b16 %v477
        %v589 = vunpack.c.l.b16 %v478
        %v590 = vunpack.c.h.b16 %v478
        %v591 = vunpack.c.l.b16 %v479
        %v592 = vunpack.c.h.b16 %v479
        %v593 = vunpack.c.l.b16 %v480
        %v594 = vunpack.c.h.b16 %v480
        %v595 = vunpack.c.l.b16 %v481
        %v596 = vunpack.c.h.b16 %v481
        %v597 = vunpack.c.l.b16 %v482
        %v598 = vunpack.c.h.b16 %v482
        %v599 = vunpack.c.l.b16 %v483
        %v600 = vunpack.c.h.b16 %v483
        %v601 = vunpack.c.l.b16 %v484
        %v602 = vunpack.c.h.b16 %v484
        %v603 = vunpack.c.l.b16 %v485
        %v604 = vunpack.c.h.b16 %v485
        %v605 = vunpack.c.l.b16 %v486
        %v606 = vunpack.c.h.b16 %v486
        %v607 = vunpack.c.l.b16 %v487
        %v608 = vunpack.c.h.b16 %v487
        %v609 = vunpack.c.l.b16 %v488
        %v610 = vunpack.c.h.b16 %v488
        %v611 = vunpack.c.l.b16 %v489
        %v612 = vunpack.c.h.b16 %v489
        %v613 = vunpack.c.l.b16 %v490
        %v614 = vunpack.c.h.b16 %v490
        %v615 = vunpack.c.l.b16 %v491
        %v616 = vunpack.c.h.b16 %v491
        %v617 = vunpack.c.l.b16 %v492
        %v618 = vunpack.c.h.b16 %v492
        %v619 = vunpack.c.l.b16 %v493
        %v620 = vunpack.c.h.b16 %v493
        %v621 = vunpack.c.l.b16 %v494
        %v622 = vunpack.c.h.b16 %v494
        %v623 = vpack.c.b16 %v561, %v559
        %v624 = vpack.c.b16 %v562, %v560
        %v625 = vpack.c.b16 %v565, %v563
        %v626 = vpack.c.b16 %v566, %v564
        %v627 = vpack.c.b16 %v569, %v567
        %v628 = vpack.c.b16 %v570, %v568
        %v629 = vpack.c.b16 %v573, %v571
        %v630 = vpack.c.b16 %v574, %v572
        %v631 = vpack.c.b16 %v577, %v575
        %v632 = vpack.c.b16 %v578, %v576
        %v633 = vpack.c.b16 %v581, %v579
        %v634 = vpack.c.b16 %v582, %v580
        %v635 = vpack.c.b16 %v585, %v583
        %v636 = vpack.c.b16 %v586, %v584
        %v637 = vpack.c.b16 %v589, %v587
        %v638 = vpack.c.b16 %v590, %v588
        %v639 = vpack.c.b16 %v593, %v591
        %v640 = vpack.c.b16 %v594, %v592
        %v641 = vpack.c.b16 %v597, %v595
        %v642 = vpack.c.b16 %v598, %v596
        %v643 = vpack.c.b16 %v601, %v599
        %v644 = vpack.c.b16 %v602, %v600
        %v645 = vpack.c.b16 %v605, %v603
        %v646 = vpack.c.b16 %v606, %v604
        %v647 = vpack.c.b16 %v609, %v607
        %v648 = vpack.c.b16 %v610, %v608
        %v649 = vpack.c.b16 %v613, %v611
        %v650 = vpack.c.b16 %v614, %v612
        %v651 = vpack.c.b16 %v617, %v615
        %v652 = vpack.c.b16 %v618, %v616
        %v653 = vpack.c.b16 %v621, %v619
        %v654 = vpack.c.b16 %v622, %v620
        %v719 = vunpack.c.l.b16 %v495
        %v720 = vunpack.c.l.b16 %v496
        %v721 = vunpack.c.l.b16 %v497
        %v722 = vunpack.c.l.b16 %v498
        %v723 = vunpack.c.l.b16 %v499
        %v724 = vunpack.c.l.b16 %v500
        %v725 = vunpack.c.l.b16 %v501
        %v726 = vunpack.c.l.b16 %v502
        %v727 = vunpack.c.l.b16 %v503
        %v728 = vunpack.c.l.b16 %v504
        %v729 = vunpack.c.l.b16 %v505
        %v730 = vunpack.c.l.b16 %v506
        %v731 = vunpack.c.l.b16 %v507
        %v732 = vunpack.c.l.b16 %v508
        %v733 = vunpack.c.l.b16 %v509
        %v734 = vunpack.c.l.b16 %v510
        %v735 = vunpack.c.l.b16 %v511
        %v736 = vunpack.c.l.b16 %v512
        %v737 = vunpack.c.l.b16 %v513
        %v738 = vunpack.c.l.b16 %v514
        %v739 = vunpack.c.l.b16 %v515
        %v740 = vunpack.c.l.b16 %v516
        %v741 = vunpack.c.l.b16 %v517
        %v742 = vunpack.c.l.b16 %v518
        %v743 = vunpack.c.l.b16 %v519
        %v744 = vunpack.c.l.b16 %v520
        %v745 = vunpack.c.l.b16 %v521
        %v746 = vunpack.c.l.b16 %v522
        %v747 = vunpack.c.l.b16 %v523
        %v748 = vunpack.c.l.b16 %v524
        %v749 = vunpack.c.l.b16 %v525
        %v750 = vunpack.c.l.b16 %v526
        %v751 = vpack.c.b16 %v720, %v719
        %v752 = vpack.c.b16 %v722, %v721
        %v753 = vpack.c.b16 %v724, %v723
        %v754 = vpack.c.b16 %v726, %v725
        %v755 = vpack.c.b16 %v728, %v727
        %v756 = vpack.c.b16 %v730, %v729
        %v757 = vpack.c.b16 %v732, %v731
        %v758 = vpack.c.b16 %v734, %v733
        %v759 = vpack.c.b16 %v736, %v735
        %v760 = vpack.c.b16 %v738, %v737
        %v761 = vpack.c.b16 %v740, %v739
        %v762 = vpack.c.b16 %v742, %v741
        %v763 = vpack.c.b16 %v744, %v743
        %v764 = vpack.c.b16 %v746, %v745
        %v765 = vpack.c.b16 %v748, %v747
        %v766 = vpack.c.b16 %v750, %v749
        %783 = vmatprep.subr.bf16.mxu0 0
        %784 = vmatpush1.bf16.msra.mxu0 %v751
        %785 = vmatprep.subr.bf16.mxu0 0
        %786 = vmatpush1.bf16.msra.mxu0 %v752
        %787 = vmatprep.subr.bf16.mxu0 0
        %788 = vmatpush1.bf16.msra.mxu0 %v753
        %789 = vmatprep.subr.bf16.mxu0 0
        %790 = vmatpush1.bf16.msra.mxu0 %v754
        %791 = vmatprep.subr.bf16.mxu0 0
        %792 = vmatpush1.bf16.msra.mxu0 %v755
        %793 = vmatprep.subr.bf16.mxu0 0
        %794 = vmatpush1.bf16.msra.mxu0 %v756
        %795 = vmatprep.subr.bf16.mxu0 0
        %796 = vmatpush1.bf16.msra.mxu0 %v757
        %797 = vmatprep.subr.bf16.mxu0 0
        %798 = vmatpush1.bf16.msra.mxu0 %v758
        %799 = vmatprep.subr.bf16.mxu0 0
        %800 = vmatpush1.bf16.msra.mxu0 %v759
        %801 = vmatprep.subr.bf16.mxu0 0
        %802 = vmatpush1.bf16.msra.mxu0 %v760
        %803 = vmatprep.subr.bf16.mxu0 0
        %804 = vmatpush1.bf16.msra.mxu0 %v761
        %805 = vmatprep.subr.bf16.mxu0 0
        %806 = vmatpush1.bf16.msra.mxu0 %v762
        %807 = vmatprep.subr.bf16.mxu0 0
        %808 = vmatpush1.bf16.msra.mxu0 %v763
        %809 = vmatprep.subr.bf16.mxu0 0
        %810 = vmatpush1.bf16.msra.mxu0 %v764
        %811 = vmatprep.subr.bf16.mxu0 0
        %812 = vmatpush1.bf16.msra.mxu0 %v765
        %813 = vmatprep.subr.bf16.mxu0 0
        %814 = vmatpush1.bf16.msra.mxu0 %v766
        %815 = vmatprep.mubr.bf16.mxu0 %v624
        %816 = vmatmul.mubr.bf16.gmra.mrb[0].mxu0 %v623
        %v817 = vpop.f32.mrb[0].mxu0
        %v818 = vadd.f32 0.0, %v817
        %v819 = vpop.f32.mrb[0].mxu0
        %v820 = vpop.f32.mrb[0].mxu0
        %v821 = vadd.f32 0.0, %v820
        %v822 = vpop.f32.mrb[0].mxu0
        %823 = vmatprep.mubr.bf16.mxu0 %v626
        %824 = vmatmul.mubr.bf16.gmra.mrb[0].mxu0 %v625
        %v825 = vpop.f32.mrb[0].mxu0
        %v826 = vadd.f32 0.0, %v825
        %v827 = vpop.f32.mrb[0].mxu0
        %v828 = vpop.f32.mrb[0].mxu0
        %v829 = vadd.f32 0.0, %v828
        %v830 = vpop.f32.mrb[0].mxu0
        %831 = vmatprep.mubr.bf16.mxu0 %v628
        %832 = vmatmul.mubr.bf16.gmra.mrb[0].mxu0 %v627
        %v833 = vpop.f32.mrb[0].mxu0
        %v834 = vadd.f32 0.0, %v833
        %v835 = vpop.f32.mrb[0].mxu0
        %v836 = vpop.f32.mrb[0].mxu0
        %v837 = vadd.f32 0.0, %v836
        %v838 = vpop.f32.mrb[0].mxu0
        %839 = vmatprep.mubr.bf16.mxu0 %v630
        %840 = vmatmul.mubr.bf16.gmra.mrb[0].mxu0 %v629
        %v841 = vpop.f32.mrb[0].mxu0
        %v842 = vadd.f32 0.0, %v841
        %v843 = vpop.f32.mrb[0].mxu0
        %v844 = vpop.f32.mrb[0].mxu0
        %v845 = vadd.f32 0.0, %v844
        %v846 = vpop.f32.mrb[0].mxu0
        %847 = vmatprep.mubr.bf16.mxu0 %v632
        %848 = vmatmul.mubr.bf16.gmra.mrb[0].mxu0 %v631
        %v849 = vpop.f32.mrb[0].mxu0
        %v850 = vadd.f32 0.0, %v849
        %v851 = vpop.f32.mrb[0].mxu0
        %v852 = vpop.f32.mrb[0].mxu0
        %v853 = vadd.f32 0.0, %v852
        %v854 = vpop.f32.mrb[0].mxu0
        %855 = vmatprep.mubr.bf16.mxu0 %v634
        %856 = vmatmul.mubr.bf16.gmra.mrb[0].mxu0 %v633
        %v857 = vpop.f32.mrb[0].mxu0
        %v858 = vadd.f32 0.0, %v857
        %v859 = vpop.f32.mrb[0].mxu0
        %v860 = vpop.f32.mrb[0].mxu0
        %v861 = vadd.f32 0.0, %v860
        %v862 = vpop.f32.mrb[0].mxu0
        %863 = vmatprep.mubr.bf16.mxu0 %v636
        %864 = vmatmul.mubr.bf16.gmra.mrb[0].mxu0 %v635
        %v865 = vpop.f32.mrb[0].mxu0
        %v866 = vadd.f32 0.0, %v865
        %v867 = vpop.f32.mrb[0].mxu0
        %v868 = vpop.f32.mrb[0].mxu0
        %v869 = vadd.f32 0.0, %v868
        %v870 = vpop.f32.mrb[0].mxu0
        %871 = vmatprep.mubr.bf16.mxu0 %v638
        %872 = vmatmul.mubr.bf16.gmra.mrb[0].mxu0 %v637
        %v873 = vpop.f32.mrb[0].mxu0
        %v874 = vadd.f32 0.0, %v873
        %v875 = vpop.f32.mrb[0].mxu0
        %v876 = vpop.f32.mrb[0].mxu0
        %v877 = vadd.f32 0.0, %v876
        %v878 = vpop.f32.mrb[0].mxu0
        %879 = vmatprep.mubr.bf16.mxu0 %v640
        %880 = vmatmul.mubr.bf16.gmra.mrb[0].mxu0 %v639
        %v881 = vpop.f32.mrb[0].mxu0
        %v882 = vadd.f32 0.0, %v881
        %v883 = vpop.f32.mrb[0].mxu0
        %v884 = vpop.f32.mrb[0].mxu0
        %v885 = vadd.f32 0.0, %v884
        %v886 = vpop.f32.mrb[0].mxu0
        %887 = vmatprep.mubr.bf16.mxu0 %v642
        %888 = vmatmul.mubr.bf16.gmra.mrb[0].mxu0 %v641
        %v889 = vpop.f32.mrb[0].mxu0
        %v890 = vadd.f32 0.0, %v889
        %v891 = vpop.f32.mrb[0].mxu0
        %v892 = vpop.f32.mrb[0].mxu0
        %v893 = vadd.f32 0.0, %v892
        %v894 = vpop.f32.mrb[0].mxu0
        %895 = vmatprep.mubr.bf16.mxu0 %v644
        %896 = vmatmul.mubr.bf16.gmra.mrb[0].mxu0 %v643
        %v897 = vpop.f32.mrb[0].mxu0
        %v898 = vadd.f32 0.0, %v897
        %v899 = vpop.f32.mrb[0].mxu0
        %v900 = vpop.f32.mrb[0].mxu0
        %v901 = vadd.f32 0.0, %v900
        %v902 = vpop.f32.mrb[0].mxu0
        %903 = vmatprep.mubr.bf16.mxu0 %v646
        %904 = vmatmul.mubr.bf16.gmra.mrb[0].mxu0 %v645
        %v905 = vpop.f32.mrb[0].mxu0
        %v906 = vadd.f32 0.0, %v905
        %v907 = vpop.f32.mrb[0].mxu0
        %v908 = vpop.f32.mrb[0].mxu0
        %v909 = vadd.f32 0.0, %v908
        %v910 = vpop.f32.mrb[0].mxu0
        %911 = vmatprep.mubr.bf16.mxu0 %v648
        %912 = vmatmul.mubr.bf16.gmra.mrb[0].mxu0 %v647
        %v913 = vpop.f32.mrb[0].mxu0
        %v914 = vadd.f32 0.0, %v913
        %v915 = vpop.f32.mrb[0].mxu0
        %v916 = vpop.f32.mrb[0].mxu0
        %v917 = vadd.f32 0.0, %v916
        %v918 = vpop.f32.mrb[0].mxu0
        %919 = vmatprep.mubr.bf16.mxu0 %v650
        %920 = vmatmul.mubr.bf16.gmra.mrb[0].mxu0 %v649
        %v921 = vpop.f32.mrb[0].mxu0
        %v922 = vadd.f32 0.0, %v921
        %v923 = vpop.f32.mrb[0].mxu0
        %v924 = vpop.f32.mrb[0].mxu0
        %v925 = vadd.f32 0.0, %v924
        %v926 = vpop.f32.mrb[0].mxu0
        %927 = vmatprep.mubr.bf16.mxu0 %v652
        %928 = vmatmul.mubr.bf16.gmra.mrb[0].mxu0 %v651
        %v929 = vpop.f32.mrb[0].mxu0
        %v930 = vadd.f32 0.0, %v929
        %v931 = vpop.f32.mrb[0].mxu0
        %v932 = vpop.f32.mrb[0].mxu0
        %v933 = vadd.f32 0.0, %v932
        %v934 = vpop.f32.mrb[0].mxu0
        %935 = vmatprep.mubr.bf16.mxu0 %v654
        %936 = vmatmul.mubr.bf16.gmra.mrb[0].mxu0 %v653
        %v937 = vpop.f32.mrb[0].mxu0
        %v938 = vadd.f32 0.0, %v937
        %v939 = vpop.f32.mrb[0].mxu0
        %v940 = vpop.f32.mrb[0].mxu0
        %v941 = vadd.f32 0.0, %v940
        %v942 = vpop.f32.mrb[0].mxu0
        %943 = vdwg.mxu0
        %v944 = vadd.f32 %v431, %v818
        %v945 = vadd.f32 %v432, %v821
        %v946 = vadd.f32 %v433, %v826
        %v947 = vadd.f32 %v434, %v829
        %v948 = vadd.f32 %v435, %v834
        %v949 = vadd.f32 %v436, %v837
        %v950 = vadd.f32 %v437, %v842
        %v951 = vadd.f32 %v438, %v845
        %v952 = vadd.f32 %v439, %v850
        %v953 = vadd.f32 %v440, %v853
        %v954 = vadd.f32 %v441, %v858
        %v955 = vadd.f32 %v442, %v861
        %v956 = vadd.f32 %v443, %v866
        %v957 = vadd.f32 %v444, %v869
        %v958 = vadd.f32 %v445, %v874
        %v959 = vadd.f32 %v446, %v877
        %v960 = vadd.f32 %v447, %v882
        %v961 = vadd.f32 %v448, %v885
        %v962 = vadd.f32 %v449, %v890
        %v963 = vadd.f32 %v450, %v893
        %v964 = vadd.f32 %v451, %v898
        %v965 = vadd.f32 %v452, %v901
        %v966 = vadd.f32 %v453, %v906
        %v967 = vadd.f32 %v454, %v909
        %v968 = vadd.f32 %v455, %v914
        %v969 = vadd.f32 %v456, %v917
        %v970 = vadd.f32 %v457, %v922
        %v971 = vadd.f32 %v458, %v925
        %v972 = vadd.f32 %v459, %v930
        %v973 = vadd.f32 %v460, %v933
        %v974 = vadd.f32 %v461, %v938
        %v975 = vadd.f32 %v462, %v941
        %976 = vst [vmem:[#allocation2] sm:$0xff] %v944
        %977 = vst [vmem:[#allocation2 + $0x8] sm:$0xff] %v945
        %978 = vst [vmem:[#allocation2 + $0x10] sm:$0xff] %v946
        %979 = vst [vmem:[#allocation2 + $0x18] sm:$0xff] %v947
        %980 = vst [vmem:[#allocation2 + $0x20] sm:$0xff] %v948
        %981 = vst [vmem:[#allocation2 + $0x28] sm:$0xff] %v949
        %982 = vst [vmem:[#allocation2 + $0x30] sm:$0xff] %v950
        %983 = vst [vmem:[#allocation2 + $0x38] sm:$0xff] %v951
        %984 = vst [vmem:[#allocation2 + $0x40] sm:$0xff] %v952
        %985 = vst [vmem:[#allocation2 + $0x48] sm:$0xff] %v953
        %986 = vst [vmem:[#allocation2 + $0x50] sm:$0xff] %v954
        %987 = vst [vmem:[#allocation2 + $0x58] sm:$0xff] %v955
        %988 = vst [vmem:[#allocation2 + $0x60] sm:$0xff] %v956
        %989 = vst [vmem:[#allocation2 + $0x68] sm:$0xff] %v957
        %990 = vst [vmem:[#allocation2 + $0x70] sm:$0xff] %v958
        %991 = vst [vmem:[#allocation2 + $0x78] sm:$0xff] %v959
        %992 = vst [vmem:[#allocation2 + $0x80] sm:$0xff] %v960
        %993 = vst [vmem:[#allocation2 + $0x88] sm:$0xff] %v961
        %994 = vst [vmem:[#allocation2 + $0x90] sm:$0xff] %v962
        %995 = vst [vmem:[#allocation2 + $0x98] sm:$0xff] %v963
        %996 = vst [vmem:[#allocation2 + $0xa0] sm:$0xff] %v964
        %997 = vst [vmem:[#allocation2 + $0xa8] sm:$0xff] %v965
        %998 = vst [vmem:[#allocation2 + $0xb0] sm:$0xff] %v966
        %999 = vst [vmem:[#allocation2 + $0xb8] sm:$0xff] %v967
        %1000 = vst [vmem:[#allocation2 + $0xc0] sm:$0xff] %v968
        %1001 = vst [vmem:[#allocation2 + $0xc8] sm:$0xff] %v969
        %1002 = vst [vmem:[#allocation2 + $0xd0] sm:$0xff] %v970
        %1003 = vst [vmem:[#allocation2 + $0xd8] sm:$0xff] %v971
        %1004 = vst [vmem:[#allocation2 + $0xe0] sm:$0xff] %v972
        %1005 = vst [vmem:[#allocation2 + $0xe8] sm:$0xff] %v973
        %1006 = vst [vmem:[#allocation2 + $0xf0] sm:$0xff] %v974
        %1007 = vst [vmem:[#allocation2 + $0xf8] sm:$0xff] %v975
        %p1008 = scmp.eq.s32.totalorder %s19, 1
        // Predicated region
        $region75: #{appnp_forward.7} parent=65 // pred_check
          %p1009 = pneg %p1008
        $region76: #{appnp_forward.7} parent=65 // pred_check_branch
          %1011 = sbr.rel (%p1009) target = $region78
        $region77: #{appnp_forward.7} parent=65 // pred_region
          %v1012 = vld [vmem:[#allocation2] sm:$0xff]
          %v1013 = vld [vmem:[#allocation2 + $0x8] sm:$0xff]
          %v1014 = vld [vmem:[#allocation2 + $0x10] sm:$0xff]
          %v1015 = vld [vmem:[#allocation2 + $0x18] sm:$0xff]
          %v1016 = vld [vmem:[#allocation2 + $0x20] sm:$0xff]
          %v1017 = vld [vmem:[#allocation2 + $0x28] sm:$0xff]
          %v1018 = vld [vmem:[#allocation2 + $0x30] sm:$0xff]
          %v1019 = vld [vmem:[#allocation2 + $0x38] sm:$0xff]
          %v1020 = vld [vmem:[#allocation2 + $0x40] sm:$0xff]
          %v1021 = vld [vmem:[#allocation2 + $0x48] sm:$0xff]
          %v1022 = vld [vmem:[#allocation2 + $0x50] sm:$0xff]
          %v1023 = vld [vmem:[#allocation2 + $0x58] sm:$0xff]
          %v1024 = vld [vmem:[#allocation2 + $0x60] sm:$0xff]
          %v1025 = vld [vmem:[#allocation2 + $0x68] sm:$0xff]
          %v1026 = vld [vmem:[#allocation2 + $0x70] sm:$0xff]
          %v1027 = vld [vmem:[#allocation2 + $0x78] sm:$0xff]
          %v1028 = vld [vmem:[#allocation2 + $0x80] sm:$0xff]
          %v1029 = vld [vmem:[#allocation2 + $0x88] sm:$0xff]
          %v1030 = vld [vmem:[#allocation2 + $0x90] sm:$0xff]
          %v1031 = vld [vmem:[#allocation2 + $0x98] sm:$0xff]
          %v1032 = vld [vmem:[#allocation2 + $0xa0] sm:$0xff]
          %v1033 = vld [vmem:[#allocation2 + $0xa8] sm:$0xff]
          %v1034 = vld [vmem:[#allocation2 + $0xb0] sm:$0xff]
          %v1035 = vld [vmem:[#allocation2 + $0xb8] sm:$0xff]
          %v1036 = vld [vmem:[#allocation2 + $0xc0] sm:$0xff]
          %v1037 = vld [vmem:[#allocation2 + $0xc8] sm:$0xff]
          %v1038 = vld [vmem:[#allocation2 + $0xd0] sm:$0xff]
          %v1039 = vld [vmem:[#allocation2 + $0xd8] sm:$0xff]
          %v1040 = vld [vmem:[#allocation2 + $0xe0] sm:$0xff]
          %v1041 = vld [vmem:[#allocation2 + $0xe8] sm:$0xff]
          %v1042 = vld [vmem:[#allocation2 + $0xf0] sm:$0xff]
          %v1043 = vld [vmem:[#allocation2 + $0xf8] sm:$0xff]
          %v1044 = vmul.f32 %v1012, 0.9
          %v1045 = vmul.f32 %v1013, 0.9
          %v1046 = vmul.f32 %v1014, 0.9
          %v1047 = vmul.f32 %v1015, 0.9
          %v1048 = vmul.f32 %v1016, 0.9
          %v1049 = vmul.f32 %v1017, 0.9
          %v1050 = vmul.f32 %v1018, 0.9
          %v1051 = vmul.f32 %v1019, 0.9
          %v1052 = vmul.f32 %v1020, 0.9
          %v1053 = vmul.f32 %v1021, 0.9
          %v1054 = vmul.f32 %v1022, 0.9
          %v1055 = vmul.f32 %v1023, 0.9
          %v1056 = vmul.f32 %v1024, 0.9
          %v1057 = vmul.f32 %v1025, 0.9
          %v1058 = vmul.f32 %v1026, 0.9
          %v1059 = vmul.f32 %v1027, 0.9
          %v1060 = vmul.f32 %v1028, 0.9
          %v1061 = vmul.f32 %v1029, 0.9
          %v1062 = vmul.f32 %v1030, 0.9
          %v1063 = vmul.f32 %v1031, 0.9
          %v1064 = vmul.f32 %v1032, 0.9
          %v1065 = vmul.f32 %v1033, 0.9
          %v1066 = vmul.f32 %v1034, 0.9
          %v1067 = vmul.f32 %v1035, 0.9
          %v1068 = vmul.f32 %v1036, 0.9
          %v1069 = vmul.f32 %v1037, 0.9
          %v1070 = vmul.f32 %v1038, 0.9
          %v1071 = vmul.f32 %v1039, 0.9
          %v1072 = vmul.f32 %v1040, 0.9
          %v1073 = vmul.f32 %v1041, 0.9
          %v1074 = vmul.f32 %v1042, 0.9
          %v1075 = vmul.f32 %v1043, 0.9
          %v1076 = vld [vmem:[%s386] sm:$0xff]
          %v1077 = vld [vmem:[%s386 + $0x8] sm:$0xff]
          %v1078 = vld [vmem:[%s386 + $0x10] sm:$0xff]
          %v1079 = vld [vmem:[%s386 + $0x18] sm:$0xff]
          %v1080 = vld [vmem:[%s386 + $0x20] sm:$0xff]
          %v1081 = vld [vmem:[%s386 + $0x28] sm:$0xff]
          %v1082 = vld [vmem:[%s386 + $0x30] sm:$0xff]
          %v1083 = vld [vmem:[%s386 + $0x38] sm:$0xff]
          %v1084 = vld [vmem:[%s386 + $0x40] sm:$0xff]
          %v1085 = vld [vmem:[%s386 + $0x48] sm:$0xff]
          %v1086 = vld [vmem:[%s386 + $0x50] sm:$0xff]
          %v1087 = vld [vmem:[%s386 + $0x58] sm:$0xff]
          %v1088 = vld [vmem:[%s386 + $0x60] sm:$0xff]
          %v1089 = vld [vmem:[%s386 + $0x68] sm:$0xff]
          %v1090 = vld [vmem:[%s386 + $0x70] sm:$0xff]
          %v1091 = vld [vmem:[%s386 + $0x78] sm:$0xff]
          %v1092 = vld [vmem:[%s386 + $0x80] sm:$0xff]
          %v1093 = vld [vmem:[%s386 + $0x88] sm:$0xff]
          %v1094 = vld [vmem:[%s386 + $0x90] sm:$0xff]
          %v1095 = vld [vmem:[%s386 + $0x98] sm:$0xff]
          %v1096 = vld [vmem:[%s386 + $0xa0] sm:$0xff]
          %v1097 = vld [vmem:[%s386 + $0xa8] sm:$0xff]
          %v1098 = vld [vmem:[%s386 + $0xb0] sm:$0xff]
          %v1099 = vld [vmem:[%s386 + $0xb8] sm:$0xff]
          %v1100 = vld [vmem:[%s386 + $0xc0] sm:$0xff]
          %v1101 = vld [vmem:[%s386 + $0xc8] sm:$0xff]
          %v1102 = vld [vmem:[%s386 + $0xd0] sm:$0xff]
          %v1103 = vld [vmem:[%s386 + $0xd8] sm:$0xff]
          %v1104 = vld [vmem:[%s386 + $0xe0] sm:$0xff]
          %v1105 = vld [vmem:[%s386 + $0xe8] sm:$0xff]
          %v1106 = vld [vmem:[%s386 + $0xf0] sm:$0xff]
          %v1107 = vld [vmem:[%s386 + $0xf8] sm:$0xff]
          %v1108 = vmul.f32 %v1076, 0.1
          %v1109 = vmul.f32 %v1077, 0.1
          %v1110 = vmul.f32 %v1078, 0.1
          %v1111 = vmul.f32 %v1079, 0.1
          %v1112 = vmul.f32 %v1080, 0.1
          %v1113 = vmul.f32 %v1081, 0.1
          %v1114 = vmul.f32 %v1082, 0.1
          %v1115 = vmul.f32 %v1083, 0.1
          %v1116 = vmul.f32 %v1084, 0.1
          %v1117 = vmul.f32 %v1085, 0.1
          %v1118 = vmul.f32 %v1086, 0.1
          %v1119 = vmul.f32 %v1087, 0.1
          %v1120 = vmul.f32 %v1088, 0.1
          %v1121 = vmul.f32 %v1089, 0.1
          %v1122 = vmul.f32 %v1090, 0.1
          %v1123 = vmul.f32 %v1091, 0.1
          %v1124 = vmul.f32 %v1092, 0.1
          %v1125 = vmul.f32 %v1093, 0.1
          %v1126 = vmul.f32 %v1094, 0.1
          %v1127 = vmul.f32 %v1095, 0.1
          %v1128 = vmul.f32 %v1096, 0.1
          %v1129 = vmul.f32 %v1097, 0.1
          %v1130 = vmul.f32 %v1098, 0.1
          %v1131 = vmul.f32 %v1099, 0.1
          %v1132 = vmul.f32 %v1100, 0.1
          %v1133 = vmul.f32 %v1101, 0.1
          %v1134 = vmul.f32 %v1102, 0.1
          %v1135 = vmul.f32 %v1103, 0.1
          %v1136 = vmul.f32 %v1104, 0.1
          %v1137 = vmul.f32 %v1105, 0.1
          %v1138 = vmul.f32 %v1106, 0.1
          %v1139 = vmul.f32 %v1107, 0.1
          %v1140 = vadd.f32 %v1044, %v1108
          %v1141 = vadd.f32 %v1045, %v1109
          %v1142 = vadd.f32 %v1046, %v1110
          %v1143 = vadd.f32 %v1047, %v1111
          %v1144 = vadd.f32 %v1048, %v1112
          %v1145 = vadd.f32 %v1049, %v1113
          %v1146 = vadd.f32 %v1050, %v1114
          %v1147 = vadd.f32 %v1051, %v1115
          %v1148 = vadd.f32 %v1052, %v1116
          %v1149 = vadd.f32 %v1053, %v1117
          %v1150 = vadd.f32 %v1054, %v1118
          %v1151 = vadd.f32 %v1055, %v1119
          %v1152 = vadd.f32 %v1056, %v1120
          %v1153 = vadd.f32 %v1057, %v1121
          %v1154 = vadd.f32 %v1058, %v1122
          %v1155 = vadd.f32 %v1059, %v1123
          %v1156 = vadd.f32 %v1060, %v1124
          %v1157 = vadd.f32 %v1061, %v1125
          %v1158 = vadd.f32 %v1062, %v1126
          %v1159 = vadd.f32 %v1063, %v1127
          %v1160 = vadd.f32 %v1064, %v1128
          %v1161 = vadd.f32 %v1065, %v1129
          %v1162 = vadd.f32 %v1066, %v1130
          %v1163 = vadd.f32 %v1067, %v1131
          %v1164 = vadd.f32 %v1068, %v1132
          %v1165 = vadd.f32 %v1069, %v1133
          %v1166 = vadd.f32 %v1070, %v1134
          %v1167 = vadd.f32 %v1071, %v1135
          %v1168 = vadd.f32 %v1072, %v1136
          %v1169 = vadd.f32 %v1073, %v1137
          %v1170 = vadd.f32 %v1074, %v1138
          %v1171 = vadd.f32 %v1075, %v1139
          %1172 = vst [vmem:[%s392] sm:$0xff] %v1140
          %1173 = vst [vmem:[%s392 + $0x8] sm:$0xff] %v1141
          %1174 = vst [vmem:[%s392 + $0x10] sm:$0xff] %v1142
          %1175 = vst [vmem:[%s392 + $0x18] sm:$0xff] %v1143
          %1176 = vst [vmem:[%s392 + $0x20] sm:$0xff] %v1144
          %1177 = vst [vmem:[%s392 + $0x28] sm:$0xff] %v1145
          %1178 = vst [vmem:[%s392 + $0x30] sm:$0xff] %v1146
          %1179 = vst [vmem:[%s392 + $0x38] sm:$0xff] %v1147
          %1180 = vst [vmem:[%s392 + $0x40] sm:$0xff] %v1148
          %1181 = vst [vmem:[%s392 + $0x48] sm:$0xff] %v1149
          %1182 = vst [vmem:[%s392 + $0x50] sm:$0xff] %v1150
          %1183 = vst [vmem:[%s392 + $0x58] sm:$0xff] %v1151
          %1184 = vst [vmem:[%s392 + $0x60] sm:$0xff] %v1152
          %1185 = vst [vmem:[%s392 + $0x68] sm:$0xff] %v1153
          %1186 = vst [vmem:[%s392 + $0x70] sm:$0xff] %v1154
          %1187 = vst [vmem:[%s392 + $0x78] sm:$0xff] %v1155
          %1188 = vst [vmem:[%s392 + $0x80] sm:$0xff] %v1156
          %1189 = vst [vmem:[%s392 + $0x88] sm:$0xff] %v1157
          %1190 = vst [vmem:[%s392 + $0x90] sm:$0xff] %v1158
          %1191 = vst [vmem:[%s392 + $0x98] sm:$0xff] %v1159
          %1192 = vst [vmem:[%s392 + $0xa0] sm:$0xff] %v1160
          %1193 = vst [vmem:[%s392 + $0xa8] sm:$0xff] %v1161
          %1194 = vst [vmem:[%s392 + $0xb0] sm:$0xff] %v1162
          %1195 = vst [vmem:[%s392 + $0xb8] sm:$0xff] %v1163
          %1196 = vst [vmem:[%s392 + $0xc0] sm:$0xff] %v1164
          %1197 = vst [vmem:[%s392 + $0xc8] sm:$0xff] %v1165
          %1198 = vst [vmem:[%s392 + $0xd0] sm:$0xff] %v1166
          %1199 = vst [vmem:[%s392 + $0xd8] sm:$0xff] %v1167
          %1200 = vst [vmem:[%s392 + $0xe0] sm:$0xff] %v1168
          %1201 = vst [vmem:[%s392 + $0xe8] sm:$0xff] %v1169
          %1202 = vst [vmem:[%s392 + $0xf0] sm:$0xff] %v1170
          %1203 = vst [vmem:[%s392 + $0xf8] sm:$0xff] %v1171
        $region78: #{appnp_forward.7} parent=65 // pred_fallthru
          _
        %s1204 = smul.u32 32, %s18
        %p1205 = scmp.lt.s32.totalorder %s1204, 63
        %s1206 = scalar_select %p1205, %s1204, 63
        %s1207 = smul.addr %s1206, 8
        %s1208 = scalar_lea.vmem %s3, %s1207
        // Predicated region
        $region79: #{appnp_forward.7} parent=65 // pred_check
          %p1209 = pneg %p124
        $region80: #{appnp_forward.7} parent=65 // pred_check_branch
          %1211 = sbr.rel (%p1209) target = $region82
        $region81: #{appnp_forward.7} parent=65 // pred_region
          %s1212 = smul.u32 32, %s18
        $region82: #{appnp_forward.7} parent=65 // pred_fallthru
          _
      $region66: #{appnp_forward.7} parent=5 // pred_fallthru
        _
      %p1213 = scmp.le.s32.totalorder 2, %s9
      // Predicated region
      $region83: #{appnp_forward.7} parent=5 // pred_check
        %p1214 = pneg %p1213
      $region84: #{appnp_forward.7} parent=5 // pred_check_branch
        %1216 = sbr.rel (%p1214) target = $region86
      $region85: #{appnp_forward.7} parent=5 // pred_region
        %s1217 = ssub.s32 %s9, 2
        // Predicated region
        $region87: #{appnp_forward.7} parent=85 // pred_check
          %p1218 = pneg %p130
        $region88: #{appnp_forward.7} parent=85 // pred_check_branch
          %1220 = sbr.rel (%p1218) target = $region90
        $region89: #{appnp_forward.7} parent=85 // pred_region
          %s1221 = smul.u32 32, %s20
          %p1222 = scmp.lt.s32.totalorder %s1221, 63
          %s1223 = scalar_select %p1222, %s1221, 63
          %s1224 = smul.addr %s1223, 8
          %s1225 = scalar_lea.vmem %s3, %s1224
        $region90: #{appnp_forward.7} parent=85 // pred_fallthru
          _
      $region86: #{appnp_forward.7} parent=5 // pred_fallthru
        _
    $region6: #{appnp_forward.7} parent=1 // loop_footer
      %s13 = sadd.s32 1, %s9
    $region7: #{appnp_forward.7} parent=1 // loop_footer_branch
      %8 = sbr.rel target = $region3
    $region8: #{appnp_forward.7} parent=1 // loop_exit
      _

// kernel: appnp_forward.4
$region0: #{appnp_forward.4}
  #allocation0 [shape = 'u32[]', space=smem, size = 0x4, offset = 0x4, fixed_abs, tag = 'smem constant byte address 0x4 - core index']
  #allocation1 [shape = 'u32[144,128]{1,0:T(1,128)}', space=vmem, size = 0x12000, scoped, tag = 'internal scratch']
  %s0 = inlined_call_operand.vmem [shape: f32[512,128], index: 0, kind: input, shape index: {}]
  %s1 = inlined_call_operand.vmem [shape: f32[128,128], index: 1, kind: input, shape index: {}]
  %s2 = inlined_call_operand.vmem [shape: f32[128,128], index: 2, kind: input, shape index: {}]
  %s3 = inlined_call_operand.vmem [shape: f32[1,128], index: 3, kind: input, shape index: {}]
  %s4 = inlined_call_operand.vmem [shape: f32[1,128], index: 4, kind: input, shape index: {}]
  %s5 = inlined_call_operand.vmem [shape: f32[512,128], index: 5, kind: output, shape index: {0}]
  %s6 = inlined_call_operand.vmem [shape: bf16[512,128], index: 6, kind: output, shape index: {1}]
  %7 = xla_tuple %s5, %s6
  %s8 = sld [smem:[#allocation0]]
  $region61: #{appnp_forward.4} parent=0
    _
  %s10 = ssub.s32 1, %s8
  %s11 = scalar_select 0, %s10, %s8
  loop: start=0, step=1, limit=4
  $region2: #{appnp_forward.4} parent=0 // loop_pre_header
    _
  $region3: #{appnp_forward.4} parent=0 // loop_header
    %s13 = sphi 0, %s17
    %p14 = scmp.ge.s32.totalorder %s13, 4
    %s23 = sphi 0, %s25
    %s26 = sphi 0, %s23
    %s27 = sphi 0, %s26
    %s43 = sphi 0, %s27
    %s47 = sphi 0, %s47
    %s49 = sphi 0, %s47
    %s50 = sphi 0, %s49
    %s64 = sphi 0, %s50
    %s68 = sphi 0, %s68
    %s70 = sphi 0, %s68
    %s71 = sphi 0, %s70
    %s85 = sphi 0, %s71
    %s89 = sphi 0, %s89
    %s91 = sphi 0, %s89
    %s92 = sphi 0, %s91
    %s106 = sphi 0, %s92
    %s110 = sphi 0, %s110
    %s112 = sphi 0, %s110
    %s113 = sphi 0, %s112
    %s127 = sphi 0, %s113
    %s133 = sphi 0, %s135
    %s136 = sphi 0, %s133
    %s137 = sphi 0, %s136
    %s153 = sphi 0, %s137
    %s159 = sphi 0, %s161
    %s162 = sphi 0, %s159
    %s163 = sphi 0, %s162
    %s179 = sphi 0, %s163
  $region4: #{appnp_forward.4} parent=0 // loop_header_branch
    %16 = sbr.rel (%p14) target = $region8
  $region5: #{appnp_forward.4} parent=0 // loop_body
    %s18 = ssub.s32 %s13, 1
    %s19 = ssub.s32 %s13, 2
    %s20 = sadd.s32 %s13, 1
    %s21 = ssub.s32 %s13, %s20
    %p22 = scmp.eq.s32.totalorder %s21, 0
    %s24 = sadd.s32 %s23, 1
    %s25 = scalar_select %p22, %s23, %s24
    %p28 = pneg %p22
    %p29 = scmp.eq.s32.totalorder %s13, 1
    %p30 = por %p28, %p29
    %p31 = scmp.ne.s32.totalorder %s23, %s26
    %p32 = scmp.eq.s32.totalorder %s13, 0
    %p33 = por %p31, %p32
    %p34 = scmp.ne.s32.totalorder %s23, %s26
    %p35 = scmp.eq.s32.totalorder %s18, 1
    %p36 = por %p34, %p35
    %p37 = scmp.ne.s32.totalorder %s26, %s27
    %p38 = scmp.eq.s32.totalorder %s18, 0
    %p39 = por %p37, %p38
    %p40 = scmp.ne.s32.totalorder %s26, %s27
    %p41 = scmp.eq.s32.totalorder %s19, 1
    %p42 = por %p40, %p41
    %p44 = scmp.ne.s32.totalorder %s27, %s43
    %p45 = scmp.eq.s32.totalorder %s19, 0
    %p46 = por %p44, %p45
    %s48 = sadd.s32 %s47, 1
    %p51 = scmp.eq.s32.totalorder %s13, 1
    %p52 = scmp.ne.s32.totalorder %s47, %s49
    %p53 = scmp.eq.s32.totalorder %s13, 0
    %p54 = por %p52, %p53
    %p55 = scmp.ne.s32.totalorder %s47, %s49
    %p56 = scmp.eq.s32.totalorder %s18, 1
    %p57 = por %p55, %p56
    %p58 = scmp.ne.s32.totalorder %s49, %s50
    %p59 = scmp.eq.s32.totalorder %s18, 0
    %p60 = por %p58, %p59
    %p61 = scmp.ne.s32.totalorder %s49, %s50
    %p62 = scmp.eq.s32.totalorder %s19, 1
    %p63 = por %p61, %p62
    %p65 = scmp.ne.s32.totalorder %s50, %s64
    %p66 = scmp.eq.s32.totalorder %s19, 0
    %p67 = por %p65, %p66
    %s69 = sadd.s32 %s68, 1
    %p72 = scmp.eq.s32.totalorder %s13, 1
    %p73 = scmp.ne.s32.totalorder %s68, %s70
    %p74 = scmp.eq.s32.totalorder %s13, 0
    %p75 = por %p73, %p74
    %p76 = scmp.ne.s32.totalorder %s68, %s70
    %p77 = scmp.eq.s32.totalorder %s18, 1
    %p78 = por %p76, %p77
    %p79 = scmp.ne.s32.totalorder %s70, %s71
    %p80 = scmp.eq.s32.totalorder %s18, 0
    %p81 = por %p79, %p80
    %p82 = scmp.ne.s32.totalorder %s70, %s71
    %p83 = scmp.eq.s32.totalorder %s19, 1
    %p84 = por %p82, %p83
    %p86 = scmp.ne.s32.totalorder %s71, %s85
    %p87 = scmp.eq.s32.totalorder %s19, 0
    %p88 = por %p86, %p87
    %s90 = sadd.s32 %s89, 1
    %p93 = scmp.eq.s32.totalorder %s13, 1
    %p94 = scmp.ne.s32.totalorder %s89, %s91
    %p95 = scmp.eq.s32.totalorder %s13, 0
    %p96 = por %p94, %p95
    %p97 = scmp.ne.s32.totalorder %s89, %s91
    %p98 = scmp.eq.s32.totalorder %s18, 1
    %p99 = por %p97, %p98
    %p100 = scmp.ne.s32.totalorder %s91, %s92
    %p101 = scmp.eq.s32.totalorder %s18, 0
    %p102 = por %p100, %p101
    %p103 = scmp.ne.s32.totalorder %s91, %s92
    %p104 = scmp.eq.s32.totalorder %s19, 1
    %p105 = por %p103, %p104
    %p107 = scmp.ne.s32.totalorder %s92, %s106
    %p108 = scmp.eq.s32.totalorder %s19, 0
    %p109 = por %p107, %p108
    %s111 = sadd.s32 %s110, 1
    %p114 = scmp.eq.s32.totalorder %s13, 1
    %p115 = scmp.ne.s32.totalorder %s110, %s112
    %p116 = scmp.eq.s32.totalorder %s13, 0
    %p117 = por %p115, %p116
    %p118 = scmp.ne.s32.totalorder %s110, %s112
    %p119 = scmp.eq.s32.totalorder %s18, 1
    %p120 = por %p118, %p119
    %p121 = scmp.ne.s32.totalorder %s112, %s113
    %p122 = scmp.eq.s32.totalorder %s18, 0
    %p123 = por %p121, %p122
    %p124 = scmp.ne.s32.totalorder %s112, %s113
    %p125 = scmp.eq.s32.totalorder %s19, 1
    %p126 = por %p124, %p125
    %p128 = scmp.ne.s32.totalorder %s113, %s127
    %p129 = scmp.eq.s32.totalorder %s19, 0
    %p130 = por %p128, %p129
    %s131 = ssub.s32 %s13, %s20
    %p132 = scmp.eq.s32.totalorder %s131, 0
    %s134 = sadd.s32 %s133, 1
    %s135 = scalar_select %p132, %s133, %s134
    %p138 = pneg %p132
    %p139 = scmp.eq.s32.totalorder %s13, 1
    %p140 = por %p138, %p139
    %p141 = scmp.ne.s32.totalorder %s133, %s136
    %p142 = scmp.eq.s32.totalorder %s13, 0
    %p143 = por %p141, %p142
    %p144 = scmp.ne.s32.totalorder %s133, %s136
    %p145 = scmp.eq.s32.totalorder %s18, 1
    %p146 = por %p144, %p145
    %p147 = scmp.ne.s32.totalorder %s136, %s137
    %p148 = scmp.eq.s32.totalorder %s18, 0
    %p149 = por %p147, %p148
    %p150 = scmp.ne.s32.totalorder %s136, %s137
    %p151 = scmp.eq.s32.totalorder %s19, 1
    %p152 = por %p150, %p151
    %p154 = scmp.ne.s32.totalorder %s137, %s153
    %p155 = scmp.eq.s32.totalorder %s19, 0
    %p156 = por %p154, %p155
    %s157 = ssub.s32 %s13, %s20
    %p158 = scmp.eq.s32.totalorder %s157, 0
    %s160 = sadd.s32 %s159, 1
    %s161 = scalar_select %p158, %s159, %s160
    %p164 = pneg %p158
    %p165 = scmp.eq.s32.totalorder %s13, 1
    %p166 = por %p164, %p165
    %p167 = scmp.ne.s32.totalorder %s159, %s162
    %p168 = scmp.eq.s32.totalorder %s13, 0
    %p169 = por %p167, %p168
    %p170 = scmp.ne.s32.totalorder %s159, %s162
    %p171 = scmp.eq.s32.totalorder %s18, 1
    %p172 = por %p170, %p171
    %p173 = scmp.ne.s32.totalorder %s162, %s163
    %p174 = scmp.eq.s32.totalorder %s18, 0
    %p175 = por %p173, %p174
    %p176 = scmp.ne.s32.totalorder %s162, %s163
    %p177 = scmp.eq.s32.totalorder %s19, 1
    %p178 = por %p176, %p177
    %p180 = scmp.ne.s32.totalorder %s163, %s179
    %p181 = scmp.eq.s32.totalorder %s19, 0
    %p182 = por %p180, %p181
    %p183 = scmp.le.s32.totalorder 1, %s13
    %p184 = scmp.lt.s32.totalorder %s13, 3
    %p185 = pnand %p183, %p184
    %p186 = pneg %p185
    // Predicated region
    $region9: #{appnp_forward.4} parent=5 // pred_check
      _
    $region10: #{appnp_forward.4} parent=5 // pred_check_branch
      %188 = sbr.rel (%p185) target = $region12
    $region11: #{appnp_forward.4} parent=5 // pred_region
      %s189 = ssub.s32 %s13, 1
      // Predicated region
      $region13: #{appnp_forward.4} parent=11 // pred_check
        %p190 = pneg %p60
      $region14: #{appnp_forward.4} parent=11 // pred_check_branch
        %192 = sbr.rel (%p190) target = $region16
      $region15: #{appnp_forward.4} parent=11 // pred_region
        _
      $region16: #{appnp_forward.4} parent=11 // pred_fallthru
        _
      // Predicated region
      $region17: #{appnp_forward.4} parent=11 // pred_check
        %p193 = pneg %p81
      $region18: #{appnp_forward.4} parent=11 // pred_check_branch
        %195 = sbr.rel (%p193) target = $region20
      $region19: #{appnp_forward.4} parent=11 // pred_region
        _
      $region20: #{appnp_forward.4} parent=11 // pred_fallthru
        _
      // Predicated region
      $region21: #{appnp_forward.4} parent=11 // pred_check
        %p196 = pneg %p102
      $region22: #{appnp_forward.4} parent=11 // pred_check_branch
        %198 = sbr.rel (%p196) target = $region24
      $region23: #{appnp_forward.4} parent=11 // pred_region
        _
      $region24: #{appnp_forward.4} parent=11 // pred_fallthru
        _
      // Predicated region
      $region25: #{appnp_forward.4} parent=11 // pred_check
        %p199 = pneg %p123
      $region26: #{appnp_forward.4} parent=11 // pred_check_branch
        %201 = sbr.rel (%p199) target = $region28
      $region27: #{appnp_forward.4} parent=11 // pred_region
        _
      $region28: #{appnp_forward.4} parent=11 // pred_fallthru
        _
    $region12: #{appnp_forward.4} parent=5 // pred_fallthru
      _
    %p202 = scmp.lt.s32.totalorder %s13, 2
    // Predicated region
    $region29: #{appnp_forward.4} parent=5 // pred_check
      %p203 = pneg %p202
    $region30: #{appnp_forward.4} parent=5 // pred_check_branch
      %205 = sbr.rel (%p203) target = $region32
    $region31: #{appnp_forward.4} parent=5 // pred_region
      // Predicated region
      $region33: #{appnp_forward.4} parent=31 // pred_check
        %p206 = pneg %p33
      $region34: #{appnp_forward.4} parent=31 // pred_check_branch
        %208 = sbr.rel (%p206) target = $region36
      $region35: #{appnp_forward.4} parent=31 // pred_region
        %s209 = smul.u32 32, %s13
        %p210 = scmp.lt.s32.totalorder %s209, 63
        %s211 = scalar_select %p210, %s209, 63
        %s212 = smul.addr %s211, 8
        %s213 = scalar_lea.vmem %s0, %s212
        %s214 = smul.u32 32, %s13
      $region36: #{appnp_forward.4} parent=31 // pred_fallthru
        _
    $region32: #{appnp_forward.4} parent=5 // pred_fallthru
      _
    %p215 = scmp.le.s32.totalorder 1, %s13
    %p216 = scmp.lt.s32.totalorder %s13, 3
    %p217 = pnand %p215, %p216
    %p218 = pneg %p217
    // Predicated region
    $region37: #{appnp_forward.4} parent=5 // pred_check
      _
    $region38: #{appnp_forward.4} parent=5 // pred_check_branch
      %220 = sbr.rel (%p217) target = $region40
    $region39: #{appnp_forward.4} parent=5 // pred_region
      %s221 = ssub.s32 %s13, 1
      %s222 = smul.u32 32, %s18
      %p223 = scmp.lt.s32.totalorder %s222, 63
      %s224 = scalar_select %p223, %s222, 63
      %s225 = smul.addr %s224, 8
      %s226 = scalar_lea.vmem %s0, %s225
      %p227 = pneg %p39
      %p228 = pneg %p36
      %p229 = pneg %p60
      %p230 = pneg %p57
      %p231 = pneg %p81
      %p232 = pneg %p78
      %p233 = pneg %p102
      %p234 = pneg %p99
      %p235 = pneg %p123
      %p236 = pneg %p120
      %p237 = pneg %p149
      %p238 = pneg %p146
      %s239 = smul.u32 32, %s18
      %p240 = scmp.lt.s32.totalorder %s239, 63
      %s241 = scalar_select %p240, %s239, 63
      %s242 = smul.addr %s241, 8
      %s243 = scalar_lea.vmem %s5, %s242
      %p244 = pneg %p175
      %p245 = pneg %p172
      %s246 = smul.u32 32, %s18
      %p247 = scmp.lt.s32.totalorder %s246, 63
      %s248 = scalar_select %p247, %s246, 63
      %s249 = smul.addr %s248, 4
      %s250 = scalar_lea.vmem %s6, %s249
      %s251 = smul.u32 32, %s18
      %p252 = scmp.lt.s32.totalorder %s251, 63
      %s253 = scalar_select %p252, %s251, 63
      %s254 = smul.addr %s253, 8
      %s255 = scalar_lea.vmem %s0, %s254
      %s256 = smul.u32 32, %s18
      %s257 = smul.u32 32, %s18
      %p258 = scmp.lt.s32.totalorder %s257, 63
      %s259 = scalar_select %p258, %s257, 63
      %s260 = smul.addr %s259, 8
      %s261 = scalar_lea.vmem %s5, %s260
      %s262 = smul.u32 32, %s18
      %s263 = smul.u32 32, %s18
      %p264 = scmp.lt.s32.totalorder %s263, 63
      %s265 = scalar_select %p264, %s263, 63
      %s266 = smul.addr %s265, 4
      %s267 = scalar_lea.vmem %s6, %s266
      %s268 = smul.u32 32, %s18
      %v269 = vld [vmem:[%s255] sm:$0xff]
      %v270 = vld [vmem:[%s255 + $0x8] sm:$0xff]
      %v271 = vld [vmem:[%s255 + $0x10] sm:$0xff]
      %v272 = vld [vmem:[%s255 + $0x18] sm:$0xff]
      %v273 = vld [vmem:[%s255 + $0x20] sm:$0xff]
      %v274 = vld [vmem:[%s255 + $0x28] sm:$0xff]
      %v275 = vld [vmem:[%s255 + $0x30] sm:$0xff]
      %v276 = vld [vmem:[%s255 + $0x38] sm:$0xff]
      %v277 = vld [vmem:[%s255 + $0x40] sm:$0xff]
      %v278 = vld [vmem:[%s255 + $0x48] sm:$0xff]
      %v279 = vld [vmem:[%s255 + $0x50] sm:$0xff]
      %v280 = vld [vmem:[%s255 + $0x58] sm:$0xff]
      %v281 = vld [vmem:[%s255 + $0x60] sm:$0xff]
      %v282 = vld [vmem:[%s255 + $0x68] sm:$0xff]
      %v283 = vld [vmem:[%s255 + $0x70] sm:$0xff]
      %v284 = vld [vmem:[%s255 + $0x78] sm:$0xff]
      %v285 = vld [vmem:[%s255 + $0x80] sm:$0xff]
      %v286 = vld [vmem:[%s255 + $0x88] sm:$0xff]
      %v287 = vld [vmem:[%s255 + $0x90] sm:$0xff]
      %v288 = vld [vmem:[%s255 + $0x98] sm:$0xff]
      %v289 = vld [vmem:[%s255 + $0xa0] sm:$0xff]
      %v290 = vld [vmem:[%s255 + $0xa8] sm:$0xff]
      %v291 = vld [vmem:[%s255 + $0xb0] sm:$0xff]
      %v292 = vld [vmem:[%s255 + $0xb8] sm:$0xff]
      %v293 = vld [vmem:[%s255 + $0xc0] sm:$0xff]
      %v294 = vld [vmem:[%s255 + $0xc8] sm:$0xff]
      %v295 = vld [vmem:[%s255 + $0xd0] sm:$0xff]
      %v296 = vld [vmem:[%s255 + $0xd8] sm:$0xff]
      %v297 = vld [vmem:[%s255 + $0xe0] sm:$0xff]
      %v298 = vld [vmem:[%s255 + $0xe8] sm:$0xff]
      %v299 = vld [vmem:[%s255 + $0xf0] sm:$0xff]
      %v300 = vld [vmem:[%s255 + $0xf8] sm:$0xff]
      %v301 = vld [vmem:[%s1] sm:$0xff]
      %v302 = vld [vmem:[%s1 + $0x8] sm:$0xff]
      %v303 = vld [vmem:[%s1 + $0x10] sm:$0xff]
      %v304 = vld [vmem:[%s1 + $0x18] sm:$0xff]
      %v305 = vld [vmem:[%s1 + $0x20] sm:$0xff]
      %v306 = vld [vmem:[%s1 + $0x28] sm:$0xff]
      %v307 = vld [vmem:[%s1 + $0x30] sm:$0xff]
      %v308 = vld [vmem:[%s1 + $0x38] sm:$0xff]
      %v309 = vld [vmem:[%s1 + $0x40] sm:$0xff]
      %v310 = vld [vmem:[%s1 + $0x48] sm:$0xff]
      %v311 = vld [vmem:[%s1 + $0x50] sm:$0xff]
      %v312 = vld [vmem:[%s1 + $0x58] sm:$0xff]
      %v313 = vld [vmem:[%s1 + $0x60] sm:$0xff]
      %v314 = vld [vmem:[%s1 + $0x68] sm:$0xff]
      %v315 = vld [vmem:[%s1 + $0x70] sm:$0xff]
      %v316 = vld [vmem:[%s1 + $0x78] sm:$0xff]
      %v317 = vld [vmem:[%s3] sm:$0x1]
      %v319 = vlaneseq
      %v320 = vshrl.u32 %v319, 7
      %v321 = vsub.s32 0, %v320
      %v322 = vrot.slane %v317, %v321
      %324 = vmatprep.subr.mxu0 0.0
      %325 = vmatpush1.msra.mxu0 %v301
      %326 = vmatprep.subr.mxu0 0.0
      %327 = vmatpush1.msra.mxu0 %v302
      %328 = vmatprep.subr.mxu0 0.0
      %329 = vmatpush1.msra.mxu0 %v303
      %330 = vmatprep.subr.mxu0 0.0
      %331 = vmatpush1.msra.mxu0 %v304
      %332 = vmatprep.subr.mxu0 0.0
      %333 = vmatpush1.msra.mxu0 %v305
      %334 = vmatprep.subr.mxu0 0.0
      %335 = vmatpush1.msra.mxu0 %v306
      %336 = vmatprep.subr.mxu0 0.0
      %337 = vmatpush1.msra.mxu0 %v307
      %338 = vmatprep.subr.mxu0 0.0
      %339 = vmatpush1.msra.mxu0 %v308
      %340 = vmatprep.subr.mxu0 0.0
      %341 = vmatpush1.msra.mxu0 %v309
      %342 = vmatprep.subr.mxu0 0.0
      %343 = vmatpush1.msra.mxu0 %v310
      %344 = vmatprep.subr.mxu0 0.0
      %345 = vmatpush1.msra.mxu0 %v311
      %346 = vmatprep.subr.mxu0 0.0
      %347 = vmatpush1.msra.mxu0 %v312
      %348 = vmatprep.subr.mxu0 0.0
      %349 = vmatpush1.msra.mxu0 %v313
      %350 = vmatprep.subr.mxu0 0.0
      %351 = vmatpush1.msra.mxu0 %v314
      %352 = vmatprep.subr.mxu0 0.0
      %353 = vmatpush1.msra.mxu0 %v315
      %354 = vmatprep.subr.mxu0 0.0
      %355 = vmatpush1.msra.mxu0 %v316
      %356 = vmatprep.subr.mxu0 0.0
      %357 = vmatpush1.msra.mxu0 0.0
      %358 = vmatprep.subr.mxu0 0.0
      %359 = vmatpush1.msra.mxu0 0.0
      %360 = vmatprep.subr.mxu0 0.0
      %361 = vmatpush1.msra.mxu0 0.0
      %362 = vmatprep.subr.mxu0 0.0
      %363 = vmatpush1.msra.mxu0 0.0
      %364 = vmatprep.subr.mxu0 0.0
      %365 = vmatpush1.msra.mxu0 0.0
      %366 = vmatprep.subr.mxu0 0.0
      %367 = vmatpush1.msra.mxu0 0.0
      %368 = vmatprep.subr.mxu0 0.0
      %369 = vmatpush1.msra.mxu0 0.0
      %370 = vmatprep.subr.mxu0 0.0
      %371 = vmatpush1.msra.mxu0 0.0
      %372 = vmatprep.subr.mxu0 0.0
      %373 = vmatpush1.msra.mxu0 0.0
      %374 = vmatprep.subr.mxu0 0.0
      %375 = vmatpush1.msra.mxu0 0.0
      %376 = vmatprep.subr.mxu0 0.0
      %377 = vmatpush1.msra.mxu0 0.0
      %378 = vmatprep.subr.mxu0 0.0
      %379 = vmatpush1.msra.mxu0 0.0
      %380 = vmatprep.subr.mxu0 0.0
      %381 = vmatpush1.msra.mxu0 0.0
      %382 = vmatprep.subr.mxu0 0.0
      %383 = vmatpush1.msra.mxu0 0.0
      %384 = vmatprep.subr.mxu0 0.0
      %385 = vmatpush1.msra.mxu0 0.0
      %386 = vmatprep.subr.mxu0 0.0
      %387 = vmatpush1.msra.mxu0 0.0
      %388 = vmatprep.mubr.f32.mxu0 0.0
      %389 = vmatmul.mubr.f32.gmra.mrb[0].mxu0 %v269
      %v390 = vpop.f32.mrb[0].mxu0
      %v391 = vadd.f32 %v322, %v390
      %v392 = vpop.f32.mrb[0].mxu0
      %393 = vmatprep.mubr.f32.mxu0 0.0
      %394 = vmatmul.mubr.f32.gmra.mrb[0].mxu0 %v270
      %v395 = vpop.f32.mrb[0].mxu0
      %v396 = vadd.f32 %v322, %v395
      %v397 = vpop.f32.mrb[0].mxu0
      %398 = vmatprep.mubr.f32.mxu0 0.0
      %399 = vmatmul.mubr.f32.gmra.mrb[0].mxu0 %v271
      %v400 = vpop.f32.mrb[0].mxu0
      %v401 = vadd.f32 %v322, %v400
      %v402 = vpop.f32.mrb[0].mxu0
      %403 = vmatprep.mubr.f32.mxu0 0.0
      %404 = vmatmul.mubr.f32.gmra.mrb[0].mxu0 %v272
      %v405 = vpop.f32.mrb[0].mxu0
      %v406 = vadd.f32 %v322, %v405
      %v407 = vpop.f32.mrb[0].mxu0
      %408 = vmatprep.mubr.f32.mxu0 0.0
      %409 = vmatmul.mubr.f32.gmra.mrb[0].mxu0 %v273
      %v410 = vpop.f32.mrb[0].mxu0
      %v411 = vadd.f32 %v322, %v410
      %v412 = vpop.f32.mrb[0].mxu0
      %413 = vmatprep.mubr.f32.mxu0 0.0
      %414 = vmatmul.mubr.f32.gmra.mrb[0].mxu0 %v274
      %v415 = vpop.f32.mrb[0].mxu0
      %v416 = vadd.f32 %v322, %v415
      %v417 = vpop.f32.mrb[0].mxu0
      %418 = vmatprep.mubr.f32.mxu0 0.0
      %419 = vmatmul.mubr.f32.gmra.mrb[0].mxu0 %v275
      %v420 = vpop.f32.mrb[0].mxu0
      %v421 = vadd.f32 %v322, %v420
      %v422 = vpop.f32.mrb[0].mxu0
      %423 = vmatprep.mubr.f32.mxu0 0.0
      %424 = vmatmul.mubr.f32.gmra.mrb[0].mxu0 %v276
      %v425 = vpop.f32.mrb[0].mxu0
      %v426 = vadd.f32 %v322, %v425
      %v427 = vpop.f32.mrb[0].mxu0
      %428 = vmatprep.mubr.f32.mxu0 0.0
      %429 = vmatmul.mubr.f32.gmra.mrb[0].mxu0 %v277
      %v430 = vpop.f32.mrb[0].mxu0
      %v431 = vadd.f32 %v322, %v430
      %v432 = vpop.f32.mrb[0].mxu0
      %433 = vmatprep.mubr.f32.mxu0 0.0
      %434 = vmatmul.mubr.f32.gmra.mrb[0].mxu0 %v278
      %v435 = vpop.f32.mrb[0].mxu0
      %v436 = vadd.f32 %v322, %v435
      %v437 = vpop.f32.mrb[0].mxu0
      %438 = vmatprep.mubr.f32.mxu0 0.0
      %439 = vmatmul.mubr.f32.gmra.mrb[0].mxu0 %v279
      %v440 = vpop.f32.mrb[0].mxu0
      %v441 = vadd.f32 %v322, %v440
      %v442 = vpop.f32.mrb[0].mxu0
      %443 = vmatprep.mubr.f32.mxu0 0.0
      %444 = vmatmul.mubr.f32.gmra.mrb[0].mxu0 %v280
      %v445 = vpop.f32.mrb[0].mxu0
      %v446 = vadd.f32 %v322, %v445
      %v447 = vpop.f32.mrb[0].mxu0
      %448 = vmatprep.mubr.f32.mxu0 0.0
      %449 = vmatmul.mubr.f32.gmra.mrb[0].mxu0 %v281
      %v450 = vpop.f32.mrb[0].mxu0
      %v451 = vadd.f32 %v322, %v450
      %v452 = vpop.f32.mrb[0].mxu0
      %453 = vmatprep.mubr.f32.mxu0 0.0
      %454 = vmatmul.mubr.f32.gmra.mrb[0].mxu0 %v282
      %v455 = vpop.f32.mrb[0].mxu0
      %v456 = vadd.f32 %v322, %v455
      %v457 = vpop.f32.mrb[0].mxu0
      %458 = vmatprep.mubr.f32.mxu0 0.0
      %459 = vmatmul.mubr.f32.gmra.mrb[0].mxu0 %v283
      %v460 = vpop.f32.mrb[0].mxu0
      %v461 = vadd.f32 %v322, %v460
      %v462 = vpop.f32.mrb[0].mxu0
      %463 = vmatprep.mubr.f32.mxu0 0.0
      %464 = vmatmul.mubr.f32.gmra.mrb[0].mxu0 %v284
      %v465 = vpop.f32.mrb[0].mxu0
      %v466 = vadd.f32 %v322, %v465
      %v467 = vpop.f32.mrb[0].mxu0
      %468 = vmatprep.mubr.f32.mxu0 0.0
      %469 = vmatmul.mubr.f32.gmra.mrb[0].mxu0 %v285
      %v470 = vpop.f32.mrb[0].mxu0
      %v471 = vadd.f32 %v322, %v470
      %v472 = vpop.f32.mrb[0].mxu0
      %473 = vmatprep.mubr.f32.mxu0 0.0
      %474 = vmatmul.mubr.f32.gmra.mrb[0].mxu0 %v286
      %v475 = vpop.f32.mrb[0].mxu0
      %v476 = vadd.f32 %v322, %v475
      %v477 = vpop.f32.mrb[0].mxu0
      %478 = vmatprep.mubr.f32.mxu0 0.0
      %479 = vmatmul.mubr.f32.gmra.mrb[0].mxu0 %v287
      %v480 = vpop.f32.mrb[0].mxu0
      %v481 = vadd.f32 %v322, %v480
      %v482 = vpop.f32.mrb[0].mxu0
      %483 = vmatprep.mubr.f32.mxu0 0.0
      %484 = vmatmul.mubr.f32.gmra.mrb[0].mxu0 %v288
      %v485 = vpop.f32.mrb[0].mxu0
      %v486 = vadd.f32 %v322, %v485
      %v487 = vpop.f32.mrb[0].mxu0
      %488 = vmatprep.mubr.f32.mxu0 0.0
      %489 = vmatmul.mubr.f32.gmra.mrb[0].mxu0 %v289
      %v490 = vpop.f32.mrb[0].mxu0
      %v491 = vadd.f32 %v322, %v490
      %v492 = vpop.f32.mrb[0].mxu0
      %493 = vmatprep.mubr.f32.mxu0 0.0
      %494 = vmatmul.mubr.f32.gmra.mrb[0].mxu0 %v290
      %v495 = vpop.f32.mrb[0].mxu0
      %v496 = vadd.f32 %v322, %v495
      %v497 = vpop.f32.mrb[0].mxu0
      %498 = vmatprep.mubr.f32.mxu0 0.0
      %499 = vmatmul.mubr.f32.gmra.mrb[0].mxu0 %v291
      %v500 = vpop.f32.mrb[0].mxu0
      %v501 = vadd.f32 %v322, %v500
      %v502 = vpop.f32.mrb[0].mxu0
      %503 = vmatprep.mubr.f32.mxu0 0.0
      %504 = vmatmul.mubr.f32.gmra.mrb[0].mxu0 %v292
      %v505 = vpop.f32.mrb[0].mxu0
      %v506 = vadd.f32 %v322, %v505
      %v507 = vpop.f32.mrb[0].mxu0
      %508 = vmatprep.mubr.f32.mxu0 0.0
      %509 = vmatmul.mubr.f32.gmra.mrb[0].mxu0 %v293
      %v510 = vpop.f32.mrb[0].mxu0
      %v511 = vadd.f32 %v322, %v510
      %v512 = vpop.f32.mrb[0].mxu0
      %513 = vmatprep.mubr.f32.mxu0 0.0
      %514 = vmatmul.mubr.f32.gmra.mrb[0].mxu0 %v294
      %v515 = vpop.f32.mrb[0].mxu0
      %v516 = vadd.f32 %v322, %v515
      %v517 = vpop.f32.mrb[0].mxu0
      %518 = vmatprep.mubr.f32.mxu0 0.0
      %519 = vmatmul.mubr.f32.gmra.mrb[0].mxu0 %v295
      %v520 = vpop.f32.mrb[0].mxu0
      %v521 = vadd.f32 %v322, %v520
      %v522 = vpop.f32.mrb[0].mxu0
      %523 = vmatprep.mubr.f32.mxu0 0.0
      %524 = vmatmul.mubr.f32.gmra.mrb[0].mxu0 %v296
      %v525 = vpop.f32.mrb[0].mxu0
      %v526 = vadd.f32 %v322, %v525
      %v527 = vpop.f32.mrb[0].mxu0
      %528 = vmatprep.mubr.f32.mxu0 0.0
      %529 = vmatmul.mubr.f32.gmra.mrb[0].mxu0 %v297
      %v530 = vpop.f32.mrb[0].mxu0
      %v531 = vadd.f32 %v322, %v530
      %v532 = vpop.f32.mrb[0].mxu0
      %533 = vmatprep.mubr.f32.mxu0 0.0
      %534 = vmatmul.mubr.f32.gmra.mrb[0].mxu0 %v298
      %v535 = vpop.f32.mrb[0].mxu0
      %v536 = vadd.f32 %v322, %v535
      %v537 = vpop.f32.mrb[0].mxu0
      %538 = vmatprep.mubr.f32.mxu0 0.0
      %539 = vmatmul.mubr.f32.gmra.mrb[0].mxu0 %v299
      %v540 = vpop.f32.mrb[0].mxu0
      %v541 = vadd.f32 %v322, %v540
      %v542 = vpop.f32.mrb[0].mxu0
      %543 = vmatprep.mubr.f32.mxu0 0.0
      %544 = vmatmul.mubr.f32.gmra.mrb[0].mxu0 %v300
      %v545 = vpop.f32.mrb[0].mxu0
      %v546 = vadd.f32 %v322, %v545
      %v547 = vpop.f32.mrb[0].mxu0
      %548 = vdwg.mxu0
      %v549 = vmax.f32 %v391, 0.0
      %v550 = vmax.f32 %v396, 0.0
      %v551 = vmax.f32 %v401, 0.0
      %v552 = vmax.f32 %v406, 0.0
      %v553 = vmax.f32 %v411, 0.0
      %v554 = vmax.f32 %v416, 0.0
      %v555 = vmax.f32 %v421, 0.0
      %v556 = vmax.f32 %v426, 0.0
      %v557 = vmax.f32 %v431, 0.0
      %v558 = vmax.f32 %v436, 0.0
      %v559 = vmax.f32 %v441, 0.0
      %v560 = vmax.f32 %v446, 0.0
      %v561 = vmax.f32 %v451, 0.0
      %v562 = vmax.f32 %v456, 0.0
      %v563 = vmax.f32 %v461, 0.0
      %v564 = vmax.f32 %v466, 0.0
      %v565 = vmax.f32 %v471, 0.0
      %v566 = vmax.f32 %v476, 0.0
      %v567 = vmax.f32 %v481, 0.0
      %v568 = vmax.f32 %v486, 0.0
      %v569 = vmax.f32 %v491, 0.0
      %v570 = vmax.f32 %v496, 0.0
      %v571 = vmax.f32 %v501, 0.0
      %v572 = vmax.f32 %v506, 0.0
      %v573 = vmax.f32 %v511, 0.0
      %v574 = vmax.f32 %v516, 0.0
      %v575 = vmax.f32 %v521, 0.0
      %v576 = vmax.f32 %v526, 0.0
      %v577 = vmax.f32 %v531, 0.0
      %v578 = vmax.f32 %v536, 0.0
      %v579 = vmax.f32 %v541, 0.0
      %v580 = vmax.f32 %v546, 0.0
      %v581 = vld [vmem:[%s2] sm:$0xff]
      %v582 = vld [vmem:[%s2 + $0x8] sm:$0xff]
      %v583 = vld [vmem:[%s2 + $0x10] sm:$0xff]
      %v584 = vld [vmem:[%s2 + $0x18] sm:$0xff]
      %v585 = vld [vmem:[%s2 + $0x20] sm:$0xff]
      %v586 = vld [vmem:[%s2 + $0x28] sm:$0xff]
      %v587 = vld [vmem:[%s2 + $0x30] sm:$0xff]
      %v588 = vld [vmem:[%s2 + $0x38] sm:$0xff]
      %v589 = vld [vmem:[%s2 + $0x40] sm:$0xff]
      %v590 = vld [vmem:[%s2 + $0x48] sm:$0xff]
      %v591 = vld [vmem:[%s2 + $0x50] sm:$0xff]
      %v592 = vld [vmem:[%s2 + $0x58] sm:$0xff]
      %v593 = vld [vmem:[%s2 + $0x60] sm:$0xff]
      %v594 = vld [vmem:[%s2 + $0x68] sm:$0xff]
      %v595 = vld [vmem:[%s2 + $0x70] sm:$0xff]
      %v596 = vld [vmem:[%s2 + $0x78] sm:$0xff]
      %v597 = vld [vmem:[%s4] sm:$0x1]
      %v599 = vlaneseq
      %v600 = vshrl.u32 %v599, 7
      %v601 = vsub.s32 0, %v600
      %v602 = vrot.slane %v597, %v601
      %604 = vmatprep.subr.mxu0 0.0
      %605 = vmatpush1.msra.mxu0 %v581
      %606 = vmatprep.subr.mxu0 0.0
      %607 = vmatpush1.msra.mxu0 %v582
      %608 = vmatprep.subr.mxu0 0.0
      %609 = vmatpush1.msra.mxu0 %v583
      %610 = vmatprep.subr.mxu0 0.0
      %611 = vmatpush1.msra.mxu0 %v584
      %612 = vmatprep.subr.mxu0 0.0
      %613 = vmatpush1.msra.mxu0 %v585
      %614 = vmatprep.subr.mxu0 0.0
      %615 = vmatpush1.msra.mxu0 %v586
      %616 = vmatprep.subr.mxu0 0.0
      %617 = vmatpush1.msra.mxu0 %v587
      %618 = vmatprep.subr.mxu0 0.0
      %619 = vmatpush1.msra.mxu0 %v588
      %620 = vmatprep.subr.mxu0 0.0
      %621 = vmatpush1.msra.mxu0 %v589
      %622 = vmatprep.subr.mxu0 0.0
      %623 = vmatpush1.msra.mxu0 %v590
      %624 = vmatprep.subr.mxu0 0.0
      %625 = vmatpush1.msra.mxu0 %v591
      %626 = vmatprep.subr.mxu0 0.0
      %627 = vmatpush1.msra.mxu0 %v592
      %628 = vmatprep.subr.mxu0 0.0
      %629 = vmatpush1.msra.mxu0 %v593
      %630 = vmatprep.subr.mxu0 0.0
      %631 = vmatpush1.msra.mxu0 %v594
      %632 = vmatprep.subr.mxu0 0.0
      %633 = vmatpush1.msra.mxu0 %v595
      %634 = vmatprep.subr.mxu0 0.0
      %635 = vmatpush1.msra.mxu0 %v596
      %636 = vmatprep.subr.mxu0 0.0
      %637 = vmatpush1.msra.mxu0 0.0
      %638 = vmatprep.subr.mxu0 0.0
      %639 = vmatpush1.msra.mxu0 0.0
      %640 = vmatprep.subr.mxu0 0.0
      %641 = vmatpush1.msra.mxu0 0.0
      %642 = vmatprep.subr.mxu0 0.0
      %643 = vmatpush1.msra.mxu0 0.0
      %644 = vmatprep.subr.mxu0 0.0
      %645 = vmatpush1.msra.mxu0 0.0
      %646 = vmatprep.subr.mxu0 0.0
      %647 = vmatpush1.msra.mxu0 0.0
      %648 = vmatprep.subr.mxu0 0.0
      %649 = vmatpush1.msra.mxu0 0.0
      %650 = vmatprep.subr.mxu0 0.0
      %651 = vmatpush1.msra.mxu0 0.0
      %652 = vmatprep.subr.mxu0 0.0
      %653 = vmatpush1.msra.mxu0 0.0
      %654 = vmatprep.subr.mxu0 0.0
      %655 = vmatpush1.msra.mxu0 0.0
      %656 = vmatprep.subr.mxu0 0.0
      %657 = vmatpush1.msra.mxu0 0.0
      %658 = vmatprep.subr.mxu0 0.0
      %659 = vmatpush1.msra.mxu0 0.0
      %660 = vmatprep.subr.mxu0 0.0
      %661 = vmatpush1.msra.mxu0 0.0
      %662 = vmatprep.subr.mxu0 0.0
      %663 = vmatpush1.msra.mxu0 0.0
      %664 = vmatprep.subr.mxu0 0.0
      %665 = vmatpush1.msra.mxu0 0.0
      %666 = vmatprep.subr.mxu0 0.0
      %667 = vmatpush1.msra.mxu0 0.0
      %668 = vmatprep.mubr.f32.mxu0 0.0
      %669 = vmatmul.mubr.f32.gmra.mrb[0].mxu0 %v549
      %v670 = vpop.f32.mrb[0].mxu0
      %v671 = vadd.f32 %v602, %v670
      %v672 = vpop.f32.mrb[0].mxu0
      %673 = vmatprep.mubr.f32.mxu0 0.0
      %674 = vmatmul.mubr.f32.gmra.mrb[0].mxu0 %v550
      %v675 = vpop.f32.mrb[0].mxu0
      %v676 = vadd.f32 %v602, %v675
      %v677 = vpop.f32.mrb[0].mxu0
      %678 = vmatprep.mubr.f32.mxu0 0.0
      %679 = vmatmul.mubr.f32.gmra.mrb[0].mxu0 %v551
      %v680 = vpop.f32.mrb[0].mxu0
      %v681 = vadd.f32 %v602, %v680
      %v682 = vpop.f32.mrb[0].mxu0
      %683 = vmatprep.mubr.f32.mxu0 0.0
      %684 = vmatmul.mubr.f32.gmra.mrb[0].mxu0 %v552
      %v685 = vpop.f32.mrb[0].mxu0
      %v686 = vadd.f32 %v602, %v685
      %v687 = vpop.f32.mrb[0].mxu0
      %688 = vmatprep.mubr.f32.mxu0 0.0
      %689 = vmatmul.mubr.f32.gmra.mrb[0].mxu0 %v553
      %v690 = vpop.f32.mrb[0].mxu0
      %v691 = vadd.f32 %v602, %v690
      %v692 = vpop.f32.mrb[0].mxu0
      %693 = vmatprep.mubr.f32.mxu0 0.0
      %694 = vmatmul.mubr.f32.gmra.mrb[0].mxu0 %v554
      %v695 = vpop.f32.mrb[0].mxu0
      %v696 = vadd.f32 %v602, %v695
      %v697 = vpop.f32.mrb[0].mxu0
      %698 = vmatprep.mubr.f32.mxu0 0.0
      %699 = vmatmul.mubr.f32.gmra.mrb[0].mxu0 %v555
      %v700 = vpop.f32.mrb[0].mxu0
      %v701 = vadd.f32 %v602, %v700
      %v702 = vpop.f32.mrb[0].mxu0
      %703 = vmatprep.mubr.f32.mxu0 0.0
      %704 = vmatmul.mubr.f32.gmra.mrb[0].mxu0 %v556
      %v705 = vpop.f32.mrb[0].mxu0
      %v706 = vadd.f32 %v602, %v705
      %v707 = vpop.f32.mrb[0].mxu0
      %708 = vmatprep.mubr.f32.mxu0 0.0
      %709 = vmatmul.mubr.f32.gmra.mrb[0].mxu0 %v557
      %v710 = vpop.f32.mrb[0].mxu0
      %v711 = vadd.f32 %v602, %v710
      %v712 = vpop.f32.mrb[0].mxu0
      %713 = vmatprep.mubr.f32.mxu0 0.0
      %714 = vmatmul.mubr.f32.gmra.mrb[0].mxu0 %v558
      %v715 = vpop.f32.mrb[0].mxu0
      %v716 = vadd.f32 %v602, %v715
      %v717 = vpop.f32.mrb[0].mxu0
      %718 = vmatprep.mubr.f32.mxu0 0.0
      %719 = vmatmul.mubr.f32.gmra.mrb[0].mxu0 %v559
      %v720 = vpop.f32.mrb[0].mxu0
      %v721 = vadd.f32 %v602, %v720
      %v722 = vpop.f32.mrb[0].mxu0
      %723 = vmatprep.mubr.f32.mxu0 0.0
      %724 = vmatmul.mubr.f32.gmra.mrb[0].mxu0 %v560
      %v725 = vpop.f32.mrb[0].mxu0
      %v726 = vadd.f32 %v602, %v725
      %v727 = vpop.f32.mrb[0].mxu0
      %728 = vmatprep.mubr.f32.mxu0 0.0
      %729 = vmatmul.mubr.f32.gmra.mrb[0].mxu0 %v561
      %v730 = vpop.f32.mrb[0].mxu0
      %v731 = vadd.f32 %v602, %v730
      %v732 = vpop.f32.mrb[0].mxu0
      %733 = vmatprep.mubr.f32.mxu0 0.0
      %734 = vmatmul.mubr.f32.gmra.mrb[0].mxu0 %v562
      %v735 = vpop.f32.mrb[0].mxu0
      %v736 = vadd.f32 %v602, %v735
      %v737 = vpop.f32.mrb[0].mxu0
      %738 = vmatprep.mubr.f32.mxu0 0.0
      %739 = vmatmul.mubr.f32.gmra.mrb[0].mxu0 %v563
      %v740 = vpop.f32.mrb[0].mxu0
      %v741 = vadd.f32 %v602, %v740
      %v742 = vpop.f32.mrb[0].mxu0
      %743 = vmatprep.mubr.f32.mxu0 0.0
      %744 = vmatmul.mubr.f32.gmra.mrb[0].mxu0 %v564
      %v745 = vpop.f32.mrb[0].mxu0
      %v746 = vadd.f32 %v602, %v745
      %v747 = vpop.f32.mrb[0].mxu0
      %748 = vmatprep.mubr.f32.mxu0 0.0
      %749 = vmatmul.mubr.f32.gmra.mrb[0].mxu0 %v565
      %v750 = vpop.f32.mrb[0].mxu0
      %v751 = vadd.f32 %v602, %v750
      %v752 = vpop.f32.mrb[0].mxu0
      %753 = vmatprep.mubr.f32.mxu0 0.0
      %754 = vmatmul.mubr.f32.gmra.mrb[0].mxu0 %v566
      %v755 = vpop.f32.mrb[0].mxu0
      %v756 = vadd.f32 %v602, %v755
      %v757 = vpop.f32.mrb[0].mxu0
      %758 = vmatprep.mubr.f32.mxu0 0.0
      %759 = vmatmul.mubr.f32.gmra.mrb[0].mxu0 %v567
      %v760 = vpop.f32.mrb[0].mxu0
      %v761 = vadd.f32 %v602, %v760
      %v762 = vpop.f32.mrb[0].mxu0
      %763 = vmatprep.mubr.f32.mxu0 0.0
      %764 = vmatmul.mubr.f32.gmra.mrb[0].mxu0 %v568
      %v765 = vpop.f32.mrb[0].mxu0
      %v766 = vadd.f32 %v602, %v765
      %v767 = vpop.f32.mrb[0].mxu0
      %768 = vmatprep.mubr.f32.mxu0 0.0
      %769 = vmatmul.mubr.f32.gmra.mrb[0].mxu0 %v569
      %v770 = vpop.f32.mrb[0].mxu0
      %v771 = vadd.f32 %v602, %v770
      %v772 = vpop.f32.mrb[0].mxu0
      %773 = vmatprep.mubr.f32.mxu0 0.0
      %774 = vmatmul.mubr.f32.gmra.mrb[0].mxu0 %v570
      %v775 = vpop.f32.mrb[0].mxu0
      %v776 = vadd.f32 %v602, %v775
      %v777 = vpop.f32.mrb[0].mxu0
      %778 = vmatprep.mubr.f32.mxu0 0.0
      %779 = vmatmul.mubr.f32.gmra.mrb[0].mxu0 %v571
      %v780 = vpop.f32.mrb[0].mxu0
      %v781 = vadd.f32 %v602, %v780
      %v782 = vpop.f32.mrb[0].mxu0
      %783 = vmatprep.mubr.f32.mxu0 0.0
      %784 = vmatmul.mubr.f32.gmra.mrb[0].mxu0 %v572
      %v785 = vpop.f32.mrb[0].mxu0
      %v786 = vadd.f32 %v602, %v785
      %v787 = vpop.f32.mrb[0].mxu0
      %788 = vmatprep.mubr.f32.mxu0 0.0
      %789 = vmatmul.mubr.f32.gmra.mrb[0].mxu0 %v573
      %v790 = vpop.f32.mrb[0].mxu0
      %v791 = vadd.f32 %v602, %v790
      %v792 = vpop.f32.mrb[0].mxu0
      %793 = vmatprep.mubr.f32.mxu0 0.0
      %794 = vmatmul.mubr.f32.gmra.mrb[0].mxu0 %v574
      %v795 = vpop.f32.mrb[0].mxu0
      %v796 = vadd.f32 %v602, %v795
      %v797 = vpop.f32.mrb[0].mxu0
      %798 = vmatprep.mubr.f32.mxu0 0.0
      %799 = vmatmul.mubr.f32.gmra.mrb[0].mxu0 %v575
      %v800 = vpop.f32.mrb[0].mxu0
      %v801 = vadd.f32 %v602, %v800
      %v802 = vpop.f32.mrb[0].mxu0
      %803 = vmatprep.mubr.f32.mxu0 0.0
      %804 = vmatmul.mubr.f32.gmra.mrb[0].mxu0 %v576
      %v805 = vpop.f32.mrb[0].mxu0
      %v806 = vadd.f32 %v602, %v805
      %v807 = vpop.f32.mrb[0].mxu0
      %808 = vmatprep.mubr.f32.mxu0 0.0
      %809 = vmatmul.mubr.f32.gmra.mrb[0].mxu0 %v577
      %v810 = vpop.f32.mrb[0].mxu0
      %v811 = vadd.f32 %v602, %v810
      %v812 = vpop.f32.mrb[0].mxu0
      %813 = vmatprep.mubr.f32.mxu0 0.0
      %814 = vmatmul.mubr.f32.gmra.mrb[0].mxu0 %v578
      %v815 = vpop.f32.mrb[0].mxu0
      %v816 = vadd.f32 %v602, %v815
      %v817 = vpop.f32.mrb[0].mxu0
      %818 = vmatprep.mubr.f32.mxu0 0.0
      %819 = vmatmul.mubr.f32.gmra.mrb[0].mxu0 %v579
      %v820 = vpop.f32.mrb[0].mxu0
      %v821 = vadd.f32 %v602, %v820
      %v822 = vpop.f32.mrb[0].mxu0
      %823 = vmatprep.mubr.f32.mxu0 0.0
      %824 = vmatmul.mubr.f32.gmra.mrb[0].mxu0 %v580
      %v825 = vpop.f32.mrb[0].mxu0
      %v826 = vadd.f32 %v602, %v825
      %v827 = vpop.f32.mrb[0].mxu0
      %828 = vdwg.mxu0
      %829 = vst [vmem:[%s261] sm:$0xff] %v671
      %830 = vst [vmem:[%s261 + $0x8] sm:$0xff] %v676
      %831 = vst [vmem:[%s261 + $0x10] sm:$0xff] %v681
      %832 = vst [vmem:[%s261 + $0x18] sm:$0xff] %v686
      %833 = vst [vmem:[%s261 + $0x20] sm:$0xff] %v691
      %834 = vst [vmem:[%s261 + $0x28] sm:$0xff] %v696
      %835 = vst [vmem:[%s261 + $0x30] sm:$0xff] %v701
      %836 = vst [vmem:[%s261 + $0x38] sm:$0xff] %v706
      %837 = vst [vmem:[%s261 + $0x40] sm:$0xff] %v711
      %838 = vst [vmem:[%s261 + $0x48] sm:$0xff] %v716
      %839 = vst [vmem:[%s261 + $0x50] sm:$0xff] %v721
      %840 = vst [vmem:[%s261 + $0x58] sm:$0xff] %v726
      %841 = vst [vmem:[%s261 + $0x60] sm:$0xff] %v731
      %842 = vst [vmem:[%s261 + $0x68] sm:$0xff] %v736
      %843 = vst [vmem:[%s261 + $0x70] sm:$0xff] %v741
      %844 = vst [vmem:[%s261 + $0x78] sm:$0xff] %v746
      %845 = vst [vmem:[%s261 + $0x80] sm:$0xff] %v751
      %846 = vst [vmem:[%s261 + $0x88] sm:$0xff] %v756
      %847 = vst [vmem:[%s261 + $0x90] sm:$0xff] %v761
      %848 = vst [vmem:[%s261 + $0x98] sm:$0xff] %v766
      %849 = vst [vmem:[%s261 + $0xa0] sm:$0xff] %v771
      %850 = vst [vmem:[%s261 + $0xa8] sm:$0xff] %v776
      %851 = vst [vmem:[%s261 + $0xb0] sm:$0xff] %v781
      %852 = vst [vmem:[%s261 + $0xb8] sm:$0xff] %v786
      %853 = vst [vmem:[%s261 + $0xc0] sm:$0xff] %v791
      %854 = vst [vmem:[%s261 + $0xc8] sm:$0xff] %v796
      %855 = vst [vmem:[%s261 + $0xd0] sm:$0xff] %v801
      %856 = vst [vmem:[%s261 + $0xd8] sm:$0xff] %v806
      %857 = vst [vmem:[%s261 + $0xe0] sm:$0xff] %v811
      %858 = vst [vmem:[%s261 + $0xe8] sm:$0xff] %v816
      %859 = vst [vmem:[%s261 + $0xf0] sm:$0xff] %v821
      %860 = vst [vmem:[%s261 + $0xf8] sm:$0xff] %v826
      %v861 = vpack.c.bf16 %v676, %v671
      %v862 = vpack.c.bf16 %v686, %v681
      %v863 = vpack.c.bf16 %v696, %v691
      %v864 = vpack.c.bf16 %v706, %v701
      %v865 = vpack.c.bf16 %v716, %v711
      %v866 = vpack.c.bf16 %v726, %v721
      %v867 = vpack.c.bf16 %v736, %v731
      %v868 = vpack.c.bf16 %v746, %v741
      %v869 = vpack.c.bf16 %v756, %v751
      %v870 = vpack.c.bf16 %v766, %v761
      %v871 = vpack.c.bf16 %v776, %v771
      %v872 = vpack.c.bf16 %v786, %v781
      %v873 = vpack.c.bf16 %v796, %v791
      %v874 = vpack.c.bf16 %v806, %v801
      %v875 = vpack.c.bf16 %v816, %v811
      %v876 = vpack.c.bf16 %v826, %v821
      %v893 = vunpack.c.l.b16 %v861
      %v894 = vunpack.c.h.b16 %v861
      %v895 = vunpack.c.l.b16 %v862
      %v896 = vunpack.c.h.b16 %v862
      %v897 = vunpack.c.l.b16 %v863
      %v898 = vunpack.c.h.b16 %v863
      %v899 = vunpack.c.l.b16 %v864
      %v900 = vunpack.c.h.b16 %v864
      %v901 = vunpack.c.l.b16 %v865
      %v902 = vunpack.c.h.b16 %v865
      %v903 = vunpack.c.l.b16 %v866
      %v904 = vunpack.c.h.b16 %v866
      %v905 = vunpack.c.l.b16 %v867
      %v906 = vunpack.c.h.b16 %v867
      %v907 = vunpack.c.l.b16 %v868
      %v908 = vunpack.c.h.b16 %v868
      %v909 = vunpack.c.l.b16 %v869
      %v910 = vunpack.c.h.b16 %v869
      %v911 = vunpack.c.l.b16 %v870
      %v912 = vunpack.c.h.b16 %v870
      %v913 = vunpack.c.l.b16 %v871
      %v914 = vunpack.c.h.b16 %v871
      %v915 = vunpack.c.l.b16 %v872
      %v916 = vunpack.c.h.b16 %v872
      %v917 = vunpack.c.l.b16 %v873
      %v918 = vunpack.c.h.b16 %v873
      %v919 = vunpack.c.l.b16 %v874
      %v920 = vunpack.c.h.b16 %v874
      %v921 = vunpack.c.l.b16 %v875
      %v922 = vunpack.c.h.b16 %v875
      %v923 = vunpack.c.l.b16 %v876
      %v924 = vunpack.c.h.b16 %v876
      %v925 = vpack.c.b16 %v893, %v893
      %v926 = vpack.c.b16 %v894, %v894
      %v927 = vpack.c.b16 %v895, %v895
      %v928 = vpack.c.b16 %v896, %v896
      %v929 = vpack.c.b16 %v897, %v897
      %v930 = vpack.c.b16 %v898, %v898
      %v931 = vpack.c.b16 %v899, %v899
      %v932 = vpack.c.b16 %v900, %v900
      %v933 = vpack.c.b16 %v901, %v901
      %v934 = vpack.c.b16 %v902, %v902
      %v935 = vpack.c.b16 %v903, %v903
      %v936 = vpack.c.b16 %v904, %v904
      %v937 = vpack.c.b16 %v905, %v905
      %v938 = vpack.c.b16 %v906, %v906
      %v939 = vpack.c.b16 %v907, %v907
      %v940 = vpack.c.b16 %v908, %v908
      %v941 = vpack.c.b16 %v909, %v909
      %v942 = vpack.c.b16 %v910, %v910
      %v943 = vpack.c.b16 %v911, %v911
      %v944 = vpack.c.b16 %v912, %v912
      %v945 = vpack.c.b16 %v913, %v913
      %v946 = vpack.c.b16 %v914, %v914
      %v947 = vpack.c.b16 %v915, %v915
      %v948 = vpack.c.b16 %v916, %v916
      %v949 = vpack.c.b16 %v917, %v917
      %v950 = vpack.c.b16 %v918, %v918
      %v951 = vpack.c.b16 %v919, %v919
      %v952 = vpack.c.b16 %v920, %v920
      %v953 = vpack.c.b16 %v921, %v921
      %v954 = vpack.c.b16 %v922, %v922
      %v955 = vpack.c.b16 %v923, %v923
      %v956 = vpack.c.b16 %v924, %v924
      %989 = vst [vmem:[%s267] sm:$0xf] %v925
      %990 = vst [vmem:[%s267 + $0x4] sm:$0xf] %v926
      %991 = vst [vmem:[%s267 + $0x8] sm:$0xf] %v927
      %992 = vst [vmem:[%s267 + $0xc] sm:$0xf] %v928
      %993 = vst [vmem:[%s267 + $0x10] sm:$0xf] %v929
      %994 = vst [vmem:[%s267 + $0x14] sm:$0xf] %v930
      %995 = vst [vmem:[%s267 + $0x18] sm:$0xf] %v931
      %996 = vst [vmem:[%s267 + $0x1c] sm:$0xf] %v932
      %997 = vst [vmem:[%s267 + $0x20] sm:$0xf] %v933
      %998 = vst [vmem:[%s267 + $0x24] sm:$0xf] %v934
      %999 = vst [vmem:[%s267 + $0x28] sm:$0xf] %v935
      %1000 = vst [vmem:[%s267 + $0x2c] sm:$0xf] %v936
      %1001 = vst [vmem:[%s267 + $0x30] sm:$0xf] %v937
      %1002 = vst [vmem:[%s267 + $0x34] sm:$0xf] %v938
      %1003 = vst [vmem:[%s267 + $0x38] sm:$0xf] %v939
      %1004 = vst [vmem:[%s267 + $0x3c] sm:$0xf] %v940
      %1005 = vst [vmem:[%s267 + $0x40] sm:$0xf] %v941
      %1006 = vst [vmem:[%s267 + $0x44] sm:$0xf] %v942
      %1007 = vst [vmem:[%s267 + $0x48] sm:$0xf] %v943
      %1008 = vst [vmem:[%s267 + $0x4c] sm:$0xf] %v944
      %1009 = vst [vmem:[%s267 + $0x50] sm:$0xf] %v945
      %1010 = vst [vmem:[%s267 + $0x54] sm:$0xf] %v946
      %1011 = vst [vmem:[%s267 + $0x58] sm:$0xf] %v947
      %1012 = vst [vmem:[%s267 + $0x5c] sm:$0xf] %v948
      %1013 = vst [vmem:[%s267 + $0x60] sm:$0xf] %v949
      %1014 = vst [vmem:[%s267 + $0x64] sm:$0xf] %v950
      %1015 = vst [vmem:[%s267 + $0x68] sm:$0xf] %v951
      %1016 = vst [vmem:[%s267 + $0x6c] sm:$0xf] %v952
      %1017 = vst [vmem:[%s267 + $0x70] sm:$0xf] %v953
      %1018 = vst [vmem:[%s267 + $0x74] sm:$0xf] %v954
      %1019 = vst [vmem:[%s267 + $0x78] sm:$0xf] %v955
      %1020 = vst [vmem:[%s267 + $0x7c] sm:$0xf] %v956
      %s1021 = smul.u32 32, %s18
      %p1022 = scmp.lt.s32.totalorder %s1021, 63
      %s1023 = scalar_select %p1022, %s1021, 63
      %s1024 = smul.addr %s1023, 8
      %s1025 = scalar_lea.vmem %s5, %s1024
      %s1026 = smul.u32 32, %s18
      %p1027 = scmp.lt.s32.totalorder %s1026, 63
      %s1028 = scalar_select %p1027, %s1026, 63
      %s1029 = smul.addr %s1028, 4
      %s1030 = scalar_lea.vmem %s6, %s1029
      // Predicated region
      $region41: #{appnp_forward.4} parent=39 // pred_check
        %p1031 = pneg %p146
      $region42: #{appnp_forward.4} parent=39 // pred_check_branch
        %1033 = sbr.rel (%p1031) target = $region44
      $region43: #{appnp_forward.4} parent=39 // pred_region
        %s1034 = smul.u32 32, %s18
      $region44: #{appnp_forward.4} parent=39 // pred_fallthru
        _
      // Predicated region
      $region45: #{appnp_forward.4} parent=39 // pred_check
        %p1035 = pneg %p172
      $region46: #{appnp_forward.4} parent=39 // pred_check_branch
        %1037 = sbr.rel (%p1035) target = $region48
      $region47: #{appnp_forward.4} parent=39 // pred_region
        %s1038 = smul.u32 32, %s18
      $region48: #{appnp_forward.4} parent=39 // pred_fallthru
        _
    $region40: #{appnp_forward.4} parent=5 // pred_fallthru
      _
    %p1039 = scmp.le.s32.totalorder 2, %s13
    // Predicated region
    $region49: #{appnp_forward.4} parent=5 // pred_check
      %p1040 = pneg %p1039
    $region50: #{appnp_forward.4} parent=5 // pred_check_branch
      %1042 = sbr.rel (%p1040) target = $region52
    $region51: #{appnp_forward.4} parent=5 // pred_region
      %s1043 = ssub.s32 %s13, 2
      // Predicated region
      $region53: #{appnp_forward.4} parent=51 // pred_check
        %p1044 = pneg %p152
      $region54: #{appnp_forward.4} parent=51 // pred_check_branch
        %1046 = sbr.rel (%p1044) target = $region56
      $region55: #{appnp_forward.4} parent=51 // pred_region
        %s1047 = smul.u32 32, %s19
        %p1048 = scmp.lt.s32.totalorder %s1047, 63
        %s1049 = scalar_select %p1048, %s1047, 63
        %s1050 = smul.addr %s1049, 8
        %s1051 = scalar_lea.vmem %s5, %s1050
      $region56: #{appnp_forward.4} parent=51 // pred_fallthru
        _
      // Predicated region
      $region57: #{appnp_forward.4} parent=51 // pred_check
        %p1052 = pneg %p178
      $region58: #{appnp_forward.4} parent=51 // pred_check_branch
        %1054 = sbr.rel (%p1052) target = $region60
      $region59: #{appnp_forward.4} parent=51 // pred_region
        %s1055 = smul.u32 32, %s19
        %p1056 = scmp.lt.s32.totalorder %s1055, 63
        %s1057 = scalar_select %p1056, %s1055, 63
        %s1058 = smul.addr %s1057, 4
        %s1059 = scalar_lea.vmem %s6, %s1058
      $region60: #{appnp_forward.4} parent=51 // pred_fallthru
        _
    $region52: #{appnp_forward.4} parent=5 // pred_fallthru
      _
  $region6: #{appnp_forward.4} parent=0 // loop_footer
    %s17 = sadd.s32 1, %s13
  $region7: #{appnp_forward.4} parent=0 // loop_footer_branch
    %12 = sbr.rel target = $region3
  $region8: #{appnp_forward.4} parent=0 // loop_exit
    _

</llo_original>
